<compile_context>
chip_gen: v6e
topology: v6e:2x2x1
jax: 0.10.0
libtpu: 0.0.40
codegen_flags: <defaults>
</compile_context>

<pallas_src>
import math
import numpy as np
import jax
import jax.numpy as jnp
from jax.experimental import pallas as pl
from jax.experimental.pallas import tpu as pltpu


# ---------------------------------------------------------------------------
# Sinusoidal position embedding (matches nlhappy SinusoidalPositionEmbedding,
# merge_mode='zero'): pos[m, 2i] = sin(m * 10000^(-2i/H)),
#                     pos[m, 2i+1] = cos(m * 10000^(-2i/H))
# ---------------------------------------------------------------------------
def sinusoidal_pos(seq_len: int, hidden: int) -> jnp.ndarray:
    positions = jnp.arange(seq_len, dtype=jnp.float32)            # (S,)
    indices = jnp.arange(hidden // 2, dtype=jnp.float32)          # (H/2,)
    theta = jnp.power(10000.0, -2.0 * indices / hidden)           # (H/2,)
    emb = positions[:, None] * theta[None, :]                     # (S, H/2)
    pos = jnp.stack([jnp.sin(emb), jnp.cos(emb)], axis=-1)        # (S, H/2, 2)
    return pos.reshape(seq_len, hidden)                           # (S, H)


# ---------------------------------------------------------------------------
# Pallas kernel: grid = (batch, class-block, query-tile).
# ---------------------------------------------------------------------------
def make_global_pointer_kernel(S, H, tO, tS):
    def kernel(x_ref, w_ref, b_ref, cs_ref, o_ref, s_cache, e_cache):
        ts = pl.program_id(2)

        # Compute + cache the roped start/end projections for the FULL sequence
        # once per (batch, class-block); the ts axis only re-tiles query rows.
        @pl.when(ts == 0)
        def _():
            x = x_ref[0]                                           # (S, In)
            # Fused start|end projection for all tO classes in one MXU call.
            proj = jnp.dot(x, w_ref[0],
                           preferred_element_type=jnp.float32) + b_ref[0]  # (S, tO*2H)
            cs = cs_ref[...]                                       # (S, 2H) f32
            cos = cs[:, :H]
            sin = cs[:, H:]                                        # parity signs folded in
            for c in range(tO):
                st = proj[:, (2 * c) * H:(2 * c + 1) * H]          # (S, H)
                en = proj[:, (2 * c + 1) * H:(2 * c + 2) * H]      # (S, H)
                # RoPE in half-split layout: out = t*cos + roll(t, H/2)*signed_sin
                st = st * cos + pltpu.roll(st, shift=H // 2, axis=1) * sin
                en = en * cos + pltpu.roll(en, shift=H // 2, axis=1) * sin
                s_cache[c] = st.astype(s_cache.dtype)
                e_cache[c] = en.astype(e_cache.dtype)

        # Additive tril-mask bias for this query tile, generated in-kernel
        # (no precomputed (S,S) HBM stream); VPU work hidden under the MXU.
        q0 = pl.multiple_of(ts * tS, tS)
        row = jax.lax.broadcasted_iota(jnp.int32, (tS, S), 0) + q0
        col = jax.lax.broadcasted_iota(jnp.int32, (tS, S), 1)
        mask = jnp.where(row > col, jnp.float32(-1e12), jnp.float32(0.0))

        for c in range(tO):
            st_q = s_cache[c, pl.ds(q0, tS), :]                    # (tS, H)
            en = e_cache[c]                                        # (S, H)
            # NT contraction: MXU consumes the RHS transposed natively.
            logits = jax.lax.dot_general(
                st_q, en, dimension_numbers=(((1,), (1,)), ((), ())),
                preferred_element_type=jnp.float32)                # (tS, S)
            o_ref[0, c] = (logits + mask).astype(o_ref.dtype)

    return kernel


def _largest_divisor(n, ok):
    for d in range(n, 0, -1):
        if n % d == 0 and ok(d):
            return d
    return 1


def global_pointer_pallas(x, Ws, bs, We, be, O, H, *,
                          compute_dtype=jnp.bfloat16,
                          out_dtype=jnp.bfloat16,
                          block_o=None, block_s=None):
    B, S, In = x.shape
    assert H % 2 == 0
    scale = 1.0 / math.sqrt(H)
    cbytes = jnp.dtype(compute_dtype).itemsize
    obytes = jnp.dtype(out_dtype).itemsize

    # Tile choosers: largest divisors keeping blocks (incl. double-buffered
    # output) comfortably inside v7x's 64 MiB VMEM.
    tO = block_o or _largest_divisor(
        O, lambda t: t * In * 2 * H * cbytes <= (4 << 20)
        and 2 * t * S * H * cbytes <= (8 << 20))
    tS = block_s or _largest_divisor(
        S, lambda t: (t == S or t % 8 == 0)
        and 2 * tO * t * S * obytes <= (12 << 20))
    assert O % tO == 0 and S % tS == 0 and (tS == S or tS % 8 == 0)
    nO, nS = O // tO, S // tS

    # Per-head column permutation: even channels first, odd channels second.
    perm = np.concatenate([np.arange(0, H, 2), np.arange(1, H, 2)])

    # Sinusoidal tables matching the torch module's `.repeat` (= tile) pairing,
    # permuted to the half-split layout; parity sign folded into sin; cos|sin
    # packed into a single (S, 2H) table (one DMA stream).
    pos = sinusoidal_pos(S, H)                                     # (S, H)
    cos_h = jnp.tile(pos[:, 1::2], (1, 2))[:, perm]                # (S, H)
    sin_h = jnp.tile(pos[:, 0::2], (1, 2))[:, perm]                # (S, H)
    sign = jnp.concatenate([-jnp.ones((H // 2,), jnp.float32),
                            jnp.ones((H // 2,), jnp.float32)])
    cs = jnp.concatenate([cos_h, sin_h * sign[None, :]],
                         axis=1).astype(jnp.float32)               # (S, 2H)

    # Weights: permute per-head columns, fold 1/sqrt(H) into the start side,
    # pack [start | end] per class, and block tO classes along the lane dim:
    #   W_blk[g, :, c*2H:(c+1)*2H] = [start(H) | end(H)] of class g*tO + c.
    Ws_p = Ws.reshape(In, O, H)[:, :, perm] * scale                # (In, O, H)
    We_p = We.reshape(In, O, H)[:, :, perm]                        # (In, O, H)
    W_cat = jnp.stack([Ws_p, We_p], axis=2).reshape(In, O, 2 * H)  # (In, O, 2H)
    W_blk = W_cat.reshape(In, nO, tO * 2 * H).transpose(1, 0, 2).astype(compute_dtype)

    bs_p = bs.reshape(O, H)[:, perm] * scale
    be_p = be.reshape(O, H)[:, perm]
    b_cat = jnp.stack([bs_p, be_p], axis=1).reshape(O, 2 * H)      # (O, 2H)
    b_blk = b_cat.reshape(nO, 1, tO * 2 * H).astype(jnp.float32)

    x_c = x.astype(compute_dtype)

    # VMEM budget: double-buffered input/output blocks + single-buffered caches,
    # with headroom for in-kernel temporaries.
    vmem = (2 * S * In * cbytes                 # x
            + 2 * In * tO * 2 * H * cbytes      # fused weights
            + 2 * tO * 2 * H * 4                # fused bias
            + 2 * S * 2 * H * 4                 # cos|sin table
            + 2 * tO * tS * S * obytes          # output block
            + 2 * tO * S * H * cbytes)          # start/end caches (scratch)
    vmem_limit = int(min(64 << 20, max(32 << 20, 2 * vmem)))

    kernel = make_global_pointer_kernel(S, H, tO, tS)

    # TODO(synk): grid-invariant inputs (cs table; x/W along inner grid axes) could
    # be single-buffered via pipeline_mode=pl.Buffered(1) to shave more VMEM.
    return pl.pallas_call(
        kernel,
        out_shape=jax.ShapeDtypeStruct((B, O, S, S), out_dtype),
        grid=(B, nO, nS),
        in_specs=[
            pl.BlockSpec((1, S, In), lambda b, o, s: (b, 0, 0)),            # x (full seq)
            pl.BlockSpec((1, In, tO * 2 * H), lambda b, o, s: (o, 0, 0)),   # fused W block
            pl.BlockSpec((1, 1, tO * 2 * H), lambda b, o, s: (o, 0, 0)),    # fused bias
            pl.BlockSpec((S, 2 * H), lambda b, o, s: (0, 0)),               # cos | signed sin
        ],
        out_specs=pl.BlockSpec((1, tO, tS, S), lambda b, o, s: (b, o, s, 0)),
        scratch_shapes=[pltpu.VMEM((tO, S, H), compute_dtype),              # roped start cache
                        pltpu.VMEM((tO, S, H), compute_dtype)],             # roped end cache
        compiler_params=pltpu.CompilerParams(
            dimension_semantics=("parallel", "parallel", "arbitrary"),
            vmem_limit_bytes=vmem_limit),
    )(x_c, W_blk, b_blk, cs)


# ---------------------------------------------------------------------------
# Pure-JAX reference mirroring the PyTorch forward (dot / rope / tril, mask=None).
# TODO(synk): optional pad-mask branch of forward() is not wired up (mask=None only).
# ---------------------------------------------------------------------------
def global_pointer_reference(x, Ws, bs, We, be, O, H):
    B, S, In = x.shape
    start = (x @ Ws + bs).reshape(B, S, O, H)
    end = (x @ We + be).reshape(B, S, O, H)

    pos = sinusoidal_pos(S, H)[None]                               # (1, S, H)
    cos_pos = jnp.tile(pos[:, :, None, 1::2], (1, 1, 1, 2))        # (1, S, 1, H)
    sin_pos = jnp.tile(pos[:, :, None, 0::2], (1, 1, 1, 2))        # (1, S, 1, H)

    def rot(t):
        t2 = jnp.stack([-t[..., 1::2], t[..., 0::2]], axis=4).reshape(t.shape)
        return t * cos_pos + t2 * sin_pos

    start = rot(start)
    end = rot(end)

    logits = jnp.einsum('bmhd,bnhd->bhmn', start, end) / math.sqrt(H)
    tril = jnp.tril(jnp.ones((S, S), jnp.float32), -1)
    return logits - tril * 1e12


if __name__ == "__main__":
    # S and H chosen as 128 so output stores, RoPE lane-rolls and per-class
    # column slices are native lane-dense (128-wide) tiles.
    B, S, In, H, O = 2, 128, 128, 128, 4

    key = jax.random.PRNGKey(0)
    kx, kws, kbs, kwe, kbe = jax.random.split(key, 5)

    x = jax.random.normal(kx, (B, S, In), dtype=jnp.float32)
    bound = 1.0 / math.sqrt(In)  # nn.Linear-style uniform init, deterministic
    Ws = jax.random.uniform(kws, (In, O * H), jnp.float32, -bound, bound)
    bs = jax.random.uniform(kbs, (O * H,), jnp.float32, -bound, bound)
    We = jax.random.uniform(kwe, (In, O * H), jnp.float32, -bound, bound)
    be = jax.random.uniform(kbe, (O * H,), jnp.float32, -bound, bound)

    ref = global_pointer_reference(x, Ws, bs, We, be, O, H)

    # f32 path, default tiling (tO=O, tS=S; grid=(2,1,1)): validates the
    # permuted-RoPE / scale-folding / in-kernel tril-mask semantics.
    out_f32 = global_pointer_pallas(x, Ws, bs, We, be, O, H,
                                    compute_dtype=jnp.float32,
                                    out_dtype=jnp.float32)
    out_f32 = jax.block_until_ready(out_f32)
    np.testing.assert_allclose(np.asarray(out_f32), np.asarray(ref),
                               rtol=1e-2, atol=2e-2)

    # Production defaults (bf16 MXU operands + bf16 logits), with explicit
    # class-block / query-tile sizes to exercise the grid=(B, O/tO, S/tS) path.
    out_bf16 = global_pointer_pallas(x, Ws, bs, We, be, O, H,
                                     block_o=2, block_s=64)
    out_bf16 = jax.block_until_ready(out_bf16)
    np.testing.assert_allclose(np.asarray(out_bf16.astype(jnp.float32)),
                               np.asarray(ref), rtol=5e-2, atol=1.5e-1)

    print("KERNEL_OK")
</pallas_src>

<mosaic_0001>
module attributes {stable_mosaic.version = 11 : i64} {
  func.func @kernel(%arg0: i32, %arg1: i32, %arg2: i32, %arg3: memref<1x128x128xf32, #tpu.memory_space<vmem>>, %arg4: memref<1x128x1024xf32, #tpu.memory_space<vmem>>, %arg5: memref<1x1x1024xf32, #tpu.memory_space<vmem>>, %arg6: memref<128x256xf32, #tpu.memory_space<vmem>>, %arg7: memref<1x4x128x128xf32, #tpu.memory_space<vmem>>, %arg8: memref<4x128x128xf32, #tpu.memory_space<vmem>>, %arg9: memref<4x128x128xf32, #tpu.memory_space<vmem>>) attributes {dimension_semantics = [#tpu.dimension_semantics<parallel>, #tpu.dimension_semantics<parallel>, #tpu.dimension_semantics<arbitrary>], iteration_bounds = array<i64: 2, 1, 1>, scalar_prefetch = 0 : i64, scratch_operands = 2 : i64, tpu.core_type = #tpu.core_type<tc>, window_params = [{transform_indices = @transform_0, window_bounds = array<i64: 1, 128, 128>}, {transform_indices = @transform_1, window_bounds = array<i64: 1, 128, 1024>}, {transform_indices = @transform_2, window_bounds = array<i64: 1, 1, 1024>}, {pipeline_mode = #tpu.pipeline_mode<synchronous>, transform_indices = @transform_3, window_bounds = array<i64: 128, 256>}, {transform_indices = @transform_4, window_bounds = array<i64: 1, 4, 128, 128>}]} {
    %c0_i32 = arith.constant 0 : i32
    %0 = arith.cmpi eq, %arg2, %c0_i32 : i32
    %1 = arith.extui %0 : i1 to i32
    %c0_i32_0 = arith.constant 0 : i32
    %2 = arith.cmpi ne, %1, %c0_i32_0 : i32
    scf.if %2 {
      %c0_38 = arith.constant 0 : index
      %c0_39 = arith.constant 0 : index
      %c0_40 = arith.constant 0 : index
      %53 = vector.load %arg3[%c0_38, %c0_39, %c0_40] : memref<1x128x128xf32, #tpu.memory_space<vmem>>, vector<1x128x128xf32>
      %54 = vector.shape_cast %53 : vector<1x128x128xf32> to vector<128x128xf32>
      %c0_41 = arith.constant 0 : index
      %c0_42 = arith.constant 0 : index
      %c0_43 = arith.constant 0 : index
      %55 = vector.load %arg4[%c0_41, %c0_42, %c0_43] : memref<1x128x1024xf32, #tpu.memory_space<vmem>>, vector<1x128x1024xf32>
      %56 = vector.shape_cast %55 : vector<1x128x1024xf32> to vector<128x1024xf32>
      %cst_44 = arith.constant dense<0.000000e+00> : vector<128x1024xf32>
      %57 = tpu.matmul %54, %56, %cst_44 {dimension_numbers = #tpu.dot_dimension_numbers<[1], [0], [0], [1], [0, 0, 1, 1], [], []>} : vector<128x128xf32>, vector<128x1024xf32>, vector<128x1024xf32> -> vector<128x1024xf32>
      %c0_45 = arith.constant 0 : index
      %c0_46 = arith.constant 0 : index
      %c0_47 = arith.constant 0 : index
      %58 = vector.load %arg5[%c0_45, %c0_46, %c0_47] : memref<1x1x1024xf32, #tpu.memory_space<vmem>>, vector<1x1x1024xf32>
      %59 = vector.shape_cast %58 : vector<1x1x1024xf32> to vector<1x1024xf32>
      %60 = vector.broadcast %59 : vector<1x1024xf32> to vector<128x1024xf32>
      %61 = arith.addf %57, %60 : vector<128x1024xf32>
      %c0_48 = arith.constant 0 : index
      %c0_49 = arith.constant 0 : index
      %62 = vector.load %arg6[%c0_48, %c0_49] : memref<128x256xf32, #tpu.memory_space<vmem>>, vector<128x256xf32>
      %63 = vector.extract_strided_slice %62 {offsets = [0, 0], sizes = [128, 128], strides = [1, 1]} : vector<128x256xf32> to vector<128x128xf32>
      %64 = vector.extract_strided_slice %62 {offsets = [0, 128], sizes = [128, 128], strides = [1, 1]} : vector<128x256xf32> to vector<128x128xf32>
      %65 = vector.extract_strided_slice %61 {offsets = [0, 0], sizes = [128, 128], strides = [1, 1]} : vector<128x1024xf32> to vector<128x128xf32>
      %66 = vector.extract_strided_slice %61 {offsets = [0, 128], sizes = [128, 128], strides = [1, 1]} : vector<128x1024xf32> to vector<128x128xf32>
      %67 = arith.mulf %65, %63 : vector<128x128xf32>
      %c64_i32 = arith.constant 64 : i32
      %68 = tpu.dynamic_rotate %65 by %c64_i32 dim 1 : vector<128x128xf32>, i32 -> vector<128x128xf32>
      %69 = arith.mulf %68, %64 : vector<128x128xf32>
      %70 = arith.addf %67, %69 : vector<128x128xf32>
      %71 = arith.mulf %66, %63 : vector<128x128xf32>
      %c64_i32_50 = arith.constant 64 : i32
      %72 = tpu.dynamic_rotate %66 by %c64_i32_50 dim 1 : vector<128x128xf32>, i32 -> vector<128x128xf32>
      %73 = arith.mulf %72, %64 : vector<128x128xf32>
      %74 = arith.addf %71, %73 : vector<128x128xf32>
      %c0_51 = arith.constant 0 : index
      %c0_52 = arith.constant 0 : index
      %c0_53 = arith.constant 0 : index
      %75 = vector.load %arg8[%c0_51, %c0_52, %c0_53] : memref<4x128x128xf32, #tpu.memory_space<vmem>>, vector<1x128x128xf32>
      %76 = vector.shape_cast %75 : vector<1x128x128xf32> to vector<128x128xf32>
      %77 = vector.shape_cast %70 : vector<128x128xf32> to vector<1x128x128xf32>
      tpu.vector_store %arg8[%c0_51, %c0_52, %c0_53], %77 {strides = array<i32>} : memref<4x128x128xf32, #tpu.memory_space<vmem>>, vector<1x128x128xf32>,
      %c0_54 = arith.constant 0 : index
      %c0_55 = arith.constant 0 : index
      %c0_56 = arith.constant 0 : index
      %78 = vector.load %arg9[%c0_54, %c0_55, %c0_56] : memref<4x128x128xf32, #tpu.memory_space<vmem>>, vector<1x128x128xf32>
      %79 = vector.shape_cast %78 : vector<1x128x128xf32> to vector<128x128xf32>
      %80 = vector.shape_cast %74 : vector<128x128xf32> to vector<1x128x128xf32>
      tpu.vector_store %arg9[%c0_54, %c0_55, %c0_56], %80 {strides = array<i32>} : memref<4x128x128xf32, #tpu.memory_space<vmem>>, vector<1x128x128xf32>,
      %81 = vector.extract_strided_slice %61 {offsets = [0, 256], sizes = [128, 128], strides = [1, 1]} : vector<128x1024xf32> to vector<128x128xf32>
      %82 = vector.extract_strided_slice %61 {offsets = [0, 384], sizes = [128, 128], strides = [1, 1]} : vector<128x1024xf32> to vector<128x128xf32>
      %83 = arith.mulf %81, %63 : vector<128x128xf32>
      %c64_i32_57 = arith.constant 64 : i32
      %84 = tpu.dynamic_rotate %81 by %c64_i32_57 dim 1 : vector<128x128xf32>, i32 -> vector<128x128xf32>
      %85 = arith.mulf %84, %64 : vector<128x128xf32>
      %86 = arith.addf %83, %85 : vector<128x128xf32>
      %87 = arith.mulf %82, %63 : vector<128x128xf32>
      %c64_i32_58 = arith.constant 64 : i32
      %88 = tpu.dynamic_rotate %82 by %c64_i32_58 dim 1 : vector<128x128xf32>, i32 -> vector<128x128xf32>
      %89 = arith.mulf %88, %64 : vector<128x128xf32>
      %90 = arith.addf %87, %89 : vector<128x128xf32>
      %c1_59 = arith.constant 1 : index
      %c0_60 = arith.constant 0 : index
      %c0_61 = arith.constant 0 : index
      %91 = vector.load %arg8[%c1_59, %c0_60, %c0_61] : memref<4x128x128xf32, #tpu.memory_space<vmem>>, vector<1x128x128xf32>
      %92 = vector.shape_cast %91 : vector<1x128x128xf32> to vector<128x128xf32>
      %93 = vector.shape_cast %86 : vector<128x128xf32> to vector<1x128x128xf32>
      tpu.vector_store %arg8[%c1_59, %c0_60, %c0_61], %93 {strides = array<i32>} : memref<4x128x128xf32, #tpu.memory_space<vmem>>, vector<1x128x128xf32>,
      %c1_62 = arith.constant 1 : index
      %c0_63 = arith.constant 0 : index
      %c0_64 = arith.constant 0 : index
      %94 = vector.load %arg9[%c1_62, %c0_63, %c0_64] : memref<4x128x128xf32, #tpu.memory_space<vmem>>, vector<1x128x128xf32>
      %95 = vector.shape_cast %94 : vector<1x128x128xf32> to vector<128x128xf32>
      %96 = vector.shape_cast %90 : vector<128x128xf32> to vector<1x128x128xf32>
      tpu.vector_store %arg9[%c1_62, %c0_63, %c0_64], %96 {strides = array<i32>} : memref<4x128x128xf32, #tpu.memory_space<vmem>>, vector<1x128x128xf32>,
      %97 = vector.extract_strided_slice %61 {offsets = [0, 512], sizes = [128, 128], strides = [1, 1]} : vector<128x1024xf32> to vector<128x128xf32>
      %98 = vector.extract_strided_slice %61 {offsets = [0, 640], sizes = [128, 128], strides = [1, 1]} : vector<128x1024xf32> to vector<128x128xf32>
      %99 = arith.mulf %97, %63 : vector<128x128xf32>
      %c64_i32_65 = arith.constant 64 : i32
      %100 = tpu.dynamic_rotate %97 by %c64_i32_65 dim 1 : vector<128x128xf32>, i32 -> vector<128x128xf32>
      %101 = arith.mulf %100, %64 : vector<128x128xf32>
      %102 = arith.addf %99, %101 : vector<128x128xf32>
      %103 = arith.mulf %98, %63 : vector<128x128xf32>
      %c64_i32_66 = arith.constant 64 : i32
      %104 = tpu.dynamic_rotate %98 by %c64_i32_66 dim 1 : vector<128x128xf32>, i32 -> vector<128x128xf32>
      %105 = arith.mulf %104, %64 : vector<128x128xf32>
      %106 = arith.addf %103, %105 : vector<128x128xf32>
      %c2_67 = arith.constant 2 : index
      %c0_68 = arith.constant 0 : index
      %c0_69 = arith.constant 0 : index
      %107 = vector.load %arg8[%c2_67, %c0_68, %c0_69] : memref<4x128x128xf32, #tpu.memory_space<vmem>>, vector<1x128x128xf32>
      %108 = vector.shape_cast %107 : vector<1x128x128xf32> to vector<128x128xf32>
      %109 = vector.shape_cast %102 : vector<128x128xf32> to vector<1x128x128xf32>
      tpu.vector_store %arg8[%c2_67, %c0_68, %c0_69], %109 {strides = array<i32>} : memref<4x128x128xf32, #tpu.memory_space<vmem>>, vector<1x128x128xf32>,
      %c2_70 = arith.constant 2 : index
      %c0_71 = arith.constant 0 : index
      %c0_72 = arith.constant 0 : index
      %110 = vector.load %arg9[%c2_70, %c0_71, %c0_72] : memref<4x128x128xf32, #tpu.memory_space<vmem>>, vector<1x128x128xf32>
      %111 = vector.shape_cast %110 : vector<1x128x128xf32> to vector<128x128xf32>
      %112 = vector.shape_cast %106 : vector<128x128xf32> to vector<1x128x128xf32>
      tpu.vector_store %arg9[%c2_70, %c0_71, %c0_72], %112 {strides = array<i32>} : memref<4x128x128xf32, #tpu.memory_space<vmem>>, vector<1x128x128xf32>,
      %113 = vector.extract_strided_slice %61 {offsets = [0, 768], sizes = [128, 128], strides = [1, 1]} : vector<128x1024xf32> to vector<128x128xf32>
      %114 = vector.extract_strided_slice %61 {offsets = [0, 896], sizes = [128, 128], strides = [1, 1]} : vector<128x1024xf32> to vector<128x128xf32>
      %115 = arith.mulf %113, %63 : vector<128x128xf32>
      %c64_i32_73 = arith.constant 64 : i32
      %116 = tpu.dynamic_rotate %113 by %c64_i32_73 dim 1 : vector<128x128xf32>, i32 -> vector<128x128xf32>
      %117 = arith.mulf %116, %64 : vector<128x128xf32>
      %118 = arith.addf %115, %117 : vector<128x128xf32>
      %119 = arith.mulf %114, %63 : vector<128x128xf32>
      %c64_i32_74 = arith.constant 64 : i32
      %120 = tpu.dynamic_rotate %114 by %c64_i32_74 dim 1 : vector<128x128xf32>, i32 -> vector<128x128xf32>
      %121 = arith.mulf %120, %64 : vector<128x128xf32>
      %122 = arith.addf %119, %121 : vector<128x128xf32>
      %c3_75 = arith.constant 3 : index
      %c0_76 = arith.constant 0 : index
      %c0_77 = arith.constant 0 : index
      %123 = vector.load %arg8[%c3_75, %c0_76, %c0_77] : memref<4x128x128xf32, #tpu.memory_space<vmem>>, vector<1x128x128xf32>
      %124 = vector.shape_cast %123 : vector<1x128x128xf32> to vector<128x128xf32>
      %125 = vector.shape_cast %118 : vector<128x128xf32> to vector<1x128x128xf32>
      tpu.vector_store %arg8[%c3_75, %c0_76, %c0_77], %125 {strides = array<i32>} : memref<4x128x128xf32, #tpu.memory_space<vmem>>, vector<1x128x128xf32>,
      %c3_78 = arith.constant 3 : index
      %c0_79 = arith.constant 0 : index
      %c0_80 = arith.constant 0 : index
      %126 = vector.load %arg9[%c3_78, %c0_79, %c0_80] : memref<4x128x128xf32, #tpu.memory_space<vmem>>, vector<1x128x128xf32>
      %127 = vector.shape_cast %126 : vector<1x128x128xf32> to vector<128x128xf32>
      %128 = vector.shape_cast %122 : vector<128x128xf32> to vector<1x128x128xf32>
      tpu.vector_store %arg9[%c3_78, %c0_79, %c0_80], %128 {strides = array<i32>} : memref<4x128x128xf32, #tpu.memory_space<vmem>>, vector<1x128x128xf32>,
    } else {
    }
    %c128_i32 = arith.constant 128 : i32
    %3 = arith.muli %arg2, %c128_i32 : i32
    %4 = tpu.assume_multiple %3, 128 : i32
    %5 = tpu.iota {dimensions = array<i32: 0>} : vector<128x128xi32>
    %6 = vector.broadcast %4 : i32 to vector<128x128xi32>
    %7 = arith.addi %5, %6 : vector<128x128xi32>
    %8 = tpu.iota {dimensions = array<i32: 1>} : vector<128x128xi32>
    %9 = arith.cmpi sgt, %7, %8 : vector<128x128xi32>
    %cst = arith.constant -9.99999995E+11 : f32
    %cst_1 = arith.constant 0.000000e+00 : f32
    %10 = vector.broadcast %cst : f32 to vector<128x128xf32>
    %11 = vector.broadcast %cst_1 : f32 to vector<128x128xf32>
    %12 = arith.select %9, %10, %11 : vector<128x128xi1>, vector<128x128xf32>
    %c0 = arith.constant 0 : index
    %13 = arith.index_cast %4 : i32 to index
    %c0_2 = arith.constant 0 : index
    %14 = vector.load %arg8[%c0, %13, %c0_2] : memref<4x128x128xf32, #tpu.memory_space<vmem>>, vector<1x128x128xf32>
    %15 = vector.shape_cast %14 : vector<1x128x128xf32> to vector<128x128xf32>
    %c0_3 = arith.constant 0 : index
    %c0_4 = arith.constant 0 : index
    %c0_5 = arith.constant 0 : index
    %16 = vector.load %arg9[%c0_3, %c0_4, %c0_5] : memref<4x128x128xf32, #tpu.memory_space<vmem>>, vector<1x128x128xf32>
    %17 = vector.shape_cast %16 : vector<1x128x128xf32> to vector<128x128xf32>
    %cst_6 = arith.constant dense<0.000000e+00> : vector<128x128xf32>
    %18 = tpu.matmul %15, %17, %cst_6 {dimension_numbers = #tpu.dot_dimension_numbers<[1], [1], [0], [0], [0, 0, 1, 0], [], []>} : vector<128x128xf32>, vector<128x128xf32>, vector<128x128xf32> -> vector<128x128xf32>
    %19 = arith.addf %18, %12 : vector<128x128xf32>
    %c0_7 = arith.constant 0 : index
    %c0_8 = arith.constant 0 : index
    %c0_9 = arith.constant 0 : index
    %c0_10 = arith.constant 0 : index
    %20 = vector.load %arg7[%c0_7, %c0_8, %c0_9, %c0_10] : memref<1x4x128x128xf32, #tpu.memory_space<vmem>>, vector<1x1x128x128xf32>
    %21 = vector.shape_cast %20 : vector<1x1x128x128xf32> to vector<128x128xf32>
    %22 = vector.shape_cast %19 : vector<128x128xf32> to vector<1x1x128x128xf32>
    tpu.vector_store %arg7[%c0_7, %c0_8, %c0_9, %c0_10], %22 {strides = array<i32>} : memref<1x4x128x128xf32, #tpu.memory_space<vmem>>, vector<1x1x128x128xf32>,
    %c1 = arith.constant 1 : index
    %23 = arith.index_cast %4 : i32 to index
    %c0_11 = arith.constant 0 : index
    %24 = vector.load %arg8[%c1, %23, %c0_11] : memref<4x128x128xf32, #tpu.memory_space<vmem>>, vector<1x128x128xf32>
    %25 = vector.shape_cast %24 : vector<1x128x128xf32> to vector<128x128xf32>
    %c1_12 = arith.constant 1 : index
    %c0_13 = arith.constant 0 : index
    %c0_14 = arith.constant 0 : index
    %26 = vector.load %arg9[%c1_12, %c0_13, %c0_14] : memref<4x128x128xf32, #tpu.memory_space<vmem>>, vector<1x128x128xf32>
    %27 = vector.shape_cast %26 : vector<1x128x128xf32> to vector<128x128xf32>
    %cst_15 = arith.constant dense<0.000000e+00> : vector<128x128xf32>
    %28 = tpu.matmul %25, %27, %cst_15 {dimension_numbers = #tpu.dot_dimension_numbers<[1], [1], [0], [0], [0, 0, 1, 0], [], []>} : vector<128x128xf32>, vector<128x128xf32>, vector<128x128xf32> -> vector<128x128xf32>
    %29 = arith.addf %28, %12 : vector<128x128xf32>
    %c0_16 = arith.constant 0 : index
    %c1_17 = arith.constant 1 : index
    %c0_18 = arith.constant 0 : index
    %c0_19 = arith.constant 0 : index
    %30 = vector.load %arg7[%c0_16, %c1_17, %c0_18, %c0_19] : memref<1x4x128x128xf32, #tpu.memory_space<vmem>>, vector<1x1x128x128xf32>
    %31 = vector.shape_cast %30 : vector<1x1x128x128xf32> to vector<128x128xf32>
    %32 = vector.shape_cast %29 : vector<128x128xf32> to vector<1x1x128x128xf32>
    tpu.vector_store %arg7[%c0_16, %c1_17, %c0_18, %c0_19], %32 {strides = array<i32>} : memref<1x4x128x128xf32, #tpu.memory_space<vmem>>, vector<1x1x128x128xf32>,
    %c2 = arith.constant 2 : index
    %33 = arith.index_cast %4 : i32 to index
    %c0_20 = arith.constant 0 : index
    %34 = vector.load %arg8[%c2, %33, %c0_20] : memref<4x128x128xf32, #tpu.memory_space<vmem>>, vector<1x128x128xf32>
    %35 = vector.shape_cast %34 : vector<1x128x128xf32> to vector<128x128xf32>
    %c2_21 = arith.constant 2 : index
    %c0_22 = arith.constant 0 : index
    %c0_23 = arith.constant 0 : index
    %36 = vector.load %arg9[%c2_21, %c0_22, %c0_23] : memref<4x128x128xf32, #tpu.memory_space<vmem>>, vector<1x128x128xf32>
    %37 = vector.shape_cast %36 : vector<1x128x128xf32> to vector<128x128xf32>
    %cst_24 = arith.constant dense<0.000000e+00> : vector<128x128xf32>
    %38 = tpu.matmul %35, %37, %cst_24 {dimension_numbers = #tpu.dot_dimension_numbers<[1], [1], [0], [0], [0, 0, 1, 0], [], []>} : vector<128x128xf32>, vector<128x128xf32>, vector<128x128xf32> -> vector<128x128xf32>
    %39 = arith.addf %38, %12 : vector<128x128xf32>
    %c0_25 = arith.constant 0 : index
    %c2_26 = arith.constant 2 : index
    %c0_27 = arith.constant 0 : index
    %c0_28 = arith.constant 0 : index
    %40 = vector.load %arg7[%c0_25, %c2_26, %c0_27, %c0_28] : memref<1x4x128x128xf32, #tpu.memory_space<vmem>>, vector<1x1x128x128xf32>
    %41 = vector.shape_cast %40 : vector<1x1x128x128xf32> to vector<128x128xf32>
    %42 = vector.shape_cast %39 : vector<128x128xf32> to vector<1x1x128x128xf32>
    tpu.vector_store %arg7[%c0_25, %c2_26, %c0_27, %c0_28], %42 {strides = array<i32>} : memref<1x4x128x128xf32, #tpu.memory_space<vmem>>, vector<1x1x128x128xf32>,
    %c3 = arith.constant 3 : index
    %43 = arith.index_cast %4 : i32 to index
    %c0_29 = arith.constant 0 : index
    %44 = vector.load %arg8[%c3, %43, %c0_29] : memref<4x128x128xf32, #tpu.memory_space<vmem>>, vector<1x128x128xf32>
    %45 = vector.shape_cast %44 : vector<1x128x128xf32> to vector<128x128xf32>
    %c3_30 = arith.constant 3 : index
    %c0_31 = arith.constant 0 : index
    %c0_32 = arith.constant 0 : index
    %46 = vector.load %arg9[%c3_30, %c0_31, %c0_32] : memref<4x128x128xf32, #tpu.memory_space<vmem>>, vector<1x128x128xf32>
    %47 = vector.shape_cast %46 : vector<1x128x128xf32> to vector<128x128xf32>
    %cst_33 = arith.constant dense<0.000000e+00> : vector<128x128xf32>
    %48 = tpu.matmul %45, %47, %cst_33 {dimension_numbers = #tpu.dot_dimension_numbers<[1], [1], [0], [0], [0, 0, 1, 0], [], []>} : vector<128x128xf32>, vector<128x128xf32>, vector<128x128xf32> -> vector<128x128xf32>
    %49 = arith.addf %48, %12 : vector<128x128xf32>
    %c0_34 = arith.constant 0 : index
    %c3_35 = arith.constant 3 : index
    %c0_36 = arith.constant 0 : index
    %c0_37 = arith.constant 0 : index
    %50 = vector.load %arg7[%c0_34, %c3_35, %c0_36, %c0_37] : memref<1x4x128x128xf32, #tpu.memory_space<vmem>>, vector<1x1x128x128xf32>
    %51 = vector.shape_cast %50 : vector<1x1x128x128xf32> to vector<128x128xf32>
    %52 = vector.shape_cast %49 : vector<128x128xf32> to vector<1x1x128x128xf32>
    tpu.vector_store %arg7[%c0_34, %c3_35, %c0_36, %c0_37], %52 {strides = array<i32>} : memref<1x4x128x128xf32, #tpu.memory_space<vmem>>, vector<1x1x128x128xf32>,
    return
  }
  func.func @transform_0(%arg0: i32, %arg1: i32, %arg2: i32) -> (i32, i32, i32) {
    %c0_i32 = arith.constant 0 : i32
    %c0_i32_0 = arith.constant 0 : i32
    %c0_i32_1 = arith.constant 0 : i32
    return %arg0, %c0_i32, %c0_i32_0 : i32, i32, i32
  }
  func.func @transform_1(%arg0: i32, %arg1: i32, %arg2: i32) -> (i32, i32, i32) {
    %c0_i32 = arith.constant 0 : i32
    %c0_i32_0 = arith.constant 0 : i32
    %c0_i32_1 = arith.constant 0 : i32
    return %arg1, %c0_i32, %c0_i32_0 : i32, i32, i32
  }
  func.func @transform_2(%arg0: i32, %arg1: i32, %arg2: i32) -> (i32, i32, i32) {
    %c0_i32 = arith.constant 0 : i32
    %c0_i32_0 = arith.constant 0 : i32
    %c0_i32_1 = arith.constant 0 : i32
    return %arg1, %c0_i32, %c0_i32_0 : i32, i32, i32
  }
  func.func @transform_3(%arg0: i32, %arg1: i32, %arg2: i32) -> (i32, i32) {
    %c0_i32 = arith.constant 0 : i32
    %c0_i32_0 = arith.constant 0 : i32
    %c0_i32_1 = arith.constant 0 : i32
    return %c0_i32, %c0_i32_0 : i32, i32
  }
  func.func @transform_4(%arg0: i32, %arg1: i32, %arg2: i32) -> (i32, i32, i32, i32) {
    %c0_i32 = arith.constant 0 : i32
    %c0_i32_0 = arith.constant 0 : i32
    return %arg0, %arg1, %arg2, %c0_i32 : i32, i32, i32, i32
  }
}

</mosaic_0001>

<llo_original>
// kernel: tpu_custom_call.1
$region0: #{tpu_custom_call.1}
  #allocation0 [shape = 'u32[]', space=smem, size = 0x4, offset = 0x4, fixed_abs, tag = 'smem constant byte address 0x4 - core index']
  #allocation1 [shape = 'u32[144,128]{1,0:T(1,128)}', space=vmem, size = 0x12000, scoped, tag = 'internal scratch']
  #allocation2 [shape = 'f32[4,128,128]{2,1,0:T(8,128)}', space=vmem, size = 0x40000, scoped, tag = 'scratch operand']
  #allocation3 [shape = 'f32[4,128,128]{2,1,0:T(8,128)}', space=vmem, size = 0x40000, scoped, tag = 'scratch operand']
  %s0 = inlined_call_operand.hbm [shape: f32[2,128,128], index: 0, kind: input, shape index: {}]
  %s1 = inlined_call_operand.hbm [shape: f32[1,128,1024], index: 1, kind: input, shape index: {}]
  %s2 = inlined_call_operand.hbm [shape: f32[1,1,1024], index: 2, kind: input, shape index: {}]
  %s3 = inlined_call_operand.hbm [shape: f32[128,256], index: 3, kind: input, shape index: {}]
  %s4 = inlined_call_operand.hbm [shape: f32[2,4,128,128], index: 4, kind: output, shape index: {}]
  %s5 = sld [smem:[#allocation0]]
  $region69: #{tpu_custom_call.1} parent=0
    _
  %s7 = ssub.s32 1, %s5
  %s8 = scalar_select 0, %s7, %s5
  $region1: #{tpu_custom_call.1} parent=0
    #allocation4 [shape = 'u8[131072]{0}', space=vmem, size = 0x20000, scoped, tag = 'input window, operand 0']
    #allocation5 [shape = 's32[2]{0}', space=sflag, size = 0x8, scoped, tag = 'scoped memory for tpu_custom_call.1']
    #allocation6 [shape = 's32[2]{0}', space=sflag, size = 0x8, scoped, tag = 'scoped memory for tpu_custom_call.1']
    #allocation7 [shape = 'u8[524288]{0}', space=vmem, size = 0x80000, scoped, tag = 'input window, operand 1, single buffered']
    #allocation8 [shape = 's32[1]{0}', space=sflag, size = 0x4, scoped, tag = 'scoped memory for tpu_custom_call.1']
    #allocation9 [shape = 'u8[4096]{0}', space=vmem, size = 0x1000, scoped, tag = 'input window, operand 2, single buffered']
    #allocation10 [shape = 'u8[131072]{0}', space=vmem, size = 0x20000, scoped, tag = 'input window, operand 3, single buffered']
    #allocation11 [shape = 's32[1]{0}', space=sflag, size = 0x4, scoped, tag = 'scoped memory for tpu_custom_call.1']
    #allocation12 [shape = 'u8[524288]{0}', space=vmem, size = 0x80000, scoped, tag = 'output window, operand 0']
    %9 = vsyncpa [#allocation5], 0
    %s10 = scalar_lea.sflag [#allocation5], 1
    %11 = vsyncpa %s10, 0
    %12 = vsyncpa [#allocation8], 0
    %13 = vsyncpa [#allocation11], 0
    %14 = vsyncpa [#allocation6], 0
    %s15 = scalar_lea.sflag [#allocation6], 1
    %16 = vsyncpa %s15, 0
    loop: start=0, step=1, limit=4
    $region2: #{tpu_custom_call.1} parent=1 // loop_pre_header
      _
    $region3: #{tpu_custom_call.1} parent=1 // loop_header
      %s18 = sphi 0, %s22
      %p19 = scmp.ge.s32.totalorder %s18, 4
      %s25 = sphi 0, %s44
      %s26 = sphi 0, %s40
      %s27 = sphi 0, %s36
      %s28 = sphi 0, %s25
      %s29 = sphi 0, %s26
      %s30 = sphi 0, %s27
      %s31 = sphi 0, %s28
      %s32 = sphi 0, %s29
      %s33 = sphi 0, %s30
      %s47 = sphi 0, %s49
      %s50 = sphi 0, %s47
      %s51 = sphi 0, %s50
      %s67 = sphi 0, %s51
      %s73 = sphi 0, %s75
      %s76 = sphi 0, %s73
      %s77 = sphi 0, %s76
      %s93 = sphi 0, %s77
      %s99 = sphi 0, %s101
      %s102 = sphi 0, %s99
      %s103 = sphi 0, %s102
      %s119 = sphi 0, %s103
      %s123 = sphi 0, %s123
      %s125 = sphi 0, %s123
      %s126 = sphi 0, %s125
      %s140 = sphi 0, %s126
      %s150 = sphi 0, %s152
      %s153 = sphi 0, %s150
      %s154 = sphi 0, %s153
      %s170 = sphi 0, %s154
    $region4: #{tpu_custom_call.1} parent=1 // loop_header_branch
      %21 = sbr.rel (%p19) target = $region8
    $region5: #{tpu_custom_call.1} parent=1 // loop_body
      %s23 = ssub.s32 %s18, 1
      %s24 = ssub.s32 %s18, 2
      %s34 = sadd.s32 1, %s27
      %p35 = scmp.ge.s32.totalorder %s34, 1
      %s36 = scalar_select %p35, 0, %s34
      %s37 = sadd.s32 1, %s26
      %s38 = scalar_select %p35, %s37, %s26
      %p39 = scmp.ge.s32.totalorder %s38, 1
      %s40 = scalar_select %p39, 0, %s38
      %s41 = sadd.s32 1, %s25
      %s42 = scalar_select %p39, %s41, %s25
      %p43 = scmp.ge.s32.totalorder %s42, 2
      %s44 = scalar_select %p43, 0, %s42
      %s45 = ssub.s32 %s25, %s44
      %p46 = scmp.eq.s32.totalorder %s45, 0
      %s48 = sadd.s32 %s47, 1
      %s49 = scalar_select %p46, %s47, %s48
      %p52 = pneg %p46
      %p53 = scmp.eq.s32.totalorder %s18, 1
      %p54 = por %p52, %p53
      %p55 = scmp.ne.s32.totalorder %s47, %s50
      %p56 = scmp.eq.s32.totalorder %s18, 0
      %p57 = por %p55, %p56
      %p58 = scmp.ne.s32.totalorder %s47, %s50
      %p59 = scmp.eq.s32.totalorder %s23, 1
      %p60 = por %p58, %p59
      %p61 = scmp.ne.s32.totalorder %s50, %s51
      %p62 = scmp.eq.s32.totalorder %s23, 0
      %p63 = por %p61, %p62
      %p64 = scmp.ne.s32.totalorder %s50, %s51
      %p65 = scmp.eq.s32.totalorder %s24, 1
      %p66 = por %p64, %p65
      %p68 = scmp.ne.s32.totalorder %s51, %s67
      %p69 = scmp.eq.s32.totalorder %s24, 0
      %p70 = por %p68, %p69
      %s71 = ssub.s32 %s26, %s40
      %p72 = scmp.eq.s32.totalorder %s71, 0
      %s74 = sadd.s32 %s73, 1
      %s75 = scalar_select %p72, %s73, %s74
      %p78 = pneg %p72
      %p79 = scmp.eq.s32.totalorder %s18, 1
      %p80 = por %p78, %p79
      %p81 = scmp.ne.s32.totalorder %s73, %s76
      %p82 = scmp.eq.s32.totalorder %s18, 0
      %p83 = por %p81, %p82
      %p84 = scmp.ne.s32.totalorder %s73, %s76
      %p85 = scmp.eq.s32.totalorder %s23, 1
      %p86 = por %p84, %p85
      %p87 = scmp.ne.s32.totalorder %s76, %s77
      %p88 = scmp.eq.s32.totalorder %s23, 0
      %p89 = por %p87, %p88
      %p90 = scmp.ne.s32.totalorder %s76, %s77
      %p91 = scmp.eq.s32.totalorder %s24, 1
      %p92 = por %p90, %p91
      %p94 = scmp.ne.s32.totalorder %s77, %s93
      %p95 = scmp.eq.s32.totalorder %s24, 0
      %p96 = por %p94, %p95
      %s97 = ssub.s32 %s26, %s40
      %p98 = scmp.eq.s32.totalorder %s97, 0
      %s100 = sadd.s32 %s99, 1
      %s101 = scalar_select %p98, %s99, %s100
      %p104 = pneg %p98
      %p105 = scmp.eq.s32.totalorder %s18, 1
      %p106 = por %p104, %p105
      %p107 = scmp.ne.s32.totalorder %s99, %s102
      %p108 = scmp.eq.s32.totalorder %s18, 0
      %p109 = por %p107, %p108
      %p110 = scmp.ne.s32.totalorder %s99, %s102
      %p111 = scmp.eq.s32.totalorder %s23, 1
      %p112 = por %p110, %p111
      %p113 = scmp.ne.s32.totalorder %s102, %s103
      %p114 = scmp.eq.s32.totalorder %s23, 0
      %p115 = por %p113, %p114
      %p116 = scmp.ne.s32.totalorder %s102, %s103
      %p117 = scmp.eq.s32.totalorder %s24, 1
      %p118 = por %p116, %p117
      %p120 = scmp.ne.s32.totalorder %s103, %s119
      %p121 = scmp.eq.s32.totalorder %s24, 0
      %p122 = por %p120, %p121
      %s124 = sadd.s32 %s123, 1
      %p127 = scmp.eq.s32.totalorder %s18, 1
      %p128 = scmp.ne.s32.totalorder %s123, %s125
      %p129 = scmp.eq.s32.totalorder %s18, 0
      %p130 = por %p128, %p129
      %p131 = scmp.ne.s32.totalorder %s123, %s125
      %p132 = scmp.eq.s32.totalorder %s23, 1
      %p133 = por %p131, %p132
      %p134 = scmp.ne.s32.totalorder %s125, %s126
      %p135 = scmp.eq.s32.totalorder %s23, 0
      %p136 = por %p134, %p135
      %p137 = scmp.ne.s32.totalorder %s125, %s126
      %p138 = scmp.eq.s32.totalorder %s24, 1
      %p139 = por %p137, %p138
      %p141 = scmp.ne.s32.totalorder %s126, %s140
      %p142 = scmp.eq.s32.totalorder %s24, 0
      %p143 = por %p141, %p142
      %s144 = ssub.s32 %s25, %s44
      %s145 = ssub.s32 %s26, %s40
      %s146 = sor.u32 %s144, %s145
      %s147 = ssub.s32 %s27, %s36
      %s148 = sor.u32 %s146, %s147
      %p149 = scmp.eq.s32.totalorder %s148, 0
      %s151 = sadd.s32 %s150, 1
      %s152 = scalar_select %p149, %s150, %s151
      %p155 = pneg %p149
      %p156 = scmp.eq.s32.totalorder %s18, 1
      %p157 = por %p155, %p156
      %p158 = scmp.ne.s32.totalorder %s150, %s153
      %p159 = scmp.eq.s32.totalorder %s18, 0
      %p160 = por %p158, %p159
      %p161 = scmp.ne.s32.totalorder %s150, %s153
      %p162 = scmp.eq.s32.totalorder %s23, 1
      %p163 = por %p161, %p162
      %p164 = scmp.ne.s32.totalorder %s153, %s154
      %p165 = scmp.eq.s32.totalorder %s23, 0
      %p166 = por %p164, %p165
      %p167 = scmp.ne.s32.totalorder %s153, %s154
      %p168 = scmp.eq.s32.totalorder %s24, 1
      %p169 = por %p167, %p168
      %p171 = scmp.ne.s32.totalorder %s154, %s170
      %p172 = scmp.eq.s32.totalorder %s24, 0
      %p173 = por %p171, %p172
      %p174 = scmp.le.s32.totalorder 1, %s18
      %p175 = scmp.lt.s32.totalorder %s18, 3
      %p176 = pnand %p174, %p175
      %p177 = pneg %p176
      // Predicated region
      $region9: #{tpu_custom_call.1} parent=5 // pred_check
        _
      $region10: #{tpu_custom_call.1} parent=5 // pred_check_branch
        %179 = sbr.rel (%p176) target = $region12
      $region11: #{tpu_custom_call.1} parent=5 // pred_region
        %s180 = ssub.s32 %s18, 1
        // Predicated region
        $region13: #{tpu_custom_call.1} parent=11 // pred_check
          %p181 = pneg %p89
        $region14: #{tpu_custom_call.1} parent=11 // pred_check_branch
          %183 = sbr.rel (%p181) target = $region16
        $region15: #{tpu_custom_call.1} parent=11 // pred_region
          %s185 = ssub.s32 16384, 16384
          %186 = vsyncadd [#allocation8], %s185
          %s187 = smul.addr %s29, 128
          %s188 = smul.addr %s187, 128
          %s189 = scalar_lea.hbm %s1, %s188
          %s190 = sshll.u32 [#allocation7], 4
          %s191 = int_to_ptr.vmem [resolvable:$true] %s190
          %196 = dma.hbm_to_vmem [thread:$0]  %s189, 16384, %s191, [#allocation8], 1024, 1024, 64
        $region16: #{tpu_custom_call.1} parent=11 // pred_fallthru
          _
        // Predicated region
        $region17: #{tpu_custom_call.1} parent=11 // pred_check
          %p197 = pneg %p115
        $region18: #{tpu_custom_call.1} parent=11 // pred_check_branch
          %199 = sbr.rel (%p197) target = $region20
        $region19: #{tpu_custom_call.1} parent=11 // pred_region
          %s201 = ssub.s32 128, 128
          %202 = vsyncadd [#allocation8], %s201
          %s203 = smul.addr %s29, 8
          %s204 = smul.addr %s203, 16
          %s205 = scalar_lea.hbm %s2, %s204
          %s207 = sshll.u32 [#allocation9], 4
          %s208 = int_to_ptr.vmem [resolvable:$true] %s207
          %210 = dma.hbm_to_vmem [thread:$0]  %s205, 128, %s208, [#allocation8]
        $region20: #{tpu_custom_call.1} parent=11 // pred_fallthru
          _
        // Predicated region
        $region21: #{tpu_custom_call.1} parent=11 // pred_check
          %p211 = pneg %p136
        $region22: #{tpu_custom_call.1} parent=11 // pred_check_branch
          %213 = sbr.rel (%p211) target = $region24
        $region23: #{tpu_custom_call.1} parent=11 // pred_region
          %s215 = ssub.s32 4096, 4096
          %216 = vsyncadd [#allocation11], %s215
          %s217 = sshll.u32 [#allocation10], 4
          %s218 = int_to_ptr.vmem [resolvable:$true] %s217
          %223 = dma.hbm_to_vmem [thread:$0]  %s3, 4096, %s218, [#allocation11], 256, 256, 16
        $region24: #{tpu_custom_call.1} parent=11 // pred_fallthru
          _
      $region12: #{tpu_custom_call.1} parent=5 // pred_fallthru
        _
      %p224 = scmp.lt.s32.totalorder %s18, 2
      // Predicated region
      $region25: #{tpu_custom_call.1} parent=5 // pred_check
        %p225 = pneg %p224
      $region26: #{tpu_custom_call.1} parent=5 // pred_check_branch
        %227 = sbr.rel (%p225) target = $region28
      $region27: #{tpu_custom_call.1} parent=5 // pred_region
        // Predicated region
        $region29: #{tpu_custom_call.1} parent=27 // pred_check
          %p228 = pneg %p57
        $region30: #{tpu_custom_call.1} parent=27 // pred_check_branch
          %230 = sbr.rel (%p228) target = $region32
        $region31: #{tpu_custom_call.1} parent=27 // pred_region
          %s231 = sand.u32 %s47, 1
          %s232 = scalar_lea.sflag [#allocation5], %s231
          %s233 = sand.u32 %s47, 1
          %s234 = smul.addr %s233, 128
          %s235 = scalar_lea.vmem [#allocation4], %s234
          %s237 = ssub.s32 2048, 2048
          %238 = vsyncadd %s232, %s237
          %s239 = smul.addr %s25, 16
          %s240 = smul.addr %s239, 128
          %s241 = scalar_lea.hbm %s0, %s240
          %s242 = sshll.u32 %s235, 4
          %s243 = int_to_ptr.vmem [resolvable:$true] %s242
          %248 = dma.hbm_to_vmem [thread:$0]  %s241, 2048, %s243, %s232, 128, 128, 8
        $region32: #{tpu_custom_call.1} parent=27 // pred_fallthru
          _
      $region28: #{tpu_custom_call.1} parent=5 // pred_fallthru
        _
      %p249 = scmp.le.s32.totalorder 1, %s18
      %p250 = scmp.lt.s32.totalorder %s18, 3
      %p251 = pnand %p249, %p250
      %p252 = pneg %p251
      // Predicated region
      $region33: #{tpu_custom_call.1} parent=5 // pred_check
        _
      $region34: #{tpu_custom_call.1} parent=5 // pred_check_branch
        %254 = sbr.rel (%p251) target = $region36
      $region35: #{tpu_custom_call.1} parent=5 // pred_region
        %s255 = ssub.s32 %s18, 1
        %s256 = sand.u32 %s50, 1
        %s257 = scalar_lea.sflag [#allocation5], %s256
        %s258 = sand.u32 %s50, 1
        %s259 = smul.addr %s258, 128
        %s260 = scalar_lea.vmem [#allocation4], %s259
        // Predicated region
        $region37: #{tpu_custom_call.1} parent=35 // pred_check
          %p261 = pneg %p63
        $region38: #{tpu_custom_call.1} parent=35 // pred_check_branch
          %263 = sbr.rel (%p261) target = $region40
        $region39: #{tpu_custom_call.1} parent=35 // pred_region
          %264 = dma.done %s257, 2048
        $region40: #{tpu_custom_call.1} parent=35 // pred_fallthru
          _
        // Predicated region
        $region41: #{tpu_custom_call.1} parent=35 // pred_check
          %p265 = pneg %p89
        $region42: #{tpu_custom_call.1} parent=35 // pred_check_branch
          %267 = sbr.rel (%p265) target = $region44
        $region43: #{tpu_custom_call.1} parent=35 // pred_region
          %268 = dma.done [#allocation8], 16384
        $region44: #{tpu_custom_call.1} parent=35 // pred_fallthru
          _
        // Predicated region
        $region45: #{tpu_custom_call.1} parent=35 // pred_check
          %p269 = pneg %p115
        $region46: #{tpu_custom_call.1} parent=35 // pred_check_branch
          %271 = sbr.rel (%p269) target = $region48
        $region47: #{tpu_custom_call.1} parent=35 // pred_region
          %272 = dma.done [#allocation8], 128
        $region48: #{tpu_custom_call.1} parent=35 // pred_fallthru
          _
        // Predicated region
        $region49: #{tpu_custom_call.1} parent=35 // pred_check
          %p273 = pneg %p136
        $region50: #{tpu_custom_call.1} parent=35 // pred_check_branch
          %275 = sbr.rel (%p273) target = $region52
        $region51: #{tpu_custom_call.1} parent=35 // pred_region
          %276 = dma.done [#allocation11], 4096
        $region52: #{tpu_custom_call.1} parent=35 // pred_fallthru
          _
        %s277 = sand.u32 %s50, 1
        %s278 = scalar_lea.sflag [#allocation5], %s277
        %s279 = sand.u32 %s50, 1
        %s280 = smul.addr %s279, 128
        %s281 = scalar_lea.vmem [#allocation4], %s280
        %p282 = pneg %p63
        %p283 = pneg %p60
        %p284 = pneg %p89
        %p285 = pneg %p86
        %p286 = pneg %p115
        %p287 = pneg %p112
        %p288 = pneg %p136
        %p289 = pneg %p133
        %p290 = pneg %p166
        %p291 = pneg %p163
        %s292 = sand.u32 %s153, 1
        %s293 = scalar_lea.sflag [#allocation6], %s292
        %s294 = sand.u32 %s153, 1
        %s295 = smul.addr %s294, 512
        %s296 = scalar_lea.vmem [#allocation12], %s295
        %s297 = smul.u32 4, %s29
        %s298 = smul.u32 16, %s30
        %p299 = scmp.eq.s32.totalorder %s30, 0
        // Predicated region
        $region53: #{tpu_custom_call.1} parent=35 // pred_check
          %p300 = pneg %p299
        $region54: #{tpu_custom_call.1} parent=35 // pred_check_branch
          %302 = sbr.rel (%p300) target = $region56
        $region55: #{tpu_custom_call.1} parent=35 // pred_region
          %v303 = vld [vmem:[%s260] sm:$0xff]
          %v304 = vld [vmem:[%s260 + $0x8] sm:$0xff]
          %v305 = vld [vmem:[%s260 + $0x10] sm:$0xff]
          %v306 = vld [vmem:[%s260 + $0x18] sm:$0xff]
          %v307 = vld [vmem:[%s260 + $0x20] sm:$0xff]
          %v308 = vld [vmem:[%s260 + $0x28] sm:$0xff]
          %v309 = vld [vmem:[%s260 + $0x30] sm:$0xff]
          %v310 = vld [vmem:[%s260 + $0x38] sm:$0xff]
          %v311 = vld [vmem:[%s260 + $0x40] sm:$0xff]
          %v312 = vld [vmem:[%s260 + $0x48] sm:$0xff]
          %v313 = vld [vmem:[%s260 + $0x50] sm:$0xff]
          %v314 = vld [vmem:[%s260 + $0x58] sm:$0xff]
          %v315 = vld [vmem:[%s260 + $0x60] sm:$0xff]
          %v316 = vld [vmem:[%s260 + $0x68] sm:$0xff]
          %v317 = vld [vmem:[%s260 + $0x70] sm:$0xff]
          %v318 = vld [vmem:[%s260 + $0x78] sm:$0xff]
          %v319 = vld [vmem:[#allocation7] sm:$0xff]
          %v320 = vld [vmem:[#allocation7 + $0x8] sm:$0xff]
          %v321 = vld [vmem:[#allocation7 + $0x10] sm:$0xff]
          %v322 = vld [vmem:[#allocation7 + $0x18] sm:$0xff]
          %v323 = vld [vmem:[#allocation7 + $0x20] sm:$0xff]
          %v324 = vld [vmem:[#allocation7 + $0x28] sm:$0xff]
          %v325 = vld [vmem:[#allocation7 + $0x30] sm:$0xff]
          %v326 = vld [vmem:[#allocation7 + $0x38] sm:$0xff]
          %v327 = vld [vmem:[#allocation7 + $0x40] sm:$0xff]
          %v328 = vld [vmem:[#allocation7 + $0x48] sm:$0xff]
          %v329 = vld [vmem:[#allocation7 + $0x50] sm:$0xff]
          %v330 = vld [vmem:[#allocation7 + $0x58] sm:$0xff]
          %v331 = vld [vmem:[#allocation7 + $0x60] sm:$0xff]
          %v332 = vld [vmem:[#allocation7 + $0x68] sm:$0xff]
          %v333 = vld [vmem:[#allocation7 + $0x70] sm:$0xff]
          %v334 = vld [vmem:[#allocation7 + $0x78] sm:$0xff]
          %v335 = vld [vmem:[#allocation7 + $0x80] sm:$0xff]
          %v336 = vld [vmem:[#allocation7 + $0x88] sm:$0xff]
          %v337 = vld [vmem:[#allocation7 + $0x90] sm:$0xff]
          %v338 = vld [vmem:[#allocation7 + $0x98] sm:$0xff]
          %v339 = vld [vmem:[#allocation7 + $0xa0] sm:$0xff]
          %v340 = vld [vmem:[#allocation7 + $0xa8] sm:$0xff]
          %v341 = vld [vmem:[#allocation7 + $0xb0] sm:$0xff]
          %v342 = vld [vmem:[#allocation7 + $0xb8] sm:$0xff]
          %v343 = vld [vmem:[#allocation7 + $0xc0] sm:$0xff]
          %v344 = vld [vmem:[#allocation7 + $0xc8] sm:$0xff]
          %v345 = vld [vmem:[#allocation7 + $0xd0] sm:$0xff]
          %v346 = vld [vmem:[#allocation7 + $0xd8] sm:$0xff]
          %v347 = vld [vmem:[#allocation7 + $0xe0] sm:$0xff]
          %v348 = vld [vmem:[#allocation7 + $0xe8] sm:$0xff]
          %v349 = vld [vmem:[#allocation7 + $0xf0] sm:$0xff]
          %v350 = vld [vmem:[#allocation7 + $0xf8] sm:$0xff]
          %v351 = vld [vmem:[#allocation7 + $0x100] sm:$0xff]
          %v352 = vld [vmem:[#allocation7 + $0x108] sm:$0xff]
          %v353 = vld [vmem:[#allocation7 + $0x110] sm:$0xff]
          %v354 = vld [vmem:[#allocation7 + $0x118] sm:$0xff]
          %v355 = vld [vmem:[#allocation7 + $0x120] sm:$0xff]
          %v356 = vld [vmem:[#allocation7 + $0x128] sm:$0xff]
          %v357 = vld [vmem:[#allocation7 + $0x130] sm:$0xff]
          %v358 = vld [vmem:[#allocation7 + $0x138] sm:$0xff]
          %v359 = vld [vmem:[#allocation7 + $0x140] sm:$0xff]
          %v360 = vld [vmem:[#allocation7 + $0x148] sm:$0xff]
          %v361 = vld [vmem:[#allocation7 + $0x150] sm:$0xff]
          %v362 = vld [vmem:[#allocation7 + $0x158] sm:$0xff]
          %v363 = vld [vmem:[#allocation7 + $0x160] sm:$0xff]
          %v364 = vld [vmem:[#allocation7 + $0x168] sm:$0xff]
          %v365 = vld [vmem:[#allocation7 + $0x170] sm:$0xff]
          %v366 = vld [vmem:[#allocation7 + $0x178] sm:$0xff]
          %v367 = vld [vmem:[#allocation7 + $0x180] sm:$0xff]
          %v368 = vld [vmem:[#allocation7 + $0x188] sm:$0xff]
          %v369 = vld [vmem:[#allocation7 + $0x190] sm:$0xff]
          %v370 = vld [vmem:[#allocation7 + $0x198] sm:$0xff]
          %v371 = vld [vmem:[#allocation7 + $0x1a0] sm:$0xff]
          %v372 = vld [vmem:[#allocation7 + $0x1a8] sm:$0xff]
          %v373 = vld [vmem:[#allocation7 + $0x1b0] sm:$0xff]
          %v374 = vld [vmem:[#allocation7 + $0x1b8] sm:$0xff]
          %v375 = vld [vmem:[#allocation7 + $0x1c0] sm:$0xff]
          %v376 = vld [vmem:[#allocation7 + $0x1c8] sm:$0xff]
          %v377 = vld [vmem:[#allocation7 + $0x1d0] sm:$0xff]
          %v378 = vld [vmem:[#allocation7 + $0x1d8] sm:$0xff]
          %v379 = vld [vmem:[#allocation7 + $0x1e0] sm:$0xff]
          %v380 = vld [vmem:[#allocation7 + $0x1e8] sm:$0xff]
          %v381 = vld [vmem:[#allocation7 + $0x1f0] sm:$0xff]
          %v382 = vld [vmem:[#allocation7 + $0x1f8] sm:$0xff]
          %v383 = vld [vmem:[#allocation7 + $0x200] sm:$0xff]
          %v384 = vld [vmem:[#allocation7 + $0x208] sm:$0xff]
          %v385 = vld [vmem:[#allocation7 + $0x210] sm:$0xff]
          %v386 = vld [vmem:[#allocation7 + $0x218] sm:$0xff]
          %v387 = vld [vmem:[#allocation7 + $0x220] sm:$0xff]
          %v388 = vld [vmem:[#allocation7 + $0x228] sm:$0xff]
          %v389 = vld [vmem:[#allocation7 + $0x230] sm:$0xff]
          %v390 = vld [vmem:[#allocation7 + $0x238] sm:$0xff]
          %v391 = vld [vmem:[#allocation7 + $0x240] sm:$0xff]
          %v392 = vld [vmem:[#allocation7 + $0x248] sm:$0xff]
          %v393 = vld [vmem:[#allocation7 + $0x250] sm:$0xff]
          %v394 = vld [vmem:[#allocation7 + $0x258] sm:$0xff]
          %v395 = vld [vmem:[#allocation7 + $0x260] sm:$0xff]
          %v396 = vld [vmem:[#allocation7 + $0x268] sm:$0xff]
          %v397 = vld [vmem:[#allocation7 + $0x270] sm:$0xff]
          %v398 = vld [vmem:[#allocation7 + $0x278] sm:$0xff]
          %v399 = vld [vmem:[#allocation7 + $0x280] sm:$0xff]
          %v400 = vld [vmem:[#allocation7 + $0x288] sm:$0xff]
          %v401 = vld [vmem:[#allocation7 + $0x290] sm:$0xff]
          %v402 = vld [vmem:[#allocation7 + $0x298] sm:$0xff]
          %v403 = vld [vmem:[#allocation7 + $0x2a0] sm:$0xff]
          %v404 = vld [vmem:[#allocation7 + $0x2a8] sm:$0xff]
          %v405 = vld [vmem:[#allocation7 + $0x2b0] sm:$0xff]
          %v406 = vld [vmem:[#allocation7 + $0x2b8] sm:$0xff]
          %v407 = vld [vmem:[#allocation7 + $0x2c0] sm:$0xff]
          %v408 = vld [vmem:[#allocation7 + $0x2c8] sm:$0xff]
          %v409 = vld [vmem:[#allocation7 + $0x2d0] sm:$0xff]
          %v410 = vld [vmem:[#allocation7 + $0x2d8] sm:$0xff]
          %v411 = vld [vmem:[#allocation7 + $0x2e0] sm:$0xff]
          %v412 = vld [vmem:[#allocation7 + $0x2e8] sm:$0xff]
          %v413 = vld [vmem:[#allocation7 + $0x2f0] sm:$0xff]
          %v414 = vld [vmem:[#allocation7 + $0x2f8] sm:$0xff]
          %v415 = vld [vmem:[#allocation7 + $0x300] sm:$0xff]
          %v416 = vld [vmem:[#allocation7 + $0x308] sm:$0xff]
          %v417 = vld [vmem:[#allocation7 + $0x310] sm:$0xff]
          %v418 = vld [vmem:[#allocation7 + $0x318] sm:$0xff]
          %v419 = vld [vmem:[#allocation7 + $0x320] sm:$0xff]
          %v420 = vld [vmem:[#allocation7 + $0x328] sm:$0xff]
          %v421 = vld [vmem:[#allocation7 + $0x330] sm:$0xff]
          %v422 = vld [vmem:[#allocation7 + $0x338] sm:$0xff]
          %v423 = vld [vmem:[#allocation7 + $0x340] sm:$0xff]
          %v424 = vld [vmem:[#allocation7 + $0x348] sm:$0xff]
          %v425 = vld [vmem:[#allocation7 + $0x350] sm:$0xff]
          %v426 = vld [vmem:[#allocation7 + $0x358] sm:$0xff]
          %v427 = vld [vmem:[#allocation7 + $0x360] sm:$0xff]
          %v428 = vld [vmem:[#allocation7 + $0x368] sm:$0xff]
          %v429 = vld [vmem:[#allocation7 + $0x370] sm:$0xff]
          %v430 = vld [vmem:[#allocation7 + $0x378] sm:$0xff]
          %v431 = vld [vmem:[#allocation7 + $0x380] sm:$0xff]
          %v432 = vld [vmem:[#allocation7 + $0x388] sm:$0xff]
          %v433 = vld [vmem:[#allocation7 + $0x390] sm:$0xff]
          %v434 = vld [vmem:[#allocation7 + $0x398] sm:$0xff]
          %v435 = vld [vmem:[#allocation7 + $0x3a0] sm:$0xff]
          %v436 = vld [vmem:[#allocation7 + $0x3a8] sm:$0xff]
          %v437 = vld [vmem:[#allocation7 + $0x3b0] sm:$0xff]
          %v438 = vld [vmem:[#allocation7 + $0x3b8] sm:$0xff]
          %v439 = vld [vmem:[#allocation7 + $0x3c0] sm:$0xff]
          %v440 = vld [vmem:[#allocation7 + $0x3c8] sm:$0xff]
          %v441 = vld [vmem:[#allocation7 + $0x3d0] sm:$0xff]
          %v442 = vld [vmem:[#allocation7 + $0x3d8] sm:$0xff]
          %v443 = vld [vmem:[#allocation7 + $0x3e0] sm:$0xff]
          %v444 = vld [vmem:[#allocation7 + $0x3e8] sm:$0xff]
          %v445 = vld [vmem:[#allocation7 + $0x3f0] sm:$0xff]
          %v446 = vld [vmem:[#allocation7 + $0x3f8] sm:$0xff]
          %v447 = vld [vmem:[#allocation9] sm:$0xff]
          %v449 = vlaneseq
          %v450 = vshrl.u32 %v449, 7
          %v451 = vsub.s32 0, %v450
          %v452 = vrot.slane %v447, %v451
          %v453 = vlaneseq
          %v454 = vshrl.u32 %v453, 7
          %v455 = vsub.s32 1, %v454
          %v456 = vrot.slane %v447, %v455
          %v457 = vlaneseq
          %v458 = vshrl.u32 %v457, 7
          %v459 = vsub.s32 2, %v458
          %v460 = vrot.slane %v447, %v459
          %v461 = vlaneseq
          %v462 = vshrl.u32 %v461, 7
          %v463 = vsub.s32 3, %v462
          %v464 = vrot.slane %v447, %v463
          %v465 = vlaneseq
          %v466 = vshrl.u32 %v465, 7
          %v467 = vsub.s32 4, %v466
          %v468 = vrot.slane %v447, %v467
          %v469 = vlaneseq
          %v470 = vshrl.u32 %v469, 7
          %v471 = vsub.s32 5, %v470
          %v472 = vrot.slane %v447, %v471
          %v473 = vlaneseq
          %v474 = vshrl.u32 %v473, 7
          %v475 = vsub.s32 6, %v474
          %v476 = vrot.slane %v447, %v475
          %v477 = vlaneseq
          %v478 = vshrl.u32 %v477, 7
          %v479 = vsub.s32 7, %v478
          %v480 = vrot.slane %v447, %v479
          %489 = vmatprep.subr.mxu0 %v440
          %490 = vmatpush1.msra.mxu0 %v439
          %491 = vmatprep.subr.mxu0 %v432
          %492 = vmatpush1.msra.mxu0 %v431
          %493 = vmatprep.subr.mxu0 %v424
          %494 = vmatpush1.msra.mxu0 %v423
          %495 = vmatprep.subr.mxu0 %v416
          %496 = vmatpush1.msra.mxu0 %v415
          %497 = vmatprep.subr.mxu0 %v408
          %498 = vmatpush1.msra.mxu0 %v407
          %499 = vmatprep.subr.mxu0 %v400
          %500 = vmatpush1.msra.mxu0 %v399
          %501 = vmatprep.subr.mxu0 %v392
          %502 = vmatpush1.msra.mxu0 %v391
          %503 = vmatprep.subr.mxu0 %v384
          %504 = vmatpush1.msra.mxu0 %v383
          %505 = vmatprep.subr.mxu0 %v376
          %506 = vmatpush1.msra.mxu0 %v375
          %507 = vmatprep.subr.mxu0 %v368
          %508 = vmatpush1.msra.mxu0 %v367
          %509 = vmatprep.subr.mxu0 %v360
          %510 = vmatpush1.msra.mxu0 %v359
          %511 = vmatprep.subr.mxu0 %v352
          %512 = vmatpush1.msra.mxu0 %v351
          %513 = vmatprep.subr.mxu0 %v344
          %514 = vmatpush1.msra.mxu0 %v343
          %515 = vmatprep.subr.mxu0 %v336
          %516 = vmatpush1.msra.mxu0 %v335
          %517 = vmatprep.subr.mxu0 %v328
          %518 = vmatpush1.msra.mxu0 %v327
          %519 = vmatprep.subr.mxu0 %v320
          %520 = vmatpush1.msra.mxu0 %v319
          %521 = vmatprep.subr.mxu0 0.0
          %522 = vmatpush2.msra.mxu0 0.0
          %523 = vmatprep.subr.mxu0 0.0
          %524 = vmatpush2.msra.mxu0 0.0
          %525 = vmatprep.subr.mxu0 0.0
          %526 = vmatpush2.msra.mxu0 0.0
          %527 = vmatprep.subr.mxu0 0.0
          %528 = vmatpush2.msra.mxu0 0.0
          %529 = vmatprep.subr.mxu0 0.0
          %530 = vmatpush2.msra.mxu0 0.0
          %531 = vmatprep.subr.mxu0 0.0
          %532 = vmatpush2.msra.mxu0 0.0
          %533 = vmatprep.subr.mxu0 0.0
          %534 = vmatpush2.msra.mxu0 0.0
          %535 = vmatprep.subr.mxu0 0.0
          %536 = vmatpush2.msra.mxu0 0.0
          %537 = vmatprep.subr.mxu0 0.0
          %538 = vmatpush2.msra.mxu0 0.0
          %539 = vmatprep.subr.mxu0 0.0
          %540 = vmatpush2.msra.mxu0 0.0
          %541 = vmatprep.subr.mxu0 0.0
          %542 = vmatpush2.msra.mxu0 0.0
          %543 = vmatprep.subr.mxu0 0.0
          %544 = vmatpush2.msra.mxu0 0.0
          %545 = vmatprep.subr.mxu0 0.0
          %546 = vmatpush2.msra.mxu0 0.0
          %547 = vmatprep.subr.mxu0 0.0
          %548 = vmatpush2.msra.mxu0 0.0
          %549 = vmatprep.subr.mxu0 0.0
          %550 = vmatpush2.msra.mxu0 0.0
          %551 = vmatprep.subr.mxu0 0.0
          %552 = vmatpush2.msra.mxu0 0.0
          %553 = vmatprep.mubr.f32.mxu0 0.0
          %554 = vmatmul.mubr.f32.gmra.mxu0 %v303
          %v555 = vpop.f32.mrf.mxu0
          %v556 = vadd.f32 %v452, %v555
          %v557 = vpop.f32.mrf.mxu0
          %v558 = vadd.f32 %v456, %v557
          %559 = vmatprep.mubr.f32.mxu0 0.0
          %560 = vmatmul.mubr.f32.gmra.mxu0 %v304
          %v561 = vpop.f32.mrf.mxu0
          %v562 = vadd.f32 %v452, %v561
          %v563 = vpop.f32.mrf.mxu0
          %v564 = vadd.f32 %v456, %v563
          %565 = vmatprep.mubr.f32.mxu0 0.0
          %566 = vmatmul.mubr.f32.gmra.mxu0 %v305
          %v567 = vpop.f32.mrf.mxu0
          %v568 = vadd.f32 %v452, %v567
          %v569 = vpop.f32.mrf.mxu0
          %v570 = vadd.f32 %v456, %v569
          %571 = vmatprep.mubr.f32.mxu0 0.0
          %572 = vmatmul.mubr.f32.gmra.mxu0 %v306
          %v573 = vpop.f32.mrf.mxu0
          %v574 = vadd.f32 %v452, %v573
          %v575 = vpop.f32.mrf.mxu0
          %v576 = vadd.f32 %v456, %v575
          %577 = vmatprep.mubr.f32.mxu0 0.0
          %578 = vmatmul.mubr.f32.gmra.mxu0 %v307
          %v579 = vpop.f32.mrf.mxu0
          %v580 = vadd.f32 %v452, %v579
          %v581 = vpop.f32.mrf.mxu0
          %v582 = vadd.f32 %v456, %v581
          %583 = vmatprep.mubr.f32.mxu0 0.0
          %584 = vmatmul.mubr.f32.gmra.mxu0 %v308
          %v585 = vpop.f32.mrf.mxu0
          %v586 = vadd.f32 %v452, %v585
          %v587 = vpop.f32.mrf.mxu0
          %v588 = vadd.f32 %v456, %v587
          %589 = vmatprep.mubr.f32.mxu0 0.0
          %590 = vmatmul.mubr.f32.gmra.mxu0 %v309
          %v591 = vpop.f32.mrf.mxu0
          %v592 = vadd.f32 %v452, %v591
          %v593 = vpop.f32.mrf.mxu0
          %v594 = vadd.f32 %v456, %v593
          %595 = vmatprep.mubr.f32.mxu0 0.0
          %596 = vmatmul.mubr.f32.gmra.mxu0 %v310
          %v597 = vpop.f32.mrf.mxu0
          %v598 = vadd.f32 %v452, %v597
          %v599 = vpop.f32.mrf.mxu0
          %v600 = vadd.f32 %v456, %v599
          %601 = vmatprep.mubr.f32.mxu0 0.0
          %602 = vmatmul.mubr.f32.gmra.mxu0 %v311
          %v603 = vpop.f32.mrf.mxu0
          %v604 = vadd.f32 %v452, %v603
          %v605 = vpop.f32.mrf.mxu0
          %v606 = vadd.f32 %v456, %v605
          %607 = vmatprep.mubr.f32.mxu0 0.0
          %608 = vmatmul.mubr.f32.gmra.mxu0 %v312
          %v609 = vpop.f32.mrf.mxu0
          %v610 = vadd.f32 %v452, %v609
          %v611 = vpop.f32.mrf.mxu0
          %v612 = vadd.f32 %v456, %v611
          %613 = vmatprep.mubr.f32.mxu0 0.0
          %614 = vmatmul.mubr.f32.gmra.mxu0 %v313
          %v615 = vpop.f32.mrf.mxu0
          %v616 = vadd.f32 %v452, %v615
          %v617 = vpop.f32.mrf.mxu0
          %v618 = vadd.f32 %v456, %v617
          %619 = vmatprep.mubr.f32.mxu0 0.0
          %620 = vmatmul.mubr.f32.gmra.mxu0 %v314
          %v621 = vpop.f32.mrf.mxu0
          %v622 = vadd.f32 %v452, %v621
          %v623 = vpop.f32.mrf.mxu0
          %v624 = vadd.f32 %v456, %v623
          %625 = vmatprep.mubr.f32.mxu0 0.0
          %626 = vmatmul.mubr.f32.gmra.mxu0 %v315
          %v627 = vpop.f32.mrf.mxu0
          %v628 = vadd.f32 %v452, %v627
          %v629 = vpop.f32.mrf.mxu0
          %v630 = vadd.f32 %v456, %v629
          %631 = vmatprep.mubr.f32.mxu0 0.0
          %632 = vmatmul.mubr.f32.gmra.mxu0 %v316
          %v633 = vpop.f32.mrf.mxu0
          %v634 = vadd.f32 %v452, %v633
          %v635 = vpop.f32.mrf.mxu0
          %v636 = vadd.f32 %v456, %v635
          %637 = vmatprep.mubr.f32.mxu0 0.0
          %638 = vmatmul.mubr.f32.gmra.mxu0 %v317
          %v639 = vpop.f32.mrf.mxu0
          %v640 = vadd.f32 %v452, %v639
          %v641 = vpop.f32.mrf.mxu0
          %v642 = vadd.f32 %v456, %v641
          %643 = vmatprep.mubr.f32.mxu0 0.0
          %644 = vmatmul.mubr.f32.gmra.mxu0 %v318
          %v645 = vpop.f32.mrf.mxu0
          %v646 = vadd.f32 %v452, %v645
          %v647 = vpop.f32.mrf.mxu0
          %v648 = vadd.f32 %v456, %v647
          %649 = vdwg.mxu0
          %650 = vmatprep.subr.mxu0 %v442
          %651 = vmatpush1.msra.mxu0 %v441
          %652 = vmatprep.subr.mxu0 %v434
          %653 = vmatpush1.msra.mxu0 %v433
          %654 = vmatprep.subr.mxu0 %v426
          %655 = vmatpush1.msra.mxu0 %v425
          %656 = vmatprep.subr.mxu0 %v418
          %657 = vmatpush1.msra.mxu0 %v417
          %658 = vmatprep.subr.mxu0 %v410
          %659 = vmatpush1.msra.mxu0 %v409
          %660 = vmatprep.subr.mxu0 %v402
          %661 = vmatpush1.msra.mxu0 %v401
          %662 = vmatprep.subr.mxu0 %v394
          %663 = vmatpush1.msra.mxu0 %v393
          %664 = vmatprep.subr.mxu0 %v386
          %665 = vmatpush1.msra.mxu0 %v385
          %666 = vmatprep.subr.mxu0 %v378
          %667 = vmatpush1.msra.mxu0 %v377
          %668 = vmatprep.subr.mxu0 %v370
          %669 = vmatpush1.msra.mxu0 %v369
          %670 = vmatprep.subr.mxu0 %v362
          %671 = vmatpush1.msra.mxu0 %v361
          %672 = vmatprep.subr.mxu0 %v354
          %673 = vmatpush1.msra.mxu0 %v353
          %674 = vmatprep.subr.mxu0 %v346
          %675 = vmatpush1.msra.mxu0 %v345
          %676 = vmatprep.subr.mxu0 %v338
          %677 = vmatpush1.msra.mxu0 %v337
          %678 = vmatprep.subr.mxu0 %v330
          %679 = vmatpush1.msra.mxu0 %v329
          %680 = vmatprep.subr.mxu0 %v322
          %681 = vmatpush1.msra.mxu0 %v321
          %682 = vmatprep.subr.mxu0 0.0
          %683 = vmatpush2.msra.mxu0 0.0
          %684 = vmatprep.subr.mxu0 0.0
          %685 = vmatpush2.msra.mxu0 0.0
          %686 = vmatprep.subr.mxu0 0.0
          %687 = vmatpush2.msra.mxu0 0.0
          %688 = vmatprep.subr.mxu0 0.0
          %689 = vmatpush2.msra.mxu0 0.0
          %690 = vmatprep.subr.mxu0 0.0
          %691 = vmatpush2.msra.mxu0 0.0
          %692 = vmatprep.subr.mxu0 0.0
          %693 = vmatpush2.msra.mxu0 0.0
          %694 = vmatprep.subr.mxu0 0.0
          %695 = vmatpush2.msra.mxu0 0.0
          %696 = vmatprep.subr.mxu0 0.0
          %697 = vmatpush2.msra.mxu0 0.0
          %698 = vmatprep.subr.mxu0 0.0
          %699 = vmatpush2.msra.mxu0 0.0
          %700 = vmatprep.subr.mxu0 0.0
          %701 = vmatpush2.msra.mxu0 0.0
          %702 = vmatprep.subr.mxu0 0.0
          %703 = vmatpush2.msra.mxu0 0.0
          %704 = vmatprep.subr.mxu0 0.0
          %705 = vmatpush2.msra.mxu0 0.0
          %706 = vmatprep.subr.mxu0 0.0
          %707 = vmatpush2.msra.mxu0 0.0
          %708 = vmatprep.subr.mxu0 0.0
          %709 = vmatpush2.msra.mxu0 0.0
          %710 = vmatprep.subr.mxu0 0.0
          %711 = vmatpush2.msra.mxu0 0.0
          %712 = vmatprep.subr.mxu0 0.0
          %713 = vmatpush2.msra.mxu0 0.0
          %714 = vmatprep.mubr.f32.mxu0 0.0
          %715 = vmatmul.mubr.f32.gmra.mxu0 %v303
          %v716 = vpop.f32.mrf.mxu0
          %v717 = vadd.f32 %v460, %v716
          %v718 = vpop.f32.mrf.mxu0
          %v719 = vadd.f32 %v464, %v718
          %720 = vmatprep.mubr.f32.mxu0 0.0
          %721 = vmatmul.mubr.f32.gmra.mxu0 %v304
          %v722 = vpop.f32.mrf.mxu0
          %v723 = vadd.f32 %v460, %v722
          %v724 = vpop.f32.mrf.mxu0
          %v725 = vadd.f32 %v464, %v724
          %726 = vmatprep.mubr.f32.mxu0 0.0
          %727 = vmatmul.mubr.f32.gmra.mxu0 %v305
          %v728 = vpop.f32.mrf.mxu0
          %v729 = vadd.f32 %v460, %v728
          %v730 = vpop.f32.mrf.mxu0
          %v731 = vadd.f32 %v464, %v730
          %732 = vmatprep.mubr.f32.mxu0 0.0
          %733 = vmatmul.mubr.f32.gmra.mxu0 %v306
          %v734 = vpop.f32.mrf.mxu0
          %v735 = vadd.f32 %v460, %v734
          %v736 = vpop.f32.mrf.mxu0
          %v737 = vadd.f32 %v464, %v736
          %738 = vmatprep.mubr.f32.mxu0 0.0
          %739 = vmatmul.mubr.f32.gmra.mxu0 %v307
          %v740 = vpop.f32.mrf.mxu0
          %v741 = vadd.f32 %v460, %v740
          %v742 = vpop.f32.mrf.mxu0
          %v743 = vadd.f32 %v464, %v742
          %744 = vmatprep.mubr.f32.mxu0 0.0
          %745 = vmatmul.mubr.f32.gmra.mxu0 %v308
          %v746 = vpop.f32.mrf.mxu0
          %v747 = vadd.f32 %v460, %v746
          %v748 = vpop.f32.mrf.mxu0
          %v749 = vadd.f32 %v464, %v748
          %750 = vmatprep.mubr.f32.mxu0 0.0
          %751 = vmatmul.mubr.f32.gmra.mxu0 %v309
          %v752 = vpop.f32.mrf.mxu0
          %v753 = vadd.f32 %v460, %v752
          %v754 = vpop.f32.mrf.mxu0
          %v755 = vadd.f32 %v464, %v754
          %756 = vmatprep.mubr.f32.mxu0 0.0
          %757 = vmatmul.mubr.f32.gmra.mxu0 %v310
          %v758 = vpop.f32.mrf.mxu0
          %v759 = vadd.f32 %v460, %v758
          %v760 = vpop.f32.mrf.mxu0
          %v761 = vadd.f32 %v464, %v760
          %762 = vmatprep.mubr.f32.mxu0 0.0
          %763 = vmatmul.mubr.f32.gmra.mxu0 %v311
          %v764 = vpop.f32.mrf.mxu0
          %v765 = vadd.f32 %v460, %v764
          %v766 = vpop.f32.mrf.mxu0
          %v767 = vadd.f32 %v464, %v766
          %768 = vmatprep.mubr.f32.mxu0 0.0
          %769 = vmatmul.mubr.f32.gmra.mxu0 %v312
          %v770 = vpop.f32.mrf.mxu0
          %v771 = vadd.f32 %v460, %v770
          %v772 = vpop.f32.mrf.mxu0
          %v773 = vadd.f32 %v464, %v772
          %774 = vmatprep.mubr.f32.mxu0 0.0
          %775 = vmatmul.mubr.f32.gmra.mxu0 %v313
          %v776 = vpop.f32.mrf.mxu0
          %v777 = vadd.f32 %v460, %v776
          %v778 = vpop.f32.mrf.mxu0
          %v779 = vadd.f32 %v464, %v778
          %780 = vmatprep.mubr.f32.mxu0 0.0
          %781 = vmatmul.mubr.f32.gmra.mxu0 %v314
          %v782 = vpop.f32.mrf.mxu0
          %v783 = vadd.f32 %v460, %v782
          %v784 = vpop.f32.mrf.mxu0
          %v785 = vadd.f32 %v464, %v784
          %786 = vmatprep.mubr.f32.mxu0 0.0
          %787 = vmatmul.mubr.f32.gmra.mxu0 %v315
          %v788 = vpop.f32.mrf.mxu0
          %v789 = vadd.f32 %v460, %v788
          %v790 = vpop.f32.mrf.mxu0
          %v791 = vadd.f32 %v464, %v790
          %792 = vmatprep.mubr.f32.mxu0 0.0
          %793 = vmatmul.mubr.f32.gmra.mxu0 %v316
          %v794 = vpop.f32.mrf.mxu0
          %v795 = vadd.f32 %v460, %v794
          %v796 = vpop.f32.mrf.mxu0
          %v797 = vadd.f32 %v464, %v796
          %798 = vmatprep.mubr.f32.mxu0 0.0
          %799 = vmatmul.mubr.f32.gmra.mxu0 %v317
          %v800 = vpop.f32.mrf.mxu0
          %v801 = vadd.f32 %v460, %v800
          %v802 = vpop.f32.mrf.mxu0
          %v803 = vadd.f32 %v464, %v802
          %804 = vmatprep.mubr.f32.mxu0 0.0
          %805 = vmatmul.mubr.f32.gmra.mxu0 %v318
          %v806 = vpop.f32.mrf.mxu0
          %v807 = vadd.f32 %v460, %v806
          %v808 = vpop.f32.mrf.mxu0
          %v809 = vadd.f32 %v464, %v808
          %810 = vdwg.mxu0
          %811 = vmatprep.subr.mxu0 %v444
          %812 = vmatpush1.msra.mxu0 %v443
          %813 = vmatprep.subr.mxu0 %v436
          %814 = vmatpush1.msra.mxu0 %v435
          %815 = vmatprep.subr.mxu0 %v428
          %816 = vmatpush1.msra.mxu0 %v427
          %817 = vmatprep.subr.mxu0 %v420
          %818 = vmatpush1.msra.mxu0 %v419
          %819 = vmatprep.subr.mxu0 %v412
          %820 = vmatpush1.msra.mxu0 %v411
          %821 = vmatprep.subr.mxu0 %v404
          %822 = vmatpush1.msra.mxu0 %v403
          %823 = vmatprep.subr.mxu0 %v396
          %824 = vmatpush1.msra.mxu0 %v395
          %825 = vmatprep.subr.mxu0 %v388
          %826 = vmatpush1.msra.mxu0 %v387
          %827 = vmatprep.subr.mxu0 %v380
          %828 = vmatpush1.msra.mxu0 %v379
          %829 = vmatprep.subr.mxu0 %v372
          %830 = vmatpush1.msra.mxu0 %v371
          %831 = vmatprep.subr.mxu0 %v364
          %832 = vmatpush1.msra.mxu0 %v363
          %833 = vmatprep.subr.mxu0 %v356
          %834 = vmatpush1.msra.mxu0 %v355
          %835 = vmatprep.subr.mxu0 %v348
          %836 = vmatpush1.msra.mxu0 %v347
          %837 = vmatprep.subr.mxu0 %v340
          %838 = vmatpush1.msra.mxu0 %v339
          %839 = vmatprep.subr.mxu0 %v332
          %840 = vmatpush1.msra.mxu0 %v331
          %841 = vmatprep.subr.mxu0 %v324
          %842 = vmatpush1.msra.mxu0 %v323
          %843 = vmatprep.subr.mxu0 0.0
          %844 = vmatpush2.msra.mxu0 0.0
          %845 = vmatprep.subr.mxu0 0.0
          %846 = vmatpush2.msra.mxu0 0.0
          %847 = vmatprep.subr.mxu0 0.0
          %848 = vmatpush2.msra.mxu0 0.0
          %849 = vmatprep.subr.mxu0 0.0
          %850 = vmatpush2.msra.mxu0 0.0
          %851 = vmatprep.subr.mxu0 0.0
          %852 = vmatpush2.msra.mxu0 0.0
          %853 = vmatprep.subr.mxu0 0.0
          %854 = vmatpush2.msra.mxu0 0.0
          %855 = vmatprep.subr.mxu0 0.0
          %856 = vmatpush2.msra.mxu0 0.0
          %857 = vmatprep.subr.mxu0 0.0
          %858 = vmatpush2.msra.mxu0 0.0
          %859 = vmatprep.subr.mxu0 0.0
          %860 = vmatpush2.msra.mxu0 0.0
          %861 = vmatprep.subr.mxu0 0.0
          %862 = vmatpush2.msra.mxu0 0.0
          %863 = vmatprep.subr.mxu0 0.0
          %864 = vmatpush2.msra.mxu0 0.0
          %865 = vmatprep.subr.mxu0 0.0
          %866 = vmatpush2.msra.mxu0 0.0
          %867 = vmatprep.subr.mxu0 0.0
          %868 = vmatpush2.msra.mxu0 0.0
          %869 = vmatprep.subr.mxu0 0.0
          %870 = vmatpush2.msra.mxu0 0.0
          %871 = vmatprep.subr.mxu0 0.0
          %872 = vmatpush2.msra.mxu0 0.0
          %873 = vmatprep.subr.mxu0 0.0
          %874 = vmatpush2.msra.mxu0 0.0
          %875 = vmatprep.mubr.f32.mxu0 0.0
          %876 = vmatmul.mubr.f32.gmra.mxu0 %v303
          %v877 = vpop.f32.mrf.mxu0
          %v878 = vadd.f32 %v468, %v877
          %v879 = vpop.f32.mrf.mxu0
          %v880 = vadd.f32 %v472, %v879
          %881 = vmatprep.mubr.f32.mxu0 0.0
          %882 = vmatmul.mubr.f32.gmra.mxu0 %v304
          %v883 = vpop.f32.mrf.mxu0
          %v884 = vadd.f32 %v468, %v883
          %v885 = vpop.f32.mrf.mxu0
          %v886 = vadd.f32 %v472, %v885
          %887 = vmatprep.mubr.f32.mxu0 0.0
          %888 = vmatmul.mubr.f32.gmra.mxu0 %v305
          %v889 = vpop.f32.mrf.mxu0
          %v890 = vadd.f32 %v468, %v889
          %v891 = vpop.f32.mrf.mxu0
          %v892 = vadd.f32 %v472, %v891
          %893 = vmatprep.mubr.f32.mxu0 0.0
          %894 = vmatmul.mubr.f32.gmra.mxu0 %v306
          %v895 = vpop.f32.mrf.mxu0
          %v896 = vadd.f32 %v468, %v895
          %v897 = vpop.f32.mrf.mxu0
          %v898 = vadd.f32 %v472, %v897
          %899 = vmatprep.mubr.f32.mxu0 0.0
          %900 = vmatmul.mubr.f32.gmra.mxu0 %v307
          %v901 = vpop.f32.mrf.mxu0
          %v902 = vadd.f32 %v468, %v901
          %v903 = vpop.f32.mrf.mxu0
          %v904 = vadd.f32 %v472, %v903
          %905 = vmatprep.mubr.f32.mxu0 0.0
          %906 = vmatmul.mubr.f32.gmra.mxu0 %v308
          %v907 = vpop.f32.mrf.mxu0
          %v908 = vadd.f32 %v468, %v907
          %v909 = vpop.f32.mrf.mxu0
          %v910 = vadd.f32 %v472, %v909
          %911 = vmatprep.mubr.f32.mxu0 0.0
          %912 = vmatmul.mubr.f32.gmra.mxu0 %v309
          %v913 = vpop.f32.mrf.mxu0
          %v914 = vadd.f32 %v468, %v913
          %v915 = vpop.f32.mrf.mxu0
          %v916 = vadd.f32 %v472, %v915
          %917 = vmatprep.mubr.f32.mxu0 0.0
          %918 = vmatmul.mubr.f32.gmra.mxu0 %v310
          %v919 = vpop.f32.mrf.mxu0
          %v920 = vadd.f32 %v468, %v919
          %v921 = vpop.f32.mrf.mxu0
          %v922 = vadd.f32 %v472, %v921
          %923 = vmatprep.mubr.f32.mxu0 0.0
          %924 = vmatmul.mubr.f32.gmra.mxu0 %v311
          %v925 = vpop.f32.mrf.mxu0
          %v926 = vadd.f32 %v468, %v925
          %v927 = vpop.f32.mrf.mxu0
          %v928 = vadd.f32 %v472, %v927
          %929 = vmatprep.mubr.f32.mxu0 0.0
          %930 = vmatmul.mubr.f32.gmra.mxu0 %v312
          %v931 = vpop.f32.mrf.mxu0
          %v932 = vadd.f32 %v468, %v931
          %v933 = vpop.f32.mrf.mxu0
          %v934 = vadd.f32 %v472, %v933
          %935 = vmatprep.mubr.f32.mxu0 0.0
          %936 = vmatmul.mubr.f32.gmra.mxu0 %v313
          %v937 = vpop.f32.mrf.mxu0
          %v938 = vadd.f32 %v468, %v937
          %v939 = vpop.f32.mrf.mxu0
          %v940 = vadd.f32 %v472, %v939
          %941 = vmatprep.mubr.f32.mxu0 0.0
          %942 = vmatmul.mubr.f32.gmra.mxu0 %v314
          %v943 = vpop.f32.mrf.mxu0
          %v944 = vadd.f32 %v468, %v943
          %v945 = vpop.f32.mrf.mxu0
          %v946 = vadd.f32 %v472, %v945
          %947 = vmatprep.mubr.f32.mxu0 0.0
          %948 = vmatmul.mubr.f32.gmra.mxu0 %v315
          %v949 = vpop.f32.mrf.mxu0
          %v950 = vadd.f32 %v468, %v949
          %v951 = vpop.f32.mrf.mxu0
          %v952 = vadd.f32 %v472, %v951
          %953 = vmatprep.mubr.f32.mxu0 0.0
          %954 = vmatmul.mubr.f32.gmra.mxu0 %v316
          %v955 = vpop.f32.mrf.mxu0
          %v956 = vadd.f32 %v468, %v955
          %v957 = vpop.f32.mrf.mxu0
          %v958 = vadd.f32 %v472, %v957
          %959 = vmatprep.mubr.f32.mxu0 0.0
          %960 = vmatmul.mubr.f32.gmra.mxu0 %v317
          %v961 = vpop.f32.mrf.mxu0
          %v962 = vadd.f32 %v468, %v961
          %v963 = vpop.f32.mrf.mxu0
          %v964 = vadd.f32 %v472, %v963
          %965 = vmatprep.mubr.f32.mxu0 0.0
          %966 = vmatmul.mubr.f32.gmra.mxu0 %v318
          %v967 = vpop.f32.mrf.mxu0
          %v968 = vadd.f32 %v468, %v967
          %v969 = vpop.f32.mrf.mxu0
          %v970 = vadd.f32 %v472, %v969
          %971 = vdwg.mxu0
          %972 = vmatprep.subr.mxu0 %v446
          %973 = vmatpush1.msra.mxu0 %v445
          %974 = vmatprep.subr.mxu0 %v438
          %975 = vmatpush1.msra.mxu0 %v437
          %976 = vmatprep.subr.mxu0 %v430
          %977 = vmatpush1.msra.mxu0 %v429
          %978 = vmatprep.subr.mxu0 %v422
          %979 = vmatpush1.msra.mxu0 %v421
          %980 = vmatprep.subr.mxu0 %v414
          %981 = vmatpush1.msra.mxu0 %v413
          %982 = vmatprep.subr.mxu0 %v406
          %983 = vmatpush1.msra.mxu0 %v405
          %984 = vmatprep.subr.mxu0 %v398
          %985 = vmatpush1.msra.mxu0 %v397
          %986 = vmatprep.subr.mxu0 %v390
          %987 = vmatpush1.msra.mxu0 %v389
          %988 = vmatprep.subr.mxu0 %v382
          %989 = vmatpush1.msra.mxu0 %v381
          %990 = vmatprep.subr.mxu0 %v374
          %991 = vmatpush1.msra.mxu0 %v373
          %992 = vmatprep.subr.mxu0 %v366
          %993 = vmatpush1.msra.mxu0 %v365
          %994 = vmatprep.subr.mxu0 %v358
          %995 = vmatpush1.msra.mxu0 %v357
          %996 = vmatprep.subr.mxu0 %v350
          %997 = vmatpush1.msra.mxu0 %v349
          %998 = vmatprep.subr.mxu0 %v342
          %999 = vmatpush1.msra.mxu0 %v341
          %1000 = vmatprep.subr.mxu0 %v334
          %1001 = vmatpush1.msra.mxu0 %v333
          %1002 = vmatprep.subr.mxu0 %v326
          %1003 = vmatpush1.msra.mxu0 %v325
          %1004 = vmatprep.subr.mxu0 0.0
          %1005 = vmatpush2.msra.mxu0 0.0
          %1006 = vmatprep.subr.mxu0 0.0
          %1007 = vmatpush2.msra.mxu0 0.0
          %1008 = vmatprep.subr.mxu0 0.0
          %1009 = vmatpush2.msra.mxu0 0.0
          %1010 = vmatprep.subr.mxu0 0.0
          %1011 = vmatpush2.msra.mxu0 0.0
          %1012 = vmatprep.subr.mxu0 0.0
          %1013 = vmatpush2.msra.mxu0 0.0
          %1014 = vmatprep.subr.mxu0 0.0
          %1015 = vmatpush2.msra.mxu0 0.0
          %1016 = vmatprep.subr.mxu0 0.0
          %1017 = vmatpush2.msra.mxu0 0.0
          %1018 = vmatprep.subr.mxu0 0.0
          %1019 = vmatpush2.msra.mxu0 0.0
          %1020 = vmatprep.subr.mxu0 0.0
          %1021 = vmatpush2.msra.mxu0 0.0
          %1022 = vmatprep.subr.mxu0 0.0
          %1023 = vmatpush2.msra.mxu0 0.0
          %1024 = vmatprep.subr.mxu0 0.0
          %1025 = vmatpush2.msra.mxu0 0.0
          %1026 = vmatprep.subr.mxu0 0.0
          %1027 = vmatpush2.msra.mxu0 0.0
          %1028 = vmatprep.subr.mxu0 0.0
          %1029 = vmatpush2.msra.mxu0 0.0
          %1030 = vmatprep.subr.mxu0 0.0
          %1031 = vmatpush2.msra.mxu0 0.0
          %1032 = vmatprep.subr.mxu0 0.0
          %1033 = vmatpush2.msra.mxu0 0.0
          %1034 = vmatprep.subr.mxu0 0.0
          %1035 = vmatpush2.msra.mxu0 0.0
          %1036 = vmatprep.mubr.f32.mxu0 0.0
          %1037 = vmatmul.mubr.f32.gmra.mxu0 %v303
          %v1038 = vpop.f32.mrf.mxu0
          %v1039 = vadd.f32 %v476, %v1038
          %v1040 = vpop.f32.mrf.mxu0
          %v1041 = vadd.f32 %v480, %v1040
          %1042 = vmatprep.mubr.f32.mxu0 0.0
          %1043 = vmatmul.mubr.f32.gmra.mxu0 %v304
          %v1044 = vpop.f32.mrf.mxu0
          %v1045 = vadd.f32 %v476, %v1044
          %v1046 = vpop.f32.mrf.mxu0
          %v1047 = vadd.f32 %v480, %v1046
          %1048 = vmatprep.mubr.f32.mxu0 0.0
          %1049 = vmatmul.mubr.f32.gmra.mxu0 %v305
          %v1050 = vpop.f32.mrf.mxu0
          %v1051 = vadd.f32 %v476, %v1050
          %v1052 = vpop.f32.mrf.mxu0
          %v1053 = vadd.f32 %v480, %v1052
          %1054 = vmatprep.mubr.f32.mxu0 0.0
          %1055 = vmatmul.mubr.f32.gmra.mxu0 %v306
          %v1056 = vpop.f32.mrf.mxu0
          %v1057 = vadd.f32 %v476, %v1056
          %v1058 = vpop.f32.mrf.mxu0
          %v1059 = vadd.f32 %v480, %v1058
          %1060 = vmatprep.mubr.f32.mxu0 0.0
          %1061 = vmatmul.mubr.f32.gmra.mxu0 %v307
          %v1062 = vpop.f32.mrf.mxu0
          %v1063 = vadd.f32 %v476, %v1062
          %v1064 = vpop.f32.mrf.mxu0
          %v1065 = vadd.f32 %v480, %v1064
          %1066 = vmatprep.mubr.f32.mxu0 0.0
          %1067 = vmatmul.mubr.f32.gmra.mxu0 %v308
          %v1068 = vpop.f32.mrf.mxu0
          %v1069 = vadd.f32 %v476, %v1068
          %v1070 = vpop.f32.mrf.mxu0
          %v1071 = vadd.f32 %v480, %v1070
          %1072 = vmatprep.mubr.f32.mxu0 0.0
          %1073 = vmatmul.mubr.f32.gmra.mxu0 %v309
          %v1074 = vpop.f32.mrf.mxu0
          %v1075 = vadd.f32 %v476, %v1074
          %v1076 = vpop.f32.mrf.mxu0
          %v1077 = vadd.f32 %v480, %v1076
          %1078 = vmatprep.mubr.f32.mxu0 0.0
          %1079 = vmatmul.mubr.f32.gmra.mxu0 %v310
          %v1080 = vpop.f32.mrf.mxu0
          %v1081 = vadd.f32 %v476, %v1080
          %v1082 = vpop.f32.mrf.mxu0
          %v1083 = vadd.f32 %v480, %v1082
          %1084 = vmatprep.mubr.f32.mxu0 0.0
          %1085 = vmatmul.mubr.f32.gmra.mxu0 %v311
          %v1086 = vpop.f32.mrf.mxu0
          %v1087 = vadd.f32 %v476, %v1086
          %v1088 = vpop.f32.mrf.mxu0
          %v1089 = vadd.f32 %v480, %v1088
          %1090 = vmatprep.mubr.f32.mxu0 0.0
          %1091 = vmatmul.mubr.f32.gmra.mxu0 %v312
          %v1092 = vpop.f32.mrf.mxu0
          %v1093 = vadd.f32 %v476, %v1092
          %v1094 = vpop.f32.mrf.mxu0
          %v1095 = vadd.f32 %v480, %v1094
          %1096 = vmatprep.mubr.f32.mxu0 0.0
          %1097 = vmatmul.mubr.f32.gmra.mxu0 %v313
          %v1098 = vpop.f32.mrf.mxu0
          %v1099 = vadd.f32 %v476, %v1098
          %v1100 = vpop.f32.mrf.mxu0
          %v1101 = vadd.f32 %v480, %v1100
          %1102 = vmatprep.mubr.f32.mxu0 0.0
          %1103 = vmatmul.mubr.f32.gmra.mxu0 %v314
          %v1104 = vpop.f32.mrf.mxu0
          %v1105 = vadd.f32 %v476, %v1104
          %v1106 = vpop.f32.mrf.mxu0
          %v1107 = vadd.f32 %v480, %v1106
          %1108 = vmatprep.mubr.f32.mxu0 0.0
          %1109 = vmatmul.mubr.f32.gmra.mxu0 %v315
          %v1110 = vpop.f32.mrf.mxu0
          %v1111 = vadd.f32 %v476, %v1110
          %v1112 = vpop.f32.mrf.mxu0
          %v1113 = vadd.f32 %v480, %v1112
          %1114 = vmatprep.mubr.f32.mxu0 0.0
          %1115 = vmatmul.mubr.f32.gmra.mxu0 %v316
          %v1116 = vpop.f32.mrf.mxu0
          %v1117 = vadd.f32 %v476, %v1116
          %v1118 = vpop.f32.mrf.mxu0
          %v1119 = vadd.f32 %v480, %v1118
          %1120 = vmatprep.mubr.f32.mxu0 0.0
          %1121 = vmatmul.mubr.f32.gmra.mxu0 %v317
          %v1122 = vpop.f32.mrf.mxu0
          %v1123 = vadd.f32 %v476, %v1122
          %v1124 = vpop.f32.mrf.mxu0
          %v1125 = vadd.f32 %v480, %v1124
          %1126 = vmatprep.mubr.f32.mxu0 0.0
          %1127 = vmatmul.mubr.f32.gmra.mxu0 %v318
          %v1128 = vpop.f32.mrf.mxu0
          %v1129 = vadd.f32 %v476, %v1128
          %v1130 = vpop.f32.mrf.mxu0
          %v1131 = vadd.f32 %v480, %v1130
          %1132 = vdwg.mxu0
          %v1133 = vld [vmem:[#allocation10] sm:$0xff]
          %v1134 = vld [vmem:[#allocation10 + $0x8] sm:$0xff]
          %v1135 = vld [vmem:[#allocation10 + $0x10] sm:$0xff]
          %v1136 = vld [vmem:[#allocation10 + $0x18] sm:$0xff]
          %v1137 = vld [vmem:[#allocation10 + $0x20] sm:$0xff]
          %v1138 = vld [vmem:[#allocation10 + $0x28] sm:$0xff]
          %v1139 = vld [vmem:[#allocation10 + $0x30] sm:$0xff]
          %v1140 = vld [vmem:[#allocation10 + $0x38] sm:$0xff]
          %v1141 = vld [vmem:[#allocation10 + $0x40] sm:$0xff]
          %v1142 = vld [vmem:[#allocation10 + $0x48] sm:$0xff]
          %v1143 = vld [vmem:[#allocation10 + $0x50] sm:$0xff]
          %v1144 = vld [vmem:[#allocation10 + $0x58] sm:$0xff]
          %v1145 = vld [vmem:[#allocation10 + $0x60] sm:$0xff]
          %v1146 = vld [vmem:[#allocation10 + $0x68] sm:$0xff]
          %v1147 = vld [vmem:[#allocation10 + $0x70] sm:$0xff]
          %v1148 = vld [vmem:[#allocation10 + $0x78] sm:$0xff]
          %v1149 = vld [vmem:[#allocation10 + $0x80] sm:$0xff]
          %v1150 = vld [vmem:[#allocation10 + $0x88] sm:$0xff]
          %v1151 = vld [vmem:[#allocation10 + $0x90] sm:$0xff]
          %v1152 = vld [vmem:[#allocation10 + $0x98] sm:$0xff]
          %v1153 = vld [vmem:[#allocation10 + $0xa0] sm:$0xff]
          %v1154 = vld [vmem:[#allocation10 + $0xa8] sm:$0xff]
          %v1155 = vld [vmem:[#allocation10 + $0xb0] sm:$0xff]
          %v1156 = vld [vmem:[#allocation10 + $0xb8] sm:$0xff]
          %v1157 = vld [vmem:[#allocation10 + $0xc0] sm:$0xff]
          %v1158 = vld [vmem:[#allocation10 + $0xc8] sm:$0xff]
          %v1159 = vld [vmem:[#allocation10 + $0xd0] sm:$0xff]
          %v1160 = vld [vmem:[#allocation10 + $0xd8] sm:$0xff]
          %v1161 = vld [vmem:[#allocation10 + $0xe0] sm:$0xff]
          %v1162 = vld [vmem:[#allocation10 + $0xe8] sm:$0xff]
          %v1163 = vld [vmem:[#allocation10 + $0xf0] sm:$0xff]
          %v1164 = vld [vmem:[#allocation10 + $0xf8] sm:$0xff]
          %v1165 = vmul.f32 %v556, %v1133
          %v1166 = vmul.f32 %v562, %v1135
          %v1167 = vmul.f32 %v568, %v1137
          %v1168 = vmul.f32 %v574, %v1139
          %v1169 = vmul.f32 %v580, %v1141
          %v1170 = vmul.f32 %v586, %v1143
          %v1171 = vmul.f32 %v592, %v1145
          %v1172 = vmul.f32 %v598, %v1147
          %v1173 = vmul.f32 %v604, %v1149
          %v1174 = vmul.f32 %v610, %v1151
          %v1175 = vmul.f32 %v616, %v1153
          %v1176 = vmul.f32 %v622, %v1155
          %v1177 = vmul.f32 %v628, %v1157
          %v1178 = vmul.f32 %v634, %v1159
          %v1179 = vmul.f32 %v640, %v1161
          %v1180 = vmul.f32 %v646, %v1163
          %1181 = vrot.lane.b32.xlu0 %v556, 64
          %v1182 = vpop.permute.xlu0 %1181
          %1183 = vrot.lane.b32.xlu0 %v562, 64
          %v1184 = vpop.permute.xlu0 %1183
          %1185 = vrot.lane.b32.xlu0 %v568, 64
          %v1186 = vpop.permute.xlu0 %1185
          %1187 = vrot.lane.b32.xlu0 %v574, 64
          %v1188 = vpop.permute.xlu0 %1187
          %1189 = vrot.lane.b32.xlu0 %v580, 64
          %v1190 = vpop.permute.xlu0 %1189
          %1191 = vrot.lane.b32.xlu0 %v586, 64
          %v1192 = vpop.permute.xlu0 %1191
          %1193 = vrot.lane.b32.xlu0 %v592, 64
          %v1194 = vpop.permute.xlu0 %1193
          %1195 = vrot.lane.b32.xlu0 %v598, 64
          %v1196 = vpop.permute.xlu0 %1195
          %1197 = vrot.lane.b32.xlu0 %v604, 64
          %v1198 = vpop.permute.xlu0 %1197
          %1199 = vrot.lane.b32.xlu0 %v610, 64
          %v1200 = vpop.permute.xlu0 %1199
          %1201 = vrot.lane.b32.xlu0 %v616, 64
          %v1202 = vpop.permute.xlu0 %1201
          %1203 = vrot.lane.b32.xlu0 %v622, 64
          %v1204 = vpop.permute.xlu0 %1203
          %1205 = vrot.lane.b32.xlu0 %v628, 64
          %v1206 = vpop.permute.xlu0 %1205
          %1207 = vrot.lane.b32.xlu0 %v634, 64
          %v1208 = vpop.permute.xlu0 %1207
          %1209 = vrot.lane.b32.xlu0 %v640, 64
          %v1210 = vpop.permute.xlu0 %1209
          %1211 = vrot.lane.b32.xlu0 %v646, 64
          %v1212 = vpop.permute.xlu0 %1211
          %v1213 = vmul.f32 %v1182, %v1134
          %v1214 = vmul.f32 %v1184, %v1136
          %v1215 = vmul.f32 %v1186, %v1138
          %v1216 = vmul.f32 %v1188, %v1140
          %v1217 = vmul.f32 %v1190, %v1142
          %v1218 = vmul.f32 %v1192, %v1144
          %v1219 = vmul.f32 %v1194, %v1146
          %v1220 = vmul.f32 %v1196, %v1148
          %v1221 = vmul.f32 %v1198, %v1150
          %v1222 = vmul.f32 %v1200, %v1152
          %v1223 = vmul.f32 %v1202, %v1154
          %v1224 = vmul.f32 %v1204, %v1156
          %v1225 = vmul.f32 %v1206, %v1158
          %v1226 = vmul.f32 %v1208, %v1160
          %v1227 = vmul.f32 %v1210, %v1162
          %v1228 = vmul.f32 %v1212, %v1164
          %v1229 = vadd.f32 %v1165, %v1213
          %v1230 = vadd.f32 %v1166, %v1214
          %v1231 = vadd.f32 %v1167, %v1215
          %v1232 = vadd.f32 %v1168, %v1216
          %v1233 = vadd.f32 %v1169, %v1217
          %v1234 = vadd.f32 %v1170, %v1218
          %v1235 = vadd.f32 %v1171, %v1219
          %v1236 = vadd.f32 %v1172, %v1220
          %v1237 = vadd.f32 %v1173, %v1221
          %v1238 = vadd.f32 %v1174, %v1222
          %v1239 = vadd.f32 %v1175, %v1223
          %v1240 = vadd.f32 %v1176, %v1224
          %v1241 = vadd.f32 %v1177, %v1225
          %v1242 = vadd.f32 %v1178, %v1226
          %v1243 = vadd.f32 %v1179, %v1227
          %v1244 = vadd.f32 %v1180, %v1228
          %v1245 = vmul.f32 %v558, %v1133
          %v1246 = vmul.f32 %v564, %v1135
          %v1247 = vmul.f32 %v570, %v1137
          %v1248 = vmul.f32 %v576, %v1139
          %v1249 = vmul.f32 %v582, %v1141
          %v1250 = vmul.f32 %v588, %v1143
          %v1251 = vmul.f32 %v594, %v1145
          %v1252 = vmul.f32 %v600, %v1147
          %v1253 = vmul.f32 %v606, %v1149
          %v1254 = vmul.f32 %v612, %v1151
          %v1255 = vmul.f32 %v618, %v1153
          %v1256 = vmul.f32 %v624, %v1155
          %v1257 = vmul.f32 %v630, %v1157
          %v1258 = vmul.f32 %v636, %v1159
          %v1259 = vmul.f32 %v642, %v1161
          %v1260 = vmul.f32 %v648, %v1163
          %1261 = vrot.lane.b32.xlu0 %v558, 64
          %v1262 = vpop.permute.xlu0 %1261
          %1263 = vrot.lane.b32.xlu0 %v564, 64
          %v1264 = vpop.permute.xlu0 %1263
          %1265 = vrot.lane.b32.xlu0 %v570, 64
          %v1266 = vpop.permute.xlu0 %1265
          %1267 = vrot.lane.b32.xlu0 %v576, 64
          %v1268 = vpop.permute.xlu0 %1267
          %1269 = vrot.lane.b32.xlu0 %v582, 64
          %v1270 = vpop.permute.xlu0 %1269
          %1271 = vrot.lane.b32.xlu0 %v588, 64
          %v1272 = vpop.permute.xlu0 %1271
          %1273 = vrot.lane.b32.xlu0 %v594, 64
          %v1274 = vpop.permute.xlu0 %1273
          %1275 = vrot.lane.b32.xlu0 %v600, 64
          %v1276 = vpop.permute.xlu0 %1275
          %1277 = vrot.lane.b32.xlu0 %v606, 64
          %v1278 = vpop.permute.xlu0 %1277
          %1279 = vrot.lane.b32.xlu0 %v612, 64
          %v1280 = vpop.permute.xlu0 %1279
          %1281 = vrot.lane.b32.xlu0 %v618, 64
          %v1282 = vpop.permute.xlu0 %1281
          %1283 = vrot.lane.b32.xlu0 %v624, 64
          %v1284 = vpop.permute.xlu0 %1283
          %1285 = vrot.lane.b32.xlu0 %v630, 64
          %v1286 = vpop.permute.xlu0 %1285
          %1287 = vrot.lane.b32.xlu0 %v636, 64
          %v1288 = vpop.permute.xlu0 %1287
          %1289 = vrot.lane.b32.xlu0 %v642, 64
          %v1290 = vpop.permute.xlu0 %1289
          %1291 = vrot.lane.b32.xlu0 %v648, 64
          %v1292 = vpop.permute.xlu0 %1291
          %v1293 = vmul.f32 %v1262, %v1134
          %v1294 = vmul.f32 %v1264, %v1136
          %v1295 = vmul.f32 %v1266, %v1138
          %v1296 = vmul.f32 %v1268, %v1140
          %v1297 = vmul.f32 %v1270, %v1142
          %v1298 = vmul.f32 %v1272, %v1144
          %v1299 = vmul.f32 %v1274, %v1146
          %v1300 = vmul.f32 %v1276, %v1148
          %v1301 = vmul.f32 %v1278, %v1150
          %v1302 = vmul.f32 %v1280, %v1152
          %v1303 = vmul.f32 %v1282, %v1154
          %v1304 = vmul.f32 %v1284, %v1156
          %v1305 = vmul.f32 %v1286, %v1158
          %v1306 = vmul.f32 %v1288, %v1160
          %v1307 = vmul.f32 %v1290, %v1162
          %v1308 = vmul.f32 %v1292, %v1164
          %v1309 = vadd.f32 %v1245, %v1293
          %v1310 = vadd.f32 %v1246, %v1294
          %v1311 = vadd.f32 %v1247, %v1295
          %v1312 = vadd.f32 %v1248, %v1296
          %v1313 = vadd.f32 %v1249, %v1297
          %v1314 = vadd.f32 %v1250, %v1298
          %v1315 = vadd.f32 %v1251, %v1299
          %v1316 = vadd.f32 %v1252, %v1300
          %v1317 = vadd.f32 %v1253, %v1301
          %v1318 = vadd.f32 %v1254, %v1302
          %v1319 = vadd.f32 %v1255, %v1303
          %v1320 = vadd.f32 %v1256, %v1304
          %v1321 = vadd.f32 %v1257, %v1305
          %v1322 = vadd.f32 %v1258, %v1306
          %v1323 = vadd.f32 %v1259, %v1307
          %v1324 = vadd.f32 %v1260, %v1308
          %1325 = vst [vmem:[#allocation2] sm:$0xff] %v1229
          %1326 = vst [vmem:[#allocation2 + $0x8] sm:$0xff] %v1230
          %1327 = vst [vmem:[#allocation2 + $0x10] sm:$0xff] %v1231
          %1328 = vst [vmem:[#allocation2 + $0x18] sm:$0xff] %v1232
          %1329 = vst [vmem:[#allocation2 + $0x20] sm:$0xff] %v1233
          %1330 = vst [vmem:[#allocation2 + $0x28] sm:$0xff] %v1234
          %1331 = vst [vmem:[#allocation2 + $0x30] sm:$0xff] %v1235
          %1332 = vst [vmem:[#allocation2 + $0x38] sm:$0xff] %v1236
          %1333 = vst [vmem:[#allocation2 + $0x40] sm:$0xff] %v1237
          %1334 = vst [vmem:[#allocation2 + $0x48] sm:$0xff] %v1238
          %1335 = vst [vmem:[#allocation2 + $0x50] sm:$0xff] %v1239
          %1336 = vst [vmem:[#allocation2 + $0x58] sm:$0xff] %v1240
          %1337 = vst [vmem:[#allocation2 + $0x60] sm:$0xff] %v1241
          %1338 = vst [vmem:[#allocation2 + $0x68] sm:$0xff] %v1242
          %1339 = vst [vmem:[#allocation2 + $0x70] sm:$0xff] %v1243
          %1340 = vst [vmem:[#allocation2 + $0x78] sm:$0xff] %v1244
          %1341 = vst [vmem:[#allocation3] sm:$0xff] %v1309
          %1342 = vst [vmem:[#allocation3 + $0x8] sm:$0xff] %v1310
          %1343 = vst [vmem:[#allocation3 + $0x10] sm:$0xff] %v1311
          %1344 = vst [vmem:[#allocation3 + $0x18] sm:$0xff] %v1312
          %1345 = vst [vmem:[#allocation3 + $0x20] sm:$0xff] %v1313
          %1346 = vst [vmem:[#allocation3 + $0x28] sm:$0xff] %v1314
          %1347 = vst [vmem:[#allocation3 + $0x30] sm:$0xff] %v1315
          %1348 = vst [vmem:[#allocation3 + $0x38] sm:$0xff] %v1316
          %1349 = vst [vmem:[#allocation3 + $0x40] sm:$0xff] %v1317
          %1350 = vst [vmem:[#allocation3 + $0x48] sm:$0xff] %v1318
          %1351 = vst [vmem:[#allocation3 + $0x50] sm:$0xff] %v1319
          %1352 = vst [vmem:[#allocation3 + $0x58] sm:$0xff] %v1320
          %1353 = vst [vmem:[#allocation3 + $0x60] sm:$0xff] %v1321
          %1354 = vst [vmem:[#allocation3 + $0x68] sm:$0xff] %v1322
          %1355 = vst [vmem:[#allocation3 + $0x70] sm:$0xff] %v1323
          %1356 = vst [vmem:[#allocation3 + $0x78] sm:$0xff] %v1324
          %v1357 = vmul.f32 %v717, %v1133
          %v1358 = vmul.f32 %v723, %v1135
          %v1359 = vmul.f32 %v729, %v1137
          %v1360 = vmul.f32 %v735, %v1139
          %v1361 = vmul.f32 %v741, %v1141
          %v1362 = vmul.f32 %v747, %v1143
          %v1363 = vmul.f32 %v753, %v1145
          %v1364 = vmul.f32 %v759, %v1147
          %v1365 = vmul.f32 %v765, %v1149
          %v1366 = vmul.f32 %v771, %v1151
          %v1367 = vmul.f32 %v777, %v1153
          %v1368 = vmul.f32 %v783, %v1155
          %v1369 = vmul.f32 %v789, %v1157
          %v1370 = vmul.f32 %v795, %v1159
          %v1371 = vmul.f32 %v801, %v1161
          %v1372 = vmul.f32 %v807, %v1163
          %1373 = vrot.lane.b32.xlu0 %v717, 64
          %v1374 = vpop.permute.xlu0 %1373
          %1375 = vrot.lane.b32.xlu0 %v723, 64
          %v1376 = vpop.permute.xlu0 %1375
          %1377 = vrot.lane.b32.xlu0 %v729, 64
          %v1378 = vpop.permute.xlu0 %1377
          %1379 = vrot.lane.b32.xlu0 %v735, 64
          %v1380 = vpop.permute.xlu0 %1379
          %1381 = vrot.lane.b32.xlu0 %v741, 64
          %v1382 = vpop.permute.xlu0 %1381
          %1383 = vrot.lane.b32.xlu0 %v747, 64
          %v1384 = vpop.permute.xlu0 %1383
          %1385 = vrot.lane.b32.xlu0 %v753, 64
          %v1386 = vpop.permute.xlu0 %1385
          %1387 = vrot.lane.b32.xlu0 %v759, 64
          %v1388 = vpop.permute.xlu0 %1387
          %1389 = vrot.lane.b32.xlu0 %v765, 64
          %v1390 = vpop.permute.xlu0 %1389
          %1391 = vrot.lane.b32.xlu0 %v771, 64
          %v1392 = vpop.permute.xlu0 %1391
          %1393 = vrot.lane.b32.xlu0 %v777, 64
          %v1394 = vpop.permute.xlu0 %1393
          %1395 = vrot.lane.b32.xlu0 %v783, 64
          %v1396 = vpop.permute.xlu0 %1395
          %1397 = vrot.lane.b32.xlu0 %v789, 64
          %v1398 = vpop.permute.xlu0 %1397
          %1399 = vrot.lane.b32.xlu0 %v795, 64
          %v1400 = vpop.permute.xlu0 %1399
          %1401 = vrot.lane.b32.xlu0 %v801, 64
          %v1402 = vpop.permute.xlu0 %1401
          %1403 = vrot.lane.b32.xlu0 %v807, 64
          %v1404 = vpop.permute.xlu0 %1403
          %v1405 = vmul.f32 %v1374, %v1134
          %v1406 = vmul.f32 %v1376, %v1136
          %v1407 = vmul.f32 %v1378, %v1138
          %v1408 = vmul.f32 %v1380, %v1140
          %v1409 = vmul.f32 %v1382, %v1142
          %v1410 = vmul.f32 %v1384, %v1144
          %v1411 = vmul.f32 %v1386, %v1146
          %v1412 = vmul.f32 %v1388, %v1148
          %v1413 = vmul.f32 %v1390, %v1150
          %v1414 = vmul.f32 %v1392, %v1152
          %v1415 = vmul.f32 %v1394, %v1154
          %v1416 = vmul.f32 %v1396, %v1156
          %v1417 = vmul.f32 %v1398, %v1158
          %v1418 = vmul.f32 %v1400, %v1160
          %v1419 = vmul.f32 %v1402, %v1162
          %v1420 = vmul.f32 %v1404, %v1164
          %v1421 = vadd.f32 %v1357, %v1405
          %v1422 = vadd.f32 %v1358, %v1406
          %v1423 = vadd.f32 %v1359, %v1407
          %v1424 = vadd.f32 %v1360, %v1408
          %v1425 = vadd.f32 %v1361, %v1409
          %v1426 = vadd.f32 %v1362, %v1410
          %v1427 = vadd.f32 %v1363, %v1411
          %v1428 = vadd.f32 %v1364, %v1412
          %v1429 = vadd.f32 %v1365, %v1413
          %v1430 = vadd.f32 %v1366, %v1414
          %v1431 = vadd.f32 %v1367, %v1415
          %v1432 = vadd.f32 %v1368, %v1416
          %v1433 = vadd.f32 %v1369, %v1417
          %v1434 = vadd.f32 %v1370, %v1418
          %v1435 = vadd.f32 %v1371, %v1419
          %v1436 = vadd.f32 %v1372, %v1420
          %v1437 = vmul.f32 %v719, %v1133
          %v1438 = vmul.f32 %v725, %v1135
          %v1439 = vmul.f32 %v731, %v1137
          %v1440 = vmul.f32 %v737, %v1139
          %v1441 = vmul.f32 %v743, %v1141
          %v1442 = vmul.f32 %v749, %v1143
          %v1443 = vmul.f32 %v755, %v1145
          %v1444 = vmul.f32 %v761, %v1147
          %v1445 = vmul.f32 %v767, %v1149
          %v1446 = vmul.f32 %v773, %v1151
          %v1447 = vmul.f32 %v779, %v1153
          %v1448 = vmul.f32 %v785, %v1155
          %v1449 = vmul.f32 %v791, %v1157
          %v1450 = vmul.f32 %v797, %v1159
          %v1451 = vmul.f32 %v803, %v1161
          %v1452 = vmul.f32 %v809, %v1163
          %1453 = vrot.lane.b32.xlu0 %v719, 64
          %v1454 = vpop.permute.xlu0 %1453
          %1455 = vrot.lane.b32.xlu0 %v725, 64
          %v1456 = vpop.permute.xlu0 %1455
          %1457 = vrot.lane.b32.xlu0 %v731, 64
          %v1458 = vpop.permute.xlu0 %1457
          %1459 = vrot.lane.b32.xlu0 %v737, 64
          %v1460 = vpop.permute.xlu0 %1459
          %1461 = vrot.lane.b32.xlu0 %v743, 64
          %v1462 = vpop.permute.xlu0 %1461
          %1463 = vrot.lane.b32.xlu0 %v749, 64
          %v1464 = vpop.permute.xlu0 %1463
          %1465 = vrot.lane.b32.xlu0 %v755, 64
          %v1466 = vpop.permute.xlu0 %1465
          %1467 = vrot.lane.b32.xlu0 %v761, 64
          %v1468 = vpop.permute.xlu0 %1467
          %1469 = vrot.lane.b32.xlu0 %v767, 64
          %v1470 = vpop.permute.xlu0 %1469
          %1471 = vrot.lane.b32.xlu0 %v773, 64
          %v1472 = vpop.permute.xlu0 %1471
          %1473 = vrot.lane.b32.xlu0 %v779, 64
          %v1474 = vpop.permute.xlu0 %1473
          %1475 = vrot.lane.b32.xlu0 %v785, 64
          %v1476 = vpop.permute.xlu0 %1475
          %1477 = vrot.lane.b32.xlu0 %v791, 64
          %v1478 = vpop.permute.xlu0 %1477
          %1479 = vrot.lane.b32.xlu0 %v797, 64
          %v1480 = vpop.permute.xlu0 %1479
          %1481 = vrot.lane.b32.xlu0 %v803, 64
          %v1482 = vpop.permute.xlu0 %1481
          %1483 = vrot.lane.b32.xlu0 %v809, 64
          %v1484 = vpop.permute.xlu0 %1483
          %v1485 = vmul.f32 %v1454, %v1134
          %v1486 = vmul.f32 %v1456, %v1136
          %v1487 = vmul.f32 %v1458, %v1138
          %v1488 = vmul.f32 %v1460, %v1140
          %v1489 = vmul.f32 %v1462, %v1142
          %v1490 = vmul.f32 %v1464, %v1144
          %v1491 = vmul.f32 %v1466, %v1146
          %v1492 = vmul.f32 %v1468, %v1148
          %v1493 = vmul.f32 %v1470, %v1150
          %v1494 = vmul.f32 %v1472, %v1152
          %v1495 = vmul.f32 %v1474, %v1154
          %v1496 = vmul.f32 %v1476, %v1156
          %v1497 = vmul.f32 %v1478, %v1158
          %v1498 = vmul.f32 %v1480, %v1160
          %v1499 = vmul.f32 %v1482, %v1162
          %v1500 = vmul.f32 %v1484, %v1164
          %v1501 = vadd.f32 %v1437, %v1485
          %v1502 = vadd.f32 %v1438, %v1486
          %v1503 = vadd.f32 %v1439, %v1487
          %v1504 = vadd.f32 %v1440, %v1488
          %v1505 = vadd.f32 %v1441, %v1489
          %v1506 = vadd.f32 %v1442, %v1490
          %v1507 = vadd.f32 %v1443, %v1491
          %v1508 = vadd.f32 %v1444, %v1492
          %v1509 = vadd.f32 %v1445, %v1493
          %v1510 = vadd.f32 %v1446, %v1494
          %v1511 = vadd.f32 %v1447, %v1495
          %v1512 = vadd.f32 %v1448, %v1496
          %v1513 = vadd.f32 %v1449, %v1497
          %v1514 = vadd.f32 %v1450, %v1498
          %v1515 = vadd.f32 %v1451, %v1499
          %v1516 = vadd.f32 %v1452, %v1500
          %s1517 = scalar_lea.vmem [#allocation2], 128
          %1518 = vst [vmem:[%s1517] sm:$0xff] %v1421
          %1519 = vst [vmem:[%s1517 + $0x8] sm:$0xff] %v1422
          %1520 = vst [vmem:[%s1517 + $0x10] sm:$0xff] %v1423
          %1521 = vst [vmem:[%s1517 + $0x18] sm:$0xff] %v1424
          %1522 = vst [vmem:[%s1517 + $0x20] sm:$0xff] %v1425
          %1523 = vst [vmem:[%s1517 + $0x28] sm:$0xff] %v1426
          %1524 = vst [vmem:[%s1517 + $0x30] sm:$0xff] %v1427
          %1525 = vst [vmem:[%s1517 + $0x38] sm:$0xff] %v1428
          %1526 = vst [vmem:[%s1517 + $0x40] sm:$0xff] %v1429
          %1527 = vst [vmem:[%s1517 + $0x48] sm:$0xff] %v1430
          %1528 = vst [vmem:[%s1517 + $0x50] sm:$0xff] %v1431
          %1529 = vst [vmem:[%s1517 + $0x58] sm:$0xff] %v1432
          %1530 = vst [vmem:[%s1517 + $0x60] sm:$0xff] %v1433
          %1531 = vst [vmem:[%s1517 + $0x68] sm:$0xff] %v1434
          %1532 = vst [vmem:[%s1517 + $0x70] sm:$0xff] %v1435
          %1533 = vst [vmem:[%s1517 + $0x78] sm:$0xff] %v1436
          %s1534 = scalar_lea.vmem [#allocation3], 128
          %1535 = vst [vmem:[%s1534] sm:$0xff] %v1501
          %1536 = vst [vmem:[%s1534 + $0x8] sm:$0xff] %v1502
          %1537 = vst [vmem:[%s1534 + $0x10] sm:$0xff] %v1503
          %1538 = vst [vmem:[%s1534 + $0x18] sm:$0xff] %v1504
          %1539 = vst [vmem:[%s1534 + $0x20] sm:$0xff] %v1505
          %1540 = vst [vmem:[%s1534 + $0x28] sm:$0xff] %v1506
          %1541 = vst [vmem:[%s1534 + $0x30] sm:$0xff] %v1507
          %1542 = vst [vmem:[%s1534 + $0x38] sm:$0xff] %v1508
          %1543 = vst [vmem:[%s1534 + $0x40] sm:$0xff] %v1509
          %1544 = vst [vmem:[%s1534 + $0x48] sm:$0xff] %v1510
          %1545 = vst [vmem:[%s1534 + $0x50] sm:$0xff] %v1511
          %1546 = vst [vmem:[%s1534 + $0x58] sm:$0xff] %v1512
          %1547 = vst [vmem:[%s1534 + $0x60] sm:$0xff] %v1513
          %1548 = vst [vmem:[%s1534 + $0x68] sm:$0xff] %v1514
          %1549 = vst [vmem:[%s1534 + $0x70] sm:$0xff] %v1515
          %1550 = vst [vmem:[%s1534 + $0x78] sm:$0xff] %v1516
          %v1551 = vmul.f32 %v878, %v1133
          %v1552 = vmul.f32 %v884, %v1135
          %v1553 = vmul.f32 %v890, %v1137
          %v1554 = vmul.f32 %v896, %v1139
          %v1555 = vmul.f32 %v902, %v1141
          %v1556 = vmul.f32 %v908, %v1143
          %v1557 = vmul.f32 %v914, %v1145
          %v1558 = vmul.f32 %v920, %v1147
          %v1559 = vmul.f32 %v926, %v1149
          %v1560 = vmul.f32 %v932, %v1151
          %v1561 = vmul.f32 %v938, %v1153
          %v1562 = vmul.f32 %v944, %v1155
          %v1563 = vmul.f32 %v950, %v1157
          %v1564 = vmul.f32 %v956, %v1159
          %v1565 = vmul.f32 %v962, %v1161
          %v1566 = vmul.f32 %v968, %v1163
          %1567 = vrot.lane.b32.xlu0 %v878, 64
          %v1568 = vpop.permute.xlu0 %1567
          %1569 = vrot.lane.b32.xlu0 %v884, 64
          %v1570 = vpop.permute.xlu0 %1569
          %1571 = vrot.lane.b32.xlu0 %v890, 64
          %v1572 = vpop.permute.xlu0 %1571
          %1573 = vrot.lane.b32.xlu0 %v896, 64
          %v1574 = vpop.permute.xlu0 %1573
          %1575 = vrot.lane.b32.xlu0 %v902, 64
          %v1576 = vpop.permute.xlu0 %1575
          %1577 = vrot.lane.b32.xlu0 %v908, 64
          %v1578 = vpop.permute.xlu0 %1577
          %1579 = vrot.lane.b32.xlu0 %v914, 64
          %v1580 = vpop.permute.xlu0 %1579
          %1581 = vrot.lane.b32.xlu0 %v920, 64
          %v1582 = vpop.permute.xlu0 %1581
          %1583 = vrot.lane.b32.xlu0 %v926, 64
          %v1584 = vpop.permute.xlu0 %1583
          %1585 = vrot.lane.b32.xlu0 %v932, 64
          %v1586 = vpop.permute.xlu0 %1585
          %1587 = vrot.lane.b32.xlu0 %v938, 64
          %v1588 = vpop.permute.xlu0 %1587
          %1589 = vrot.lane.b32.xlu0 %v944, 64
          %v1590 = vpop.permute.xlu0 %1589
          %1591 = vrot.lane.b32.xlu0 %v950, 64
          %v1592 = vpop.permute.xlu0 %1591
          %1593 = vrot.lane.b32.xlu0 %v956, 64
          %v1594 = vpop.permute.xlu0 %1593
          %1595 = vrot.lane.b32.xlu0 %v962, 64
          %v1596 = vpop.permute.xlu0 %1595
          %1597 = vrot.lane.b32.xlu0 %v968, 64
          %v1598 = vpop.permute.xlu0 %1597
          %v1599 = vmul.f32 %v1568, %v1134
          %v1600 = vmul.f32 %v1570, %v1136
          %v1601 = vmul.f32 %v1572, %v1138
          %v1602 = vmul.f32 %v1574, %v1140
          %v1603 = vmul.f32 %v1576, %v1142
          %v1604 = vmul.f32 %v1578, %v1144
          %v1605 = vmul.f32 %v1580, %v1146
          %v1606 = vmul.f32 %v1582, %v1148
          %v1607 = vmul.f32 %v1584, %v1150
          %v1608 = vmul.f32 %v1586, %v1152
          %v1609 = vmul.f32 %v1588, %v1154
          %v1610 = vmul.f32 %v1590, %v1156
          %v1611 = vmul.f32 %v1592, %v1158
          %v1612 = vmul.f32 %v1594, %v1160
          %v1613 = vmul.f32 %v1596, %v1162
          %v1614 = vmul.f32 %v1598, %v1164
          %v1615 = vadd.f32 %v1551, %v1599
          %v1616 = vadd.f32 %v1552, %v1600
          %v1617 = vadd.f32 %v1553, %v1601
          %v1618 = vadd.f32 %v1554, %v1602
          %v1619 = vadd.f32 %v1555, %v1603
          %v1620 = vadd.f32 %v1556, %v1604
          %v1621 = vadd.f32 %v1557, %v1605
          %v1622 = vadd.f32 %v1558, %v1606
          %v1623 = vadd.f32 %v1559, %v1607
          %v1624 = vadd.f32 %v1560, %v1608
          %v1625 = vadd.f32 %v1561, %v1609
          %v1626 = vadd.f32 %v1562, %v1610
          %v1627 = vadd.f32 %v1563, %v1611
          %v1628 = vadd.f32 %v1564, %v1612
          %v1629 = vadd.f32 %v1565, %v1613
          %v1630 = vadd.f32 %v1566, %v1614
          %v1631 = vmul.f32 %v880, %v1133
          %v1632 = vmul.f32 %v886, %v1135
          %v1633 = vmul.f32 %v892, %v1137
          %v1634 = vmul.f32 %v898, %v1139
          %v1635 = vmul.f32 %v904, %v1141
          %v1636 = vmul.f32 %v910, %v1143
          %v1637 = vmul.f32 %v916, %v1145
          %v1638 = vmul.f32 %v922, %v1147
          %v1639 = vmul.f32 %v928, %v1149
          %v1640 = vmul.f32 %v934, %v1151
          %v1641 = vmul.f32 %v940, %v1153
          %v1642 = vmul.f32 %v946, %v1155
          %v1643 = vmul.f32 %v952, %v1157
          %v1644 = vmul.f32 %v958, %v1159
          %v1645 = vmul.f32 %v964, %v1161
          %v1646 = vmul.f32 %v970, %v1163
          %1647 = vrot.lane.b32.xlu0 %v880, 64
          %v1648 = vpop.permute.xlu0 %1647
          %1649 = vrot.lane.b32.xlu0 %v886, 64
          %v1650 = vpop.permute.xlu0 %1649
          %1651 = vrot.lane.b32.xlu0 %v892, 64
          %v1652 = vpop.permute.xlu0 %1651
          %1653 = vrot.lane.b32.xlu0 %v898, 64
          %v1654 = vpop.permute.xlu0 %1653
          %1655 = vrot.lane.b32.xlu0 %v904, 64
          %v1656 = vpop.permute.xlu0 %1655
          %1657 = vrot.lane.b32.xlu0 %v910, 64
          %v1658 = vpop.permute.xlu0 %1657
          %1659 = vrot.lane.b32.xlu0 %v916, 64
          %v1660 = vpop.permute.xlu0 %1659
          %1661 = vrot.lane.b32.xlu0 %v922, 64
          %v1662 = vpop.permute.xlu0 %1661
          %1663 = vrot.lane.b32.xlu0 %v928, 64
          %v1664 = vpop.permute.xlu0 %1663
          %1665 = vrot.lane.b32.xlu0 %v934, 64
          %v1666 = vpop.permute.xlu0 %1665
          %1667 = vrot.lane.b32.xlu0 %v940, 64
          %v1668 = vpop.permute.xlu0 %1667
          %1669 = vrot.lane.b32.xlu0 %v946, 64
          %v1670 = vpop.permute.xlu0 %1669
          %1671 = vrot.lane.b32.xlu0 %v952, 64
          %v1672 = vpop.permute.xlu0 %1671
          %1673 = vrot.lane.b32.xlu0 %v958, 64
          %v1674 = vpop.permute.xlu0 %1673
          %1675 = vrot.lane.b32.xlu0 %v964, 64
          %v1676 = vpop.permute.xlu0 %1675
          %1677 = vrot.lane.b32.xlu0 %v970, 64
          %v1678 = vpop.permute.xlu0 %1677
          %v1679 = vmul.f32 %v1648, %v1134
          %v1680 = vmul.f32 %v1650, %v1136
          %v1681 = vmul.f32 %v1652, %v1138
          %v1682 = vmul.f32 %v1654, %v1140
          %v1683 = vmul.f32 %v1656, %v1142
          %v1684 = vmul.f32 %v1658, %v1144
          %v1685 = vmul.f32 %v1660, %v1146
          %v1686 = vmul.f32 %v1662, %v1148
          %v1687 = vmul.f32 %v1664, %v1150
          %v1688 = vmul.f32 %v1666, %v1152
          %v1689 = vmul.f32 %v1668, %v1154
          %v1690 = vmul.f32 %v1670, %v1156
          %v1691 = vmul.f32 %v1672, %v1158
          %v1692 = vmul.f32 %v1674, %v1160
          %v1693 = vmul.f32 %v1676, %v1162
          %v1694 = vmul.f32 %v1678, %v1164
          %v1695 = vadd.f32 %v1631, %v1679
          %v1696 = vadd.f32 %v1632, %v1680
          %v1697 = vadd.f32 %v1633, %v1681
          %v1698 = vadd.f32 %v1634, %v1682
          %v1699 = vadd.f32 %v1635, %v1683
          %v1700 = vadd.f32 %v1636, %v1684
          %v1701 = vadd.f32 %v1637, %v1685
          %v1702 = vadd.f32 %v1638, %v1686
          %v1703 = vadd.f32 %v1639, %v1687
          %v1704 = vadd.f32 %v1640, %v1688
          %v1705 = vadd.f32 %v1641, %v1689
          %v1706 = vadd.f32 %v1642, %v1690
          %v1707 = vadd.f32 %v1643, %v1691
          %v1708 = vadd.f32 %v1644, %v1692
          %v1709 = vadd.f32 %v1645, %v1693
          %v1710 = vadd.f32 %v1646, %v1694
          %s1711 = scalar_lea.vmem [#allocation2], 256
          %1712 = vst [vmem:[%s1711] sm:$0xff] %v1615
          %1713 = vst [vmem:[%s1711 + $0x8] sm:$0xff] %v1616
          %1714 = vst [vmem:[%s1711 + $0x10] sm:$0xff] %v1617
          %1715 = vst [vmem:[%s1711 + $0x18] sm:$0xff] %v1618
          %1716 = vst [vmem:[%s1711 + $0x20] sm:$0xff] %v1619
          %1717 = vst [vmem:[%s1711 + $0x28] sm:$0xff] %v1620
          %1718 = vst [vmem:[%s1711 + $0x30] sm:$0xff] %v1621
          %1719 = vst [vmem:[%s1711 + $0x38] sm:$0xff] %v1622
          %1720 = vst [vmem:[%s1711 + $0x40] sm:$0xff] %v1623
          %1721 = vst [vmem:[%s1711 + $0x48] sm:$0xff] %v1624
          %1722 = vst [vmem:[%s1711 + $0x50] sm:$0xff] %v1625
          %1723 = vst [vmem:[%s1711 + $0x58] sm:$0xff] %v1626
          %1724 = vst [vmem:[%s1711 + $0x60] sm:$0xff] %v1627
          %1725 = vst [vmem:[%s1711 + $0x68] sm:$0xff] %v1628
          %1726 = vst [vmem:[%s1711 + $0x70] sm:$0xff] %v1629
          %1727 = vst [vmem:[%s1711 + $0x78] sm:$0xff] %v1630
          %s1728 = scalar_lea.vmem [#allocation3], 256
          %1729 = vst [vmem:[%s1728] sm:$0xff] %v1695
          %1730 = vst [vmem:[%s1728 + $0x8] sm:$0xff] %v1696
          %1731 = vst [vmem:[%s1728 + $0x10] sm:$0xff] %v1697
          %1732 = vst [vmem:[%s1728 + $0x18] sm:$0xff] %v1698
          %1733 = vst [vmem:[%s1728 + $0x20] sm:$0xff] %v1699
          %1734 = vst [vmem:[%s1728 + $0x28] sm:$0xff] %v1700
          %1735 = vst [vmem:[%s1728 + $0x30] sm:$0xff] %v1701
          %1736 = vst [vmem:[%s1728 + $0x38] sm:$0xff] %v1702
          %1737 = vst [vmem:[%s1728 + $0x40] sm:$0xff] %v1703
          %1738 = vst [vmem:[%s1728 + $0x48] sm:$0xff] %v1704
          %1739 = vst [vmem:[%s1728 + $0x50] sm:$0xff] %v1705
          %1740 = vst [vmem:[%s1728 + $0x58] sm:$0xff] %v1706
          %1741 = vst [vmem:[%s1728 + $0x60] sm:$0xff] %v1707
          %1742 = vst [vmem:[%s1728 + $0x68] sm:$0xff] %v1708
          %1743 = vst [vmem:[%s1728 + $0x70] sm:$0xff] %v1709
          %1744 = vst [vmem:[%s1728 + $0x78] sm:$0xff] %v1710
          %v1745 = vmul.f32 %v1039, %v1133
          %v1746 = vmul.f32 %v1045, %v1135
          %v1747 = vmul.f32 %v1051, %v1137
          %v1748 = vmul.f32 %v1057, %v1139
          %v1749 = vmul.f32 %v1063, %v1141
          %v1750 = vmul.f32 %v1069, %v1143
          %v1751 = vmul.f32 %v1075, %v1145
          %v1752 = vmul.f32 %v1081, %v1147
          %v1753 = vmul.f32 %v1087, %v1149
          %v1754 = vmul.f32 %v1093, %v1151
          %v1755 = vmul.f32 %v1099, %v1153
          %v1756 = vmul.f32 %v1105, %v1155
          %v1757 = vmul.f32 %v1111, %v1157
          %v1758 = vmul.f32 %v1117, %v1159
          %v1759 = vmul.f32 %v1123, %v1161
          %v1760 = vmul.f32 %v1129, %v1163
          %1761 = vrot.lane.b32.xlu0 %v1039, 64
          %v1762 = vpop.permute.xlu0 %1761
          %1763 = vrot.lane.b32.xlu0 %v1045, 64
          %v1764 = vpop.permute.xlu0 %1763
          %1765 = vrot.lane.b32.xlu0 %v1051, 64
          %v1766 = vpop.permute.xlu0 %1765
          %1767 = vrot.lane.b32.xlu0 %v1057, 64
          %v1768 = vpop.permute.xlu0 %1767
          %1769 = vrot.lane.b32.xlu0 %v1063, 64
          %v1770 = vpop.permute.xlu0 %1769
          %1771 = vrot.lane.b32.xlu0 %v1069, 64
          %v1772 = vpop.permute.xlu0 %1771
          %1773 = vrot.lane.b32.xlu0 %v1075, 64
          %v1774 = vpop.permute.xlu0 %1773
          %1775 = vrot.lane.b32.xlu0 %v1081, 64
          %v1776 = vpop.permute.xlu0 %1775
          %1777 = vrot.lane.b32.xlu0 %v1087, 64
          %v1778 = vpop.permute.xlu0 %1777
          %1779 = vrot.lane.b32.xlu0 %v1093, 64
          %v1780 = vpop.permute.xlu0 %1779
          %1781 = vrot.lane.b32.xlu0 %v1099, 64
          %v1782 = vpop.permute.xlu0 %1781
          %1783 = vrot.lane.b32.xlu0 %v1105, 64
          %v1784 = vpop.permute.xlu0 %1783
          %1785 = vrot.lane.b32.xlu0 %v1111, 64
          %v1786 = vpop.permute.xlu0 %1785
          %1787 = vrot.lane.b32.xlu0 %v1117, 64
          %v1788 = vpop.permute.xlu0 %1787
          %1789 = vrot.lane.b32.xlu0 %v1123, 64
          %v1790 = vpop.permute.xlu0 %1789
          %1791 = vrot.lane.b32.xlu0 %v1129, 64
          %v1792 = vpop.permute.xlu0 %1791
          %v1793 = vmul.f32 %v1762, %v1134
          %v1794 = vmul.f32 %v1764, %v1136
          %v1795 = vmul.f32 %v1766, %v1138
          %v1796 = vmul.f32 %v1768, %v1140
          %v1797 = vmul.f32 %v1770, %v1142
          %v1798 = vmul.f32 %v1772, %v1144
          %v1799 = vmul.f32 %v1774, %v1146
          %v1800 = vmul.f32 %v1776, %v1148
          %v1801 = vmul.f32 %v1778, %v1150
          %v1802 = vmul.f32 %v1780, %v1152
          %v1803 = vmul.f32 %v1782, %v1154
          %v1804 = vmul.f32 %v1784, %v1156
          %v1805 = vmul.f32 %v1786, %v1158
          %v1806 = vmul.f32 %v1788, %v1160
          %v1807 = vmul.f32 %v1790, %v1162
          %v1808 = vmul.f32 %v1792, %v1164
          %v1809 = vadd.f32 %v1745, %v1793
          %v1810 = vadd.f32 %v1746, %v1794
          %v1811 = vadd.f32 %v1747, %v1795
          %v1812 = vadd.f32 %v1748, %v1796
          %v1813 = vadd.f32 %v1749, %v1797
          %v1814 = vadd.f32 %v1750, %v1798
          %v1815 = vadd.f32 %v1751, %v1799
          %v1816 = vadd.f32 %v1752, %v1800
          %v1817 = vadd.f32 %v1753, %v1801
          %v1818 = vadd.f32 %v1754, %v1802
          %v1819 = vadd.f32 %v1755, %v1803
          %v1820 = vadd.f32 %v1756, %v1804
          %v1821 = vadd.f32 %v1757, %v1805
          %v1822 = vadd.f32 %v1758, %v1806
          %v1823 = vadd.f32 %v1759, %v1807
          %v1824 = vadd.f32 %v1760, %v1808
          %v1825 = vmul.f32 %v1041, %v1133
          %v1826 = vmul.f32 %v1047, %v1135
          %v1827 = vmul.f32 %v1053, %v1137
          %v1828 = vmul.f32 %v1059, %v1139
          %v1829 = vmul.f32 %v1065, %v1141
          %v1830 = vmul.f32 %v1071, %v1143
          %v1831 = vmul.f32 %v1077, %v1145
          %v1832 = vmul.f32 %v1083, %v1147
          %v1833 = vmul.f32 %v1089, %v1149
          %v1834 = vmul.f32 %v1095, %v1151
          %v1835 = vmul.f32 %v1101, %v1153
          %v1836 = vmul.f32 %v1107, %v1155
          %v1837 = vmul.f32 %v1113, %v1157
          %v1838 = vmul.f32 %v1119, %v1159
          %v1839 = vmul.f32 %v1125, %v1161
          %v1840 = vmul.f32 %v1131, %v1163
          %1841 = vrot.lane.b32.xlu0 %v1041, 64
          %v1842 = vpop.permute.xlu0 %1841
          %1843 = vrot.lane.b32.xlu0 %v1047, 64
          %v1844 = vpop.permute.xlu0 %1843
          %1845 = vrot.lane.b32.xlu0 %v1053, 64
          %v1846 = vpop.permute.xlu0 %1845
          %1847 = vrot.lane.b32.xlu0 %v1059, 64
          %v1848 = vpop.permute.xlu0 %1847
          %1849 = vrot.lane.b32.xlu0 %v1065, 64
          %v1850 = vpop.permute.xlu0 %1849
          %1851 = vrot.lane.b32.xlu0 %v1071, 64
          %v1852 = vpop.permute.xlu0 %1851
          %1853 = vrot.lane.b32.xlu0 %v1077, 64
          %v1854 = vpop.permute.xlu0 %1853
          %1855 = vrot.lane.b32.xlu0 %v1083, 64
          %v1856 = vpop.permute.xlu0 %1855
          %1857 = vrot.lane.b32.xlu0 %v1089, 64
          %v1858 = vpop.permute.xlu0 %1857
          %1859 = vrot.lane.b32.xlu0 %v1095, 64
          %v1860 = vpop.permute.xlu0 %1859
          %1861 = vrot.lane.b32.xlu0 %v1101, 64
          %v1862 = vpop.permute.xlu0 %1861
          %1863 = vrot.lane.b32.xlu0 %v1107, 64
          %v1864 = vpop.permute.xlu0 %1863
          %1865 = vrot.lane.b32.xlu0 %v1113, 64
          %v1866 = vpop.permute.xlu0 %1865
          %1867 = vrot.lane.b32.xlu0 %v1119, 64
          %v1868 = vpop.permute.xlu0 %1867
          %1869 = vrot.lane.b32.xlu0 %v1125, 64
          %v1870 = vpop.permute.xlu0 %1869
          %1871 = vrot.lane.b32.xlu0 %v1131, 64
          %v1872 = vpop.permute.xlu0 %1871
          %v1873 = vmul.f32 %v1842, %v1134
          %v1874 = vmul.f32 %v1844, %v1136
          %v1875 = vmul.f32 %v1846, %v1138
          %v1876 = vmul.f32 %v1848, %v1140
          %v1877 = vmul.f32 %v1850, %v1142
          %v1878 = vmul.f32 %v1852, %v1144
          %v1879 = vmul.f32 %v1854, %v1146
          %v1880 = vmul.f32 %v1856, %v1148
          %v1881 = vmul.f32 %v1858, %v1150
          %v1882 = vmul.f32 %v1860, %v1152
          %v1883 = vmul.f32 %v1862, %v1154
          %v1884 = vmul.f32 %v1864, %v1156
          %v1885 = vmul.f32 %v1866, %v1158
          %v1886 = vmul.f32 %v1868, %v1160
          %v1887 = vmul.f32 %v1870, %v1162
          %v1888 = vmul.f32 %v1872, %v1164
          %v1889 = vadd.f32 %v1825, %v1873
          %v1890 = vadd.f32 %v1826, %v1874
          %v1891 = vadd.f32 %v1827, %v1875
          %v1892 = vadd.f32 %v1828, %v1876
          %v1893 = vadd.f32 %v1829, %v1877
          %v1894 = vadd.f32 %v1830, %v1878
          %v1895 = vadd.f32 %v1831, %v1879
          %v1896 = vadd.f32 %v1832, %v1880
          %v1897 = vadd.f32 %v1833, %v1881
          %v1898 = vadd.f32 %v1834, %v1882
          %v1899 = vadd.f32 %v1835, %v1883
          %v1900 = vadd.f32 %v1836, %v1884
          %v1901 = vadd.f32 %v1837, %v1885
          %v1902 = vadd.f32 %v1838, %v1886
          %v1903 = vadd.f32 %v1839, %v1887
          %v1904 = vadd.f32 %v1840, %v1888
          %s1905 = scalar_lea.vmem [#allocation2], 384
          %1906 = vst [vmem:[%s1905] sm:$0xff] %v1809
          %1907 = vst [vmem:[%s1905 + $0x8] sm:$0xff] %v1810
          %1908 = vst [vmem:[%s1905 + $0x10] sm:$0xff] %v1811
          %1909 = vst [vmem:[%s1905 + $0x18] sm:$0xff] %v1812
          %1910 = vst [vmem:[%s1905 + $0x20] sm:$0xff] %v1813
          %1911 = vst [vmem:[%s1905 + $0x28] sm:$0xff] %v1814
          %1912 = vst [vmem:[%s1905 + $0x30] sm:$0xff] %v1815
          %1913 = vst [vmem:[%s1905 + $0x38] sm:$0xff] %v1816
          %1914 = vst [vmem:[%s1905 + $0x40] sm:$0xff] %v1817
          %1915 = vst [vmem:[%s1905 + $0x48] sm:$0xff] %v1818
          %1916 = vst [vmem:[%s1905 + $0x50] sm:$0xff] %v1819
          %1917 = vst [vmem:[%s1905 + $0x58] sm:$0xff] %v1820
          %1918 = vst [vmem:[%s1905 + $0x60] sm:$0xff] %v1821
          %1919 = vst [vmem:[%s1905 + $0x68] sm:$0xff] %v1822
          %1920 = vst [vmem:[%s1905 + $0x70] sm:$0xff] %v1823
          %1921 = vst [vmem:[%s1905 + $0x78] sm:$0xff] %v1824
          %s1922 = scalar_lea.vmem [#allocation3], 384
          %1923 = vst [vmem:[%s1922] sm:$0xff] %v1889
          %1924 = vst [vmem:[%s1922 + $0x8] sm:$0xff] %v1890
          %1925 = vst [vmem:[%s1922 + $0x10] sm:$0xff] %v1891
          %1926 = vst [vmem:[%s1922 + $0x18] sm:$0xff] %v1892
          %1927 = vst [vmem:[%s1922 + $0x20] sm:$0xff] %v1893
          %1928 = vst [vmem:[%s1922 + $0x28] sm:$0xff] %v1894
          %1929 = vst [vmem:[%s1922 + $0x30] sm:$0xff] %v1895
          %1930 = vst [vmem:[%s1922 + $0x38] sm:$0xff] %v1896
          %1931 = vst [vmem:[%s1922 + $0x40] sm:$0xff] %v1897
          %1932 = vst [vmem:[%s1922 + $0x48] sm:$0xff] %v1898
          %1933 = vst [vmem:[%s1922 + $0x50] sm:$0xff] %v1899
          %1934 = vst [vmem:[%s1922 + $0x58] sm:$0xff] %v1900
          %1935 = vst [vmem:[%s1922 + $0x60] sm:$0xff] %v1901
          %1936 = vst [vmem:[%s1922 + $0x68] sm:$0xff] %v1902
          %1937 = vst [vmem:[%s1922 + $0x70] sm:$0xff] %v1903
          %1938 = vst [vmem:[%s1922 + $0x78] sm:$0xff] %v1904
        $region56: #{tpu_custom_call.1} parent=35 // pred_fallthru
          _
        %s1939 = smul.u32 %s30, 128
        %v1940 = vlaneseq
        %v1941 = vshrl.u32 %v1940, 7
        %v1942 = vadd.s32 %v1941, 8
        %v1943 = vadd.s32 %v1941, 16
        %v1944 = vadd.s32 %v1941, 24
        %v1945 = vadd.s32 %v1941, 32
        %v1946 = vadd.s32 %v1941, 40
        %v1947 = vadd.s32 %v1941, 48
        %v1948 = vadd.s32 %v1941, 56
        %v1949 = vadd.s32 %v1941, 64
        %v1950 = vadd.s32 %v1941, 72
        %v1951 = vadd.s32 %v1941, 80
        %v1952 = vadd.s32 %v1941, 88
        %v1953 = vadd.s32 %v1941, 96
        %v1954 = vadd.s32 %v1941, 104
        %v1955 = vadd.s32 %v1941, 112
        %v1956 = vadd.s32 %v1941, 120
        %v1957 = vstv %s1939
        %v1958 = vadd.s32 %v1941, %v1957
        %v1959 = vadd.s32 %v1942, %v1957
        %v1960 = vadd.s32 %v1943, %v1957
        %v1961 = vadd.s32 %v1944, %v1957
        %v1962 = vadd.s32 %v1945, %v1957
        %v1963 = vadd.s32 %v1946, %v1957
        %v1964 = vadd.s32 %v1947, %v1957
        %v1965 = vadd.s32 %v1948, %v1957
        %v1966 = vadd.s32 %v1949, %v1957
        %v1967 = vadd.s32 %v1950, %v1957
        %v1968 = vadd.s32 %v1951, %v1957
        %v1969 = vadd.s32 %v1952, %v1957
        %v1970 = vadd.s32 %v1953, %v1957
        %v1971 = vadd.s32 %v1954, %v1957
        %v1972 = vadd.s32 %v1955, %v1957
        %v1973 = vadd.s32 %v1956, %v1957
        %v1974 = vlaneseq
        %v1975 = vand.u32 %v1974, 127
        %vm1976 = vcmp.gt.s32.totalorder %v1958, %v1975
        %vm1977 = vcmp.gt.s32.totalorder %v1959, %v1975
        %vm1978 = vcmp.gt.s32.totalorder %v1960, %v1975
        %vm1979 = vcmp.gt.s32.totalorder %v1961, %v1975
        %vm1980 = vcmp.gt.s32.totalorder %v1962, %v1975
        %vm1981 = vcmp.gt.s32.totalorder %v1963, %v1975
        %vm1982 = vcmp.gt.s32.totalorder %v1964, %v1975
        %vm1983 = vcmp.gt.s32.totalorder %v1965, %v1975
        %vm1984 = vcmp.gt.s32.totalorder %v1966, %v1975
        %vm1985 = vcmp.gt.s32.totalorder %v1967, %v1975
        %vm1986 = vcmp.gt.s32.totalorder %v1968, %v1975
        %vm1987 = vcmp.gt.s32.totalorder %v1969, %v1975
        %vm1988 = vcmp.gt.s32.totalorder %v1970, %v1975
        %vm1989 = vcmp.gt.s32.totalorder %v1971, %v1975
        %vm1990 = vcmp.gt.s32.totalorder %v1972, %v1975
        %vm1991 = vcmp.gt.s32.totalorder %v1973, %v1975
        %v1992 = vsel %vm1976, -1e+12, 0.0
        %v1993 = vsel %vm1977, -1e+12, 0.0
        %v1994 = vsel %vm1978, -1e+12, 0.0
        %v1995 = vsel %vm1979, -1e+12, 0.0
        %v1996 = vsel %vm1980, -1e+12, 0.0
        %v1997 = vsel %vm1981, -1e+12, 0.0
        %v1998 = vsel %vm1982, -1e+12, 0.0
        %v1999 = vsel %vm1983, -1e+12, 0.0
        %v2000 = vsel %vm1984, -1e+12, 0.0
        %v2001 = vsel %vm1985, -1e+12, 0.0
        %v2002 = vsel %vm1986, -1e+12, 0.0
        %v2003 = vsel %vm1987, -1e+12, 0.0
        %v2004 = vsel %vm1988, -1e+12, 0.0
        %v2005 = vsel %vm1989, -1e+12, 0.0
        %v2006 = vsel %vm1990, -1e+12, 0.0
        %v2007 = vsel %vm1991, -1e+12, 0.0
        %s2008 = scalar_lea.vmem [#allocation2], %s1939
        %v2009 = vld [vmem:[%s2008] sm:$0xff]
        %v2010 = vld [vmem:[%s2008 + $0x8] sm:$0xff]
        %v2011 = vld [vmem:[%s2008 + $0x10] sm:$0xff]
        %v2012 = vld [vmem:[%s2008 + $0x18] sm:$0xff]
        %v2013 = vld [vmem:[%s2008 + $0x20] sm:$0xff]
        %v2014 = vld [vmem:[%s2008 + $0x28] sm:$0xff]
        %v2015 = vld [vmem:[%s2008 + $0x30] sm:$0xff]
        %v2016 = vld [vmem:[%s2008 + $0x38] sm:$0xff]
        %v2017 = vld [vmem:[%s2008 + $0x40] sm:$0xff]
        %v2018 = vld [vmem:[%s2008 + $0x48] sm:$0xff]
        %v2019 = vld [vmem:[%s2008 + $0x50] sm:$0xff]
        %v2020 = vld [vmem:[%s2008 + $0x58] sm:$0xff]
        %v2021 = vld [vmem:[%s2008 + $0x60] sm:$0xff]
        %v2022 = vld [vmem:[%s2008 + $0x68] sm:$0xff]
        %v2023 = vld [vmem:[%s2008 + $0x70] sm:$0xff]
        %v2024 = vld [vmem:[%s2008 + $0x78] sm:$0xff]
        %v2025 = vld [vmem:[#allocation3] sm:$0xff]
        %v2026 = vld [vmem:[#allocation3 + $0x8] sm:$0xff]
        %v2027 = vld [vmem:[#allocation3 + $0x10] sm:$0xff]
        %v2028 = vld [vmem:[#allocation3 + $0x18] sm:$0xff]
        %v2029 = vld [vmem:[#allocation3 + $0x20] sm:$0xff]
        %v2030 = vld [vmem:[#allocation3 + $0x28] sm:$0xff]
        %v2031 = vld [vmem:[#allocation3 + $0x30] sm:$0xff]
        %v2032 = vld [vmem:[#allocation3 + $0x38] sm:$0xff]
        %v2033 = vld [vmem:[#allocation3 + $0x40] sm:$0xff]
        %v2034 = vld [vmem:[#allocation3 + $0x48] sm:$0xff]
        %v2035 = vld [vmem:[#allocation3 + $0x50] sm:$0xff]
        %v2036 = vld [vmem:[#allocation3 + $0x58] sm:$0xff]
        %v2037 = vld [vmem:[#allocation3 + $0x60] sm:$0xff]
        %v2038 = vld [vmem:[#allocation3 + $0x68] sm:$0xff]
        %v2039 = vld [vmem:[#allocation3 + $0x70] sm:$0xff]
        %v2040 = vld [vmem:[#allocation3 + $0x78] sm:$0xff]
        %2041 = vmatprep.subr.mxu0 0.0
        %2042 = vmatpush1.xpose.msra.mxu0 %v2040
        %2043 = vmatprep.subr.mxu0 0.0
        %2044 = vmatpush1.xpose.msra.mxu0 %v2039
        %2045 = vmatprep.subr.mxu0 0.0
        %2046 = vmatpush1.xpose.msra.mxu0 %v2038
        %2047 = vmatprep.subr.mxu0 0.0
        %2048 = vmatpush1.xpose.msra.mxu0 %v2037
        %2049 = vmatprep.subr.mxu0 0.0
        %2050 = vmatpush1.xpose.msra.mxu0 %v2036
        %2051 = vmatprep.subr.mxu0 0.0
        %2052 = vmatpush1.xpose.msra.mxu0 %v2035
        %2053 = vmatprep.subr.mxu0 0.0
        %2054 = vmatpush1.xpose.msra.mxu0 %v2034
        %2055 = vmatprep.subr.mxu0 0.0
        %2056 = vmatpush1.xpose.msra.mxu0 %v2033
        %2057 = vmatprep.subr.mxu0 0.0
        %2058 = vmatpush1.xpose.msra.mxu0 %v2032
        %2059 = vmatprep.subr.mxu0 0.0
        %2060 = vmatpush1.xpose.msra.mxu0 %v2031
        %2061 = vmatprep.subr.mxu0 0.0
        %2062 = vmatpush1.xpose.msra.mxu0 %v2030
        %2063 = vmatprep.subr.mxu0 0.0
        %2064 = vmatpush1.xpose.msra.mxu0 %v2029
        %2065 = vmatprep.subr.mxu0 0.0
        %2066 = vmatpush1.xpose.msra.mxu0 %v2028
        %2067 = vmatprep.subr.mxu0 0.0
        %2068 = vmatpush1.xpose.msra.mxu0 %v2027
        %2069 = vmatprep.subr.mxu0 0.0
        %2070 = vmatpush1.xpose.msra.mxu0 %v2026
        %2071 = vmatprep.subr.mxu0 0.0
        %2072 = vmatpush1.xpose.msra.mxu0 %v2025
        %2073 = vmatprep.subr.mxu0 0.0
        %2074 = vmatpush2.xpose.msra.mxu0 0.0
        %2075 = vmatprep.subr.mxu0 0.0
        %2076 = vmatpush2.xpose.msra.mxu0 0.0
        %2077 = vmatprep.subr.mxu0 0.0
        %2078 = vmatpush2.xpose.msra.mxu0 0.0
        %2079 = vmatprep.subr.mxu0 0.0
        %2080 = vmatpush2.xpose.msra.mxu0 0.0
        %2081 = vmatprep.subr.mxu0 0.0
        %2082 = vmatpush2.xpose.msra.mxu0 0.0
        %2083 = vmatprep.subr.mxu0 0.0
        %2084 = vmatpush2.xpose.msra.mxu0 0.0
        %2085 = vmatprep.subr.mxu0 0.0
        %2086 = vmatpush2.xpose.msra.mxu0 0.0
        %2087 = vmatprep.subr.mxu0 0.0
        %2088 = vmatpush2.xpose.msra.mxu0 0.0
        %2089 = vmatprep.subr.mxu0 0.0
        %2090 = vmatpush2.xpose.msra.mxu0 0.0
        %2091 = vmatprep.subr.mxu0 0.0
        %2092 = vmatpush2.xpose.msra.mxu0 0.0
        %2093 = vmatprep.subr.mxu0 0.0
        %2094 = vmatpush2.xpose.msra.mxu0 0.0
        %2095 = vmatprep.subr.mxu0 0.0
        %2096 = vmatpush2.xpose.msra.mxu0 0.0
        %2097 = vmatprep.subr.mxu0 0.0
        %2098 = vmatpush2.xpose.msra.mxu0 0.0
        %2099 = vmatprep.subr.mxu0 0.0
        %2100 = vmatpush2.xpose.msra.mxu0 0.0
        %2101 = vmatprep.subr.mxu0 0.0
        %2102 = vmatpush2.xpose.msra.mxu0 0.0
        %2103 = vmatprep.subr.mxu0 0.0
        %2104 = vmatpush2.xpose.msra.mxu0 0.0
        %2105 = vmatprep.mubr.f32.mxu0 0.0
        %2106 = vmatmul.mubr.f32.gmra.mxu0 %v2009
        %v2107 = vpop.f32.mrf.mxu0
        %v2108 = vadd.f32 %v1992, %v2107
        %v2109 = vpop.f32.mrf.mxu0
        %2110 = vmatprep.mubr.f32.mxu0 0.0
        %2111 = vmatmul.mubr.f32.gmra.mxu0 %v2010
        %v2112 = vpop.f32.mrf.mxu0
        %v2113 = vadd.f32 %v1993, %v2112
        %v2114 = vpop.f32.mrf.mxu0
        %2115 = vmatprep.mubr.f32.mxu0 0.0
        %2116 = vmatmul.mubr.f32.gmra.mxu0 %v2011
        %v2117 = vpop.f32.mrf.mxu0
        %v2118 = vadd.f32 %v1994, %v2117
        %v2119 = vpop.f32.mrf.mxu0
        %2120 = vmatprep.mubr.f32.mxu0 0.0
        %2121 = vmatmul.mubr.f32.gmra.mxu0 %v2012
        %v2122 = vpop.f32.mrf.mxu0
        %v2123 = vadd.f32 %v1995, %v2122
        %v2124 = vpop.f32.mrf.mxu0
        %2125 = vmatprep.mubr.f32.mxu0 0.0
        %2126 = vmatmul.mubr.f32.gmra.mxu0 %v2013
        %v2127 = vpop.f32.mrf.mxu0
        %v2128 = vadd.f32 %v1996, %v2127
        %v2129 = vpop.f32.mrf.mxu0
        %2130 = vmatprep.mubr.f32.mxu0 0.0
        %2131 = vmatmul.mubr.f32.gmra.mxu0 %v2014
        %v2132 = vpop.f32.mrf.mxu0
        %v2133 = vadd.f32 %v1997, %v2132
        %v2134 = vpop.f32.mrf.mxu0
        %2135 = vmatprep.mubr.f32.mxu0 0.0
        %2136 = vmatmul.mubr.f32.gmra.mxu0 %v2015
        %v2137 = vpop.f32.mrf.mxu0
        %v2138 = vadd.f32 %v1998, %v2137
        %v2139 = vpop.f32.mrf.mxu0
        %2140 = vmatprep.mubr.f32.mxu0 0.0
        %2141 = vmatmul.mubr.f32.gmra.mxu0 %v2016
        %v2142 = vpop.f32.mrf.mxu0
        %v2143 = vadd.f32 %v1999, %v2142
        %v2144 = vpop.f32.mrf.mxu0
        %2145 = vmatprep.mubr.f32.mxu0 0.0
        %2146 = vmatmul.mubr.f32.gmra.mxu0 %v2017
        %v2147 = vpop.f32.mrf.mxu0
        %v2148 = vadd.f32 %v2000, %v2147
        %v2149 = vpop.f32.mrf.mxu0
        %2150 = vmatprep.mubr.f32.mxu0 0.0
        %2151 = vmatmul.mubr.f32.gmra.mxu0 %v2018
        %v2152 = vpop.f32.mrf.mxu0
        %v2153 = vadd.f32 %v2001, %v2152
        %v2154 = vpop.f32.mrf.mxu0
        %2155 = vmatprep.mubr.f32.mxu0 0.0
        %2156 = vmatmul.mubr.f32.gmra.mxu0 %v2019
        %v2157 = vpop.f32.mrf.mxu0
        %v2158 = vadd.f32 %v2002, %v2157
        %v2159 = vpop.f32.mrf.mxu0
        %2160 = vmatprep.mubr.f32.mxu0 0.0
        %2161 = vmatmul.mubr.f32.gmra.mxu0 %v2020
        %v2162 = vpop.f32.mrf.mxu0
        %v2163 = vadd.f32 %v2003, %v2162
        %v2164 = vpop.f32.mrf.mxu0
        %2165 = vmatprep.mubr.f32.mxu0 0.0
        %2166 = vmatmul.mubr.f32.gmra.mxu0 %v2021
        %v2167 = vpop.f32.mrf.mxu0
        %v2168 = vadd.f32 %v2004, %v2167
        %v2169 = vpop.f32.mrf.mxu0
        %2170 = vmatprep.mubr.f32.mxu0 0.0
        %2171 = vmatmul.mubr.f32.gmra.mxu0 %v2022
        %v2172 = vpop.f32.mrf.mxu0
        %v2173 = vadd.f32 %v2005, %v2172
        %v2174 = vpop.f32.mrf.mxu0
        %2175 = vmatprep.mubr.f32.mxu0 0.0
        %2176 = vmatmul.mubr.f32.gmra.mxu0 %v2023
        %v2177 = vpop.f32.mrf.mxu0
        %v2178 = vadd.f32 %v2006, %v2177
        %v2179 = vpop.f32.mrf.mxu0
        %2180 = vmatprep.mubr.f32.mxu0 0.0
        %2181 = vmatmul.mubr.f32.gmra.mxu0 %v2024
        %v2182 = vpop.f32.mrf.mxu0
        %v2183 = vadd.f32 %v2007, %v2182
        %v2184 = vpop.f32.mrf.mxu0
        %2185 = vdwg.mxu0
        %2186 = vst [vmem:[%s296] sm:$0xff] %v2108
        %2187 = vst [vmem:[%s296 + $0x8] sm:$0xff] %v2113
        %2188 = vst [vmem:[%s296 + $0x10] sm:$0xff] %v2118
        %2189 = vst [vmem:[%s296 + $0x18] sm:$0xff] %v2123
        %2190 = vst [vmem:[%s296 + $0x20] sm:$0xff] %v2128
        %2191 = vst [vmem:[%s296 + $0x28] sm:$0xff] %v2133
        %2192 = vst [vmem:[%s296 + $0x30] sm:$0xff] %v2138
        %2193 = vst [vmem:[%s296 + $0x38] sm:$0xff] %v2143
        %2194 = vst [vmem:[%s296 + $0x40] sm:$0xff] %v2148
        %2195 = vst [vmem:[%s296 + $0x48] sm:$0xff] %v2153
        %2196 = vst [vmem:[%s296 + $0x50] sm:$0xff] %v2158
        %2197 = vst [vmem:[%s296 + $0x58] sm:$0xff] %v2163
        %2198 = vst [vmem:[%s296 + $0x60] sm:$0xff] %v2168
        %2199 = vst [vmem:[%s296 + $0x68] sm:$0xff] %v2173
        %2200 = vst [vmem:[%s296 + $0x70] sm:$0xff] %v2178
        %2201 = vst [vmem:[%s296 + $0x78] sm:$0xff] %v2183
        %s2202 = sadd.s32 %s1939, 128
        %s2203 = scalar_lea.vmem [#allocation2], %s2202
        %v2204 = vld [vmem:[%s2203] sm:$0xff]
        %v2205 = vld [vmem:[%s2203 + $0x8] sm:$0xff]
        %v2206 = vld [vmem:[%s2203 + $0x10] sm:$0xff]
        %v2207 = vld [vmem:[%s2203 + $0x18] sm:$0xff]
        %v2208 = vld [vmem:[%s2203 + $0x20] sm:$0xff]
        %v2209 = vld [vmem:[%s2203 + $0x28] sm:$0xff]
        %v2210 = vld [vmem:[%s2203 + $0x30] sm:$0xff]
        %v2211 = vld [vmem:[%s2203 + $0x38] sm:$0xff]
        %v2212 = vld [vmem:[%s2203 + $0x40] sm:$0xff]
        %v2213 = vld [vmem:[%s2203 + $0x48] sm:$0xff]
        %v2214 = vld [vmem:[%s2203 + $0x50] sm:$0xff]
        %v2215 = vld [vmem:[%s2203 + $0x58] sm:$0xff]
        %v2216 = vld [vmem:[%s2203 + $0x60] sm:$0xff]
        %v2217 = vld [vmem:[%s2203 + $0x68] sm:$0xff]
        %v2218 = vld [vmem:[%s2203 + $0x70] sm:$0xff]
        %v2219 = vld [vmem:[%s2203 + $0x78] sm:$0xff]
        %s2220 = scalar_lea.vmem [#allocation3], 128
        %v2221 = vld [vmem:[%s2220] sm:$0xff]
        %v2222 = vld [vmem:[%s2220 + $0x8] sm:$0xff]
        %v2223 = vld [vmem:[%s2220 + $0x10] sm:$0xff]
        %v2224 = vld [vmem:[%s2220 + $0x18] sm:$0xff]
        %v2225 = vld [vmem:[%s2220 + $0x20] sm:$0xff]
        %v2226 = vld [vmem:[%s2220 + $0x28] sm:$0xff]
        %v2227 = vld [vmem:[%s2220 + $0x30] sm:$0xff]
        %v2228 = vld [vmem:[%s2220 + $0x38] sm:$0xff]
        %v2229 = vld [vmem:[%s2220 + $0x40] sm:$0xff]
        %v2230 = vld [vmem:[%s2220 + $0x48] sm:$0xff]
        %v2231 = vld [vmem:[%s2220 + $0x50] sm:$0xff]
        %v2232 = vld [vmem:[%s2220 + $0x58] sm:$0xff]
        %v2233 = vld [vmem:[%s2220 + $0x60] sm:$0xff]
        %v2234 = vld [vmem:[%s2220 + $0x68] sm:$0xff]
        %v2235 = vld [vmem:[%s2220 + $0x70] sm:$0xff]
        %v2236 = vld [vmem:[%s2220 + $0x78] sm:$0xff]
        %2237 = vmatprep.subr.mxu0 0.0
        %2238 = vmatpush1.xpose.msra.mxu0 %v2236
        %2239 = vmatprep.subr.mxu0 0.0
        %2240 = vmatpush1.xpose.msra.mxu0 %v2235
        %2241 = vmatprep.subr.mxu0 0.0
        %2242 = vmatpush1.xpose.msra.mxu0 %v2234
        %2243 = vmatprep.subr.mxu0 0.0
        %2244 = vmatpush1.xpose.msra.mxu0 %v2233
        %2245 = vmatprep.subr.mxu0 0.0
        %2246 = vmatpush1.xpose.msra.mxu0 %v2232
        %2247 = vmatprep.subr.mxu0 0.0
        %2248 = vmatpush1.xpose.msra.mxu0 %v2231
        %2249 = vmatprep.subr.mxu0 0.0
        %2250 = vmatpush1.xpose.msra.mxu0 %v2230
        %2251 = vmatprep.subr.mxu0 0.0
        %2252 = vmatpush1.xpose.msra.mxu0 %v2229
        %2253 = vmatprep.subr.mxu0 0.0
        %2254 = vmatpush1.xpose.msra.mxu0 %v2228
        %2255 = vmatprep.subr.mxu0 0.0
        %2256 = vmatpush1.xpose.msra.mxu0 %v2227
        %2257 = vmatprep.subr.mxu0 0.0
        %2258 = vmatpush1.xpose.msra.mxu0 %v2226
        %2259 = vmatprep.subr.mxu0 0.0
        %2260 = vmatpush1.xpose.msra.mxu0 %v2225
        %2261 = vmatprep.subr.mxu0 0.0
        %2262 = vmatpush1.xpose.msra.mxu0 %v2224
        %2263 = vmatprep.subr.mxu0 0.0
        %2264 = vmatpush1.xpose.msra.mxu0 %v2223
        %2265 = vmatprep.subr.mxu0 0.0
        %2266 = vmatpush1.xpose.msra.mxu0 %v2222
        %2267 = vmatprep.subr.mxu0 0.0
        %2268 = vmatpush1.xpose.msra.mxu0 %v2221
        %2269 = vmatprep.subr.mxu0 0.0
        %2270 = vmatpush2.xpose.msra.mxu0 0.0
        %2271 = vmatprep.subr.mxu0 0.0
        %2272 = vmatpush2.xpose.msra.mxu0 0.0
        %2273 = vmatprep.subr.mxu0 0.0
        %2274 = vmatpush2.xpose.msra.mxu0 0.0
        %2275 = vmatprep.subr.mxu0 0.0
        %2276 = vmatpush2.xpose.msra.mxu0 0.0
        %2277 = vmatprep.subr.mxu0 0.0
        %2278 = vmatpush2.xpose.msra.mxu0 0.0
        %2279 = vmatprep.subr.mxu0 0.0
        %2280 = vmatpush2.xpose.msra.mxu0 0.0
        %2281 = vmatprep.subr.mxu0 0.0
        %2282 = vmatpush2.xpose.msra.mxu0 0.0
        %2283 = vmatprep.subr.mxu0 0.0
        %2284 = vmatpush2.xpose.msra.mxu0 0.0
        %2285 = vmatprep.subr.mxu0 0.0
        %2286 = vmatpush2.xpose.msra.mxu0 0.0
        %2287 = vmatprep.subr.mxu0 0.0
        %2288 = vmatpush2.xpose.msra.mxu0 0.0
        %2289 = vmatprep.subr.mxu0 0.0
        %2290 = vmatpush2.xpose.msra.mxu0 0.0
        %2291 = vmatprep.subr.mxu0 0.0
        %2292 = vmatpush2.xpose.msra.mxu0 0.0
        %2293 = vmatprep.subr.mxu0 0.0
        %2294 = vmatpush2.xpose.msra.mxu0 0.0
        %2295 = vmatprep.subr.mxu0 0.0
        %2296 = vmatpush2.xpose.msra.mxu0 0.0
        %2297 = vmatprep.subr.mxu0 0.0
        %2298 = vmatpush2.xpose.msra.mxu0 0.0
        %2299 = vmatprep.subr.mxu0 0.0
        %2300 = vmatpush2.xpose.msra.mxu0 0.0
        %2301 = vmatprep.mubr.f32.mxu0 0.0
        %2302 = vmatmul.mubr.f32.gmra.mxu0 %v2204
        %v2303 = vpop.f32.mrf.mxu0
        %v2304 = vadd.f32 %v1992, %v2303
        %v2305 = vpop.f32.mrf.mxu0
        %2306 = vmatprep.mubr.f32.mxu0 0.0
        %2307 = vmatmul.mubr.f32.gmra.mxu0 %v2205
        %v2308 = vpop.f32.mrf.mxu0
        %v2309 = vadd.f32 %v1993, %v2308
        %v2310 = vpop.f32.mrf.mxu0
        %2311 = vmatprep.mubr.f32.mxu0 0.0
        %2312 = vmatmul.mubr.f32.gmra.mxu0 %v2206
        %v2313 = vpop.f32.mrf.mxu0
        %v2314 = vadd.f32 %v1994, %v2313
        %v2315 = vpop.f32.mrf.mxu0
        %2316 = vmatprep.mubr.f32.mxu0 0.0
        %2317 = vmatmul.mubr.f32.gmra.mxu0 %v2207
        %v2318 = vpop.f32.mrf.mxu0
        %v2319 = vadd.f32 %v1995, %v2318
        %v2320 = vpop.f32.mrf.mxu0
        %2321 = vmatprep.mubr.f32.mxu0 0.0
        %2322 = vmatmul.mubr.f32.gmra.mxu0 %v2208
        %v2323 = vpop.f32.mrf.mxu0
        %v2324 = vadd.f32 %v1996, %v2323
        %v2325 = vpop.f32.mrf.mxu0
        %2326 = vmatprep.mubr.f32.mxu0 0.0
        %2327 = vmatmul.mubr.f32.gmra.mxu0 %v2209
        %v2328 = vpop.f32.mrf.mxu0
        %v2329 = vadd.f32 %v1997, %v2328
        %v2330 = vpop.f32.mrf.mxu0
        %2331 = vmatprep.mubr.f32.mxu0 0.0
        %2332 = vmatmul.mubr.f32.gmra.mxu0 %v2210
        %v2333 = vpop.f32.mrf.mxu0
        %v2334 = vadd.f32 %v1998, %v2333
        %v2335 = vpop.f32.mrf.mxu0
        %2336 = vmatprep.mubr.f32.mxu0 0.0
        %2337 = vmatmul.mubr.f32.gmra.mxu0 %v2211
        %v2338 = vpop.f32.mrf.mxu0
        %v2339 = vadd.f32 %v1999, %v2338
        %v2340 = vpop.f32.mrf.mxu0
        %2341 = vmatprep.mubr.f32.mxu0 0.0
        %2342 = vmatmul.mubr.f32.gmra.mxu0 %v2212
        %v2343 = vpop.f32.mrf.mxu0
        %v2344 = vadd.f32 %v2000, %v2343
        %v2345 = vpop.f32.mrf.mxu0
        %2346 = vmatprep.mubr.f32.mxu0 0.0
        %2347 = vmatmul.mubr.f32.gmra.mxu0 %v2213
        %v2348 = vpop.f32.mrf.mxu0
        %v2349 = vadd.f32 %v2001, %v2348
        %v2350 = vpop.f32.mrf.mxu0
        %2351 = vmatprep.mubr.f32.mxu0 0.0
        %2352 = vmatmul.mubr.f32.gmra.mxu0 %v2214
        %v2353 = vpop.f32.mrf.mxu0
        %v2354 = vadd.f32 %v2002, %v2353
        %v2355 = vpop.f32.mrf.mxu0
        %2356 = vmatprep.mubr.f32.mxu0 0.0
        %2357 = vmatmul.mubr.f32.gmra.mxu0 %v2215
        %v2358 = vpop.f32.mrf.mxu0
        %v2359 = vadd.f32 %v2003, %v2358
        %v2360 = vpop.f32.mrf.mxu0
        %2361 = vmatprep.mubr.f32.mxu0 0.0
        %2362 = vmatmul.mubr.f32.gmra.mxu0 %v2216
        %v2363 = vpop.f32.mrf.mxu0
        %v2364 = vadd.f32 %v2004, %v2363
        %v2365 = vpop.f32.mrf.mxu0
        %2366 = vmatprep.mubr.f32.mxu0 0.0
        %2367 = vmatmul.mubr.f32.gmra.mxu0 %v2217
        %v2368 = vpop.f32.mrf.mxu0
        %v2369 = vadd.f32 %v2005, %v2368
        %v2370 = vpop.f32.mrf.mxu0
        %2371 = vmatprep.mubr.f32.mxu0 0.0
        %2372 = vmatmul.mubr.f32.gmra.mxu0 %v2218
        %v2373 = vpop.f32.mrf.mxu0
        %v2374 = vadd.f32 %v2006, %v2373
        %v2375 = vpop.f32.mrf.mxu0
        %2376 = vmatprep.mubr.f32.mxu0 0.0
        %2377 = vmatmul.mubr.f32.gmra.mxu0 %v2219
        %v2378 = vpop.f32.mrf.mxu0
        %v2379 = vadd.f32 %v2007, %v2378
        %v2380 = vpop.f32.mrf.mxu0
        %2381 = vdwg.mxu0
        %s2382 = scalar_lea.vmem %s296, 128 [#allocation12]
        %2383 = vst [vmem:[%s2382] sm:$0xff] %v2304
        %2384 = vst [vmem:[%s2382 + $0x8] sm:$0xff] %v2309
        %2385 = vst [vmem:[%s2382 + $0x10] sm:$0xff] %v2314
        %2386 = vst [vmem:[%s2382 + $0x18] sm:$0xff] %v2319
        %2387 = vst [vmem:[%s2382 + $0x20] sm:$0xff] %v2324
        %2388 = vst [vmem:[%s2382 + $0x28] sm:$0xff] %v2329
        %2389 = vst [vmem:[%s2382 + $0x30] sm:$0xff] %v2334
        %2390 = vst [vmem:[%s2382 + $0x38] sm:$0xff] %v2339
        %2391 = vst [vmem:[%s2382 + $0x40] sm:$0xff] %v2344
        %2392 = vst [vmem:[%s2382 + $0x48] sm:$0xff] %v2349
        %2393 = vst [vmem:[%s2382 + $0x50] sm:$0xff] %v2354
        %2394 = vst [vmem:[%s2382 + $0x58] sm:$0xff] %v2359
        %2395 = vst [vmem:[%s2382 + $0x60] sm:$0xff] %v2364
        %2396 = vst [vmem:[%s2382 + $0x68] sm:$0xff] %v2369
        %2397 = vst [vmem:[%s2382 + $0x70] sm:$0xff] %v2374
        %2398 = vst [vmem:[%s2382 + $0x78] sm:$0xff] %v2379
        %s2399 = sadd.s32 %s1939, 256
        %s2400 = scalar_lea.vmem [#allocation2], %s2399
        %v2401 = vld [vmem:[%s2400] sm:$0xff]
        %v2402 = vld [vmem:[%s2400 + $0x8] sm:$0xff]
        %v2403 = vld [vmem:[%s2400 + $0x10] sm:$0xff]
        %v2404 = vld [vmem:[%s2400 + $0x18] sm:$0xff]
        %v2405 = vld [vmem:[%s2400 + $0x20] sm:$0xff]
        %v2406 = vld [vmem:[%s2400 + $0x28] sm:$0xff]
        %v2407 = vld [vmem:[%s2400 + $0x30] sm:$0xff]
        %v2408 = vld [vmem:[%s2400 + $0x38] sm:$0xff]
        %v2409 = vld [vmem:[%s2400 + $0x40] sm:$0xff]
        %v2410 = vld [vmem:[%s2400 + $0x48] sm:$0xff]
        %v2411 = vld [vmem:[%s2400 + $0x50] sm:$0xff]
        %v2412 = vld [vmem:[%s2400 + $0x58] sm:$0xff]
        %v2413 = vld [vmem:[%s2400 + $0x60] sm:$0xff]
        %v2414 = vld [vmem:[%s2400 + $0x68] sm:$0xff]
        %v2415 = vld [vmem:[%s2400 + $0x70] sm:$0xff]
        %v2416 = vld [vmem:[%s2400 + $0x78] sm:$0xff]
        %s2417 = scalar_lea.vmem [#allocation3], 256
        %v2418 = vld [vmem:[%s2417] sm:$0xff]
        %v2419 = vld [vmem:[%s2417 + $0x8] sm:$0xff]
        %v2420 = vld [vmem:[%s2417 + $0x10] sm:$0xff]
        %v2421 = vld [vmem:[%s2417 + $0x18] sm:$0xff]
        %v2422 = vld [vmem:[%s2417 + $0x20] sm:$0xff]
        %v2423 = vld [vmem:[%s2417 + $0x28] sm:$0xff]
        %v2424 = vld [vmem:[%s2417 + $0x30] sm:$0xff]
        %v2425 = vld [vmem:[%s2417 + $0x38] sm:$0xff]
        %v2426 = vld [vmem:[%s2417 + $0x40] sm:$0xff]
        %v2427 = vld [vmem:[%s2417 + $0x48] sm:$0xff]
        %v2428 = vld [vmem:[%s2417 + $0x50] sm:$0xff]
        %v2429 = vld [vmem:[%s2417 + $0x58] sm:$0xff]
        %v2430 = vld [vmem:[%s2417 + $0x60] sm:$0xff]
        %v2431 = vld [vmem:[%s2417 + $0x68] sm:$0xff]
        %v2432 = vld [vmem:[%s2417 + $0x70] sm:$0xff]
        %v2433 = vld [vmem:[%s2417 + $0x78] sm:$0xff]
        %2434 = vmatprep.subr.mxu0 0.0
        %2435 = vmatpush1.xpose.msra.mxu0 %v2433
        %2436 = vmatprep.subr.mxu0 0.0
        %2437 = vmatpush1.xpose.msra.mxu0 %v2432
        %2438 = vmatprep.subr.mxu0 0.0
        %2439 = vmatpush1.xpose.msra.mxu0 %v2431
        %2440 = vmatprep.subr.mxu0 0.0
        %2441 = vmatpush1.xpose.msra.mxu0 %v2430
        %2442 = vmatprep.subr.mxu0 0.0
        %2443 = vmatpush1.xpose.msra.mxu0 %v2429
        %2444 = vmatprep.subr.mxu0 0.0
        %2445 = vmatpush1.xpose.msra.mxu0 %v2428
        %2446 = vmatprep.subr.mxu0 0.0
        %2447 = vmatpush1.xpose.msra.mxu0 %v2427
        %2448 = vmatprep.subr.mxu0 0.0
        %2449 = vmatpush1.xpose.msra.mxu0 %v2426
        %2450 = vmatprep.subr.mxu0 0.0
        %2451 = vmatpush1.xpose.msra.mxu0 %v2425
        %2452 = vmatprep.subr.mxu0 0.0
        %2453 = vmatpush1.xpose.msra.mxu0 %v2424
        %2454 = vmatprep.subr.mxu0 0.0
        %2455 = vmatpush1.xpose.msra.mxu0 %v2423
        %2456 = vmatprep.subr.mxu0 0.0
        %2457 = vmatpush1.xpose.msra.mxu0 %v2422
        %2458 = vmatprep.subr.mxu0 0.0
        %2459 = vmatpush1.xpose.msra.mxu0 %v2421
        %2460 = vmatprep.subr.mxu0 0.0
        %2461 = vmatpush1.xpose.msra.mxu0 %v2420
        %2462 = vmatprep.subr.mxu0 0.0
        %2463 = vmatpush1.xpose.msra.mxu0 %v2419
        %2464 = vmatprep.subr.mxu0 0.0
        %2465 = vmatpush1.xpose.msra.mxu0 %v2418
        %2466 = vmatprep.subr.mxu0 0.0
        %2467 = vmatpush2.xpose.msra.mxu0 0.0
        %2468 = vmatprep.subr.mxu0 0.0
        %2469 = vmatpush2.xpose.msra.mxu0 0.0
        %2470 = vmatprep.subr.mxu0 0.0
        %2471 = vmatpush2.xpose.msra.mxu0 0.0
        %2472 = vmatprep.subr.mxu0 0.0
        %2473 = vmatpush2.xpose.msra.mxu0 0.0
        %2474 = vmatprep.subr.mxu0 0.0
        %2475 = vmatpush2.xpose.msra.mxu0 0.0
        %2476 = vmatprep.subr.mxu0 0.0
        %2477 = vmatpush2.xpose.msra.mxu0 0.0
        %2478 = vmatprep.subr.mxu0 0.0
        %2479 = vmatpush2.xpose.msra.mxu0 0.0
        %2480 = vmatprep.subr.mxu0 0.0
        %2481 = vmatpush2.xpose.msra.mxu0 0.0
        %2482 = vmatprep.subr.mxu0 0.0
        %2483 = vmatpush2.xpose.msra.mxu0 0.0
        %2484 = vmatprep.subr.mxu0 0.0
        %2485 = vmatpush2.xpose.msra.mxu0 0.0
        %2486 = vmatprep.subr.mxu0 0.0
        %2487 = vmatpush2.xpose.msra.mxu0 0.0
        %2488 = vmatprep.subr.mxu0 0.0
        %2489 = vmatpush2.xpose.msra.mxu0 0.0
        %2490 = vmatprep.subr.mxu0 0.0
        %2491 = vmatpush2.xpose.msra.mxu0 0.0
        %2492 = vmatprep.subr.mxu0 0.0
        %2493 = vmatpush2.xpose.msra.mxu0 0.0
        %2494 = vmatprep.subr.mxu0 0.0
        %2495 = vmatpush2.xpose.msra.mxu0 0.0
        %2496 = vmatprep.subr.mxu0 0.0
        %2497 = vmatpush2.xpose.msra.mxu0 0.0
        %2498 = vmatprep.mubr.f32.mxu0 0.0
        %2499 = vmatmul.mubr.f32.gmra.mxu0 %v2401
        %v2500 = vpop.f32.mrf.mxu0
        %v2501 = vadd.f32 %v1992, %v2500
        %v2502 = vpop.f32.mrf.mxu0
        %2503 = vmatprep.mubr.f32.mxu0 0.0
        %2504 = vmatmul.mubr.f32.gmra.mxu0 %v2402
        %v2505 = vpop.f32.mrf.mxu0
        %v2506 = vadd.f32 %v1993, %v2505
        %v2507 = vpop.f32.mrf.mxu0
        %2508 = vmatprep.mubr.f32.mxu0 0.0
        %2509 = vmatmul.mubr.f32.gmra.mxu0 %v2403
        %v2510 = vpop.f32.mrf.mxu0
        %v2511 = vadd.f32 %v1994, %v2510
        %v2512 = vpop.f32.mrf.mxu0
        %2513 = vmatprep.mubr.f32.mxu0 0.0
        %2514 = vmatmul.mubr.f32.gmra.mxu0 %v2404
        %v2515 = vpop.f32.mrf.mxu0
        %v2516 = vadd.f32 %v1995, %v2515
        %v2517 = vpop.f32.mrf.mxu0
        %2518 = vmatprep.mubr.f32.mxu0 0.0
        %2519 = vmatmul.mubr.f32.gmra.mxu0 %v2405
        %v2520 = vpop.f32.mrf.mxu0
        %v2521 = vadd.f32 %v1996, %v2520
        %v2522 = vpop.f32.mrf.mxu0
        %2523 = vmatprep.mubr.f32.mxu0 0.0
        %2524 = vmatmul.mubr.f32.gmra.mxu0 %v2406
        %v2525 = vpop.f32.mrf.mxu0
        %v2526 = vadd.f32 %v1997, %v2525
        %v2527 = vpop.f32.mrf.mxu0
        %2528 = vmatprep.mubr.f32.mxu0 0.0
        %2529 = vmatmul.mubr.f32.gmra.mxu0 %v2407
        %v2530 = vpop.f32.mrf.mxu0
        %v2531 = vadd.f32 %v1998, %v2530
        %v2532 = vpop.f32.mrf.mxu0
        %2533 = vmatprep.mubr.f32.mxu0 0.0
        %2534 = vmatmul.mubr.f32.gmra.mxu0 %v2408
        %v2535 = vpop.f32.mrf.mxu0
        %v2536 = vadd.f32 %v1999, %v2535
        %v2537 = vpop.f32.mrf.mxu0
        %2538 = vmatprep.mubr.f32.mxu0 0.0
        %2539 = vmatmul.mubr.f32.gmra.mxu0 %v2409
        %v2540 = vpop.f32.mrf.mxu0
        %v2541 = vadd.f32 %v2000, %v2540
        %v2542 = vpop.f32.mrf.mxu0
        %2543 = vmatprep.mubr.f32.mxu0 0.0
        %2544 = vmatmul.mubr.f32.gmra.mxu0 %v2410
        %v2545 = vpop.f32.mrf.mxu0
        %v2546 = vadd.f32 %v2001, %v2545
        %v2547 = vpop.f32.mrf.mxu0
        %2548 = vmatprep.mubr.f32.mxu0 0.0
        %2549 = vmatmul.mubr.f32.gmra.mxu0 %v2411
        %v2550 = vpop.f32.mrf.mxu0
        %v2551 = vadd.f32 %v2002, %v2550
        %v2552 = vpop.f32.mrf.mxu0
        %2553 = vmatprep.mubr.f32.mxu0 0.0
        %2554 = vmatmul.mubr.f32.gmra.mxu0 %v2412
        %v2555 = vpop.f32.mrf.mxu0
        %v2556 = vadd.f32 %v2003, %v2555
        %v2557 = vpop.f32.mrf.mxu0
        %2558 = vmatprep.mubr.f32.mxu0 0.0
        %2559 = vmatmul.mubr.f32.gmra.mxu0 %v2413
        %v2560 = vpop.f32.mrf.mxu0
        %v2561 = vadd.f32 %v2004, %v2560
        %v2562 = vpop.f32.mrf.mxu0
        %2563 = vmatprep.mubr.f32.mxu0 0.0
        %2564 = vmatmul.mubr.f32.gmra.mxu0 %v2414
        %v2565 = vpop.f32.mrf.mxu0
        %v2566 = vadd.f32 %v2005, %v2565
        %v2567 = vpop.f32.mrf.mxu0
        %2568 = vmatprep.mubr.f32.mxu0 0.0
        %2569 = vmatmul.mubr.f32.gmra.mxu0 %v2415
        %v2570 = vpop.f32.mrf.mxu0
        %v2571 = vadd.f32 %v2006, %v2570
        %v2572 = vpop.f32.mrf.mxu0
        %2573 = vmatprep.mubr.f32.mxu0 0.0
        %2574 = vmatmul.mubr.f32.gmra.mxu0 %v2416
        %v2575 = vpop.f32.mrf.mxu0
        %v2576 = vadd.f32 %v2007, %v2575
        %v2577 = vpop.f32.mrf.mxu0
        %2578 = vdwg.mxu0
        %s2579 = scalar_lea.vmem %s296, 256 [#allocation12]
        %2580 = vst [vmem:[%s2579] sm:$0xff] %v2501
        %2581 = vst [vmem:[%s2579 + $0x8] sm:$0xff] %v2506
        %2582 = vst [vmem:[%s2579 + $0x10] sm:$0xff] %v2511
        %2583 = vst [vmem:[%s2579 + $0x18] sm:$0xff] %v2516
        %2584 = vst [vmem:[%s2579 + $0x20] sm:$0xff] %v2521
        %2585 = vst [vmem:[%s2579 + $0x28] sm:$0xff] %v2526
        %2586 = vst [vmem:[%s2579 + $0x30] sm:$0xff] %v2531
        %2587 = vst [vmem:[%s2579 + $0x38] sm:$0xff] %v2536
        %2588 = vst [vmem:[%s2579 + $0x40] sm:$0xff] %v2541
        %2589 = vst [vmem:[%s2579 + $0x48] sm:$0xff] %v2546
        %2590 = vst [vmem:[%s2579 + $0x50] sm:$0xff] %v2551
        %2591 = vst [vmem:[%s2579 + $0x58] sm:$0xff] %v2556
        %2592 = vst [vmem:[%s2579 + $0x60] sm:$0xff] %v2561
        %2593 = vst [vmem:[%s2579 + $0x68] sm:$0xff] %v2566
        %2594 = vst [vmem:[%s2579 + $0x70] sm:$0xff] %v2571
        %2595 = vst [vmem:[%s2579 + $0x78] sm:$0xff] %v2576
        %s2596 = sadd.s32 %s1939, 384
        %s2597 = scalar_lea.vmem [#allocation2], %s2596
        %v2598 = vld [vmem:[%s2597] sm:$0xff]
        %v2599 = vld [vmem:[%s2597 + $0x8] sm:$0xff]
        %v2600 = vld [vmem:[%s2597 + $0x10] sm:$0xff]
        %v2601 = vld [vmem:[%s2597 + $0x18] sm:$0xff]
        %v2602 = vld [vmem:[%s2597 + $0x20] sm:$0xff]
        %v2603 = vld [vmem:[%s2597 + $0x28] sm:$0xff]
        %v2604 = vld [vmem:[%s2597 + $0x30] sm:$0xff]
        %v2605 = vld [vmem:[%s2597 + $0x38] sm:$0xff]
        %v2606 = vld [vmem:[%s2597 + $0x40] sm:$0xff]
        %v2607 = vld [vmem:[%s2597 + $0x48] sm:$0xff]
        %v2608 = vld [vmem:[%s2597 + $0x50] sm:$0xff]
        %v2609 = vld [vmem:[%s2597 + $0x58] sm:$0xff]
        %v2610 = vld [vmem:[%s2597 + $0x60] sm:$0xff]
        %v2611 = vld [vmem:[%s2597 + $0x68] sm:$0xff]
        %v2612 = vld [vmem:[%s2597 + $0x70] sm:$0xff]
        %v2613 = vld [vmem:[%s2597 + $0x78] sm:$0xff]
        %s2614 = scalar_lea.vmem [#allocation3], 384
        %v2615 = vld [vmem:[%s2614] sm:$0xff]
        %v2616 = vld [vmem:[%s2614 + $0x8] sm:$0xff]
        %v2617 = vld [vmem:[%s2614 + $0x10] sm:$0xff]
        %v2618 = vld [vmem:[%s2614 + $0x18] sm:$0xff]
        %v2619 = vld [vmem:[%s2614 + $0x20] sm:$0xff]
        %v2620 = vld [vmem:[%s2614 + $0x28] sm:$0xff]
        %v2621 = vld [vmem:[%s2614 + $0x30] sm:$0xff]
        %v2622 = vld [vmem:[%s2614 + $0x38] sm:$0xff]
        %v2623 = vld [vmem:[%s2614 + $0x40] sm:$0xff]
        %v2624 = vld [vmem:[%s2614 + $0x48] sm:$0xff]
        %v2625 = vld [vmem:[%s2614 + $0x50] sm:$0xff]
        %v2626 = vld [vmem:[%s2614 + $0x58] sm:$0xff]
        %v2627 = vld [vmem:[%s2614 + $0x60] sm:$0xff]
        %v2628 = vld [vmem:[%s2614 + $0x68] sm:$0xff]
        %v2629 = vld [vmem:[%s2614 + $0x70] sm:$0xff]
        %v2630 = vld [vmem:[%s2614 + $0x78] sm:$0xff]
        %2631 = vmatprep.subr.mxu0 0.0
        %2632 = vmatpush1.xpose.msra.mxu0 %v2630
        %2633 = vmatprep.subr.mxu0 0.0
        %2634 = vmatpush1.xpose.msra.mxu0 %v2629
        %2635 = vmatprep.subr.mxu0 0.0
        %2636 = vmatpush1.xpose.msra.mxu0 %v2628
        %2637 = vmatprep.subr.mxu0 0.0
        %2638 = vmatpush1.xpose.msra.mxu0 %v2627
        %2639 = vmatprep.subr.mxu0 0.0
        %2640 = vmatpush1.xpose.msra.mxu0 %v2626
        %2641 = vmatprep.subr.mxu0 0.0
        %2642 = vmatpush1.xpose.msra.mxu0 %v2625
        %2643 = vmatprep.subr.mxu0 0.0
        %2644 = vmatpush1.xpose.msra.mxu0 %v2624
        %2645 = vmatprep.subr.mxu0 0.0
        %2646 = vmatpush1.xpose.msra.mxu0 %v2623
        %2647 = vmatprep.subr.mxu0 0.0
        %2648 = vmatpush1.xpose.msra.mxu0 %v2622
        %2649 = vmatprep.subr.mxu0 0.0
        %2650 = vmatpush1.xpose.msra.mxu0 %v2621
        %2651 = vmatprep.subr.mxu0 0.0
        %2652 = vmatpush1.xpose.msra.mxu0 %v2620
        %2653 = vmatprep.subr.mxu0 0.0
        %2654 = vmatpush1.xpose.msra.mxu0 %v2619
        %2655 = vmatprep.subr.mxu0 0.0
        %2656 = vmatpush1.xpose.msra.mxu0 %v2618
        %2657 = vmatprep.subr.mxu0 0.0
        %2658 = vmatpush1.xpose.msra.mxu0 %v2617
        %2659 = vmatprep.subr.mxu0 0.0
        %2660 = vmatpush1.xpose.msra.mxu0 %v2616
        %2661 = vmatprep.subr.mxu0 0.0
        %2662 = vmatpush1.xpose.msra.mxu0 %v2615
        %2663 = vmatprep.subr.mxu0 0.0
        %2664 = vmatpush2.xpose.msra.mxu0 0.0
        %2665 = vmatprep.subr.mxu0 0.0
        %2666 = vmatpush2.xpose.msra.mxu0 0.0
        %2667 = vmatprep.subr.mxu0 0.0
        %2668 = vmatpush2.xpose.msra.mxu0 0.0
        %2669 = vmatprep.subr.mxu0 0.0
        %2670 = vmatpush2.xpose.msra.mxu0 0.0
        %2671 = vmatprep.subr.mxu0 0.0
        %2672 = vmatpush2.xpose.msra.mxu0 0.0
        %2673 = vmatprep.subr.mxu0 0.0
        %2674 = vmatpush2.xpose.msra.mxu0 0.0
        %2675 = vmatprep.subr.mxu0 0.0
        %2676 = vmatpush2.xpose.msra.mxu0 0.0
        %2677 = vmatprep.subr.mxu0 0.0
        %2678 = vmatpush2.xpose.msra.mxu0 0.0
        %2679 = vmatprep.subr.mxu0 0.0
        %2680 = vmatpush2.xpose.msra.mxu0 0.0
        %2681 = vmatprep.subr.mxu0 0.0
        %2682 = vmatpush2.xpose.msra.mxu0 0.0
        %2683 = vmatprep.subr.mxu0 0.0
        %2684 = vmatpush2.xpose.msra.mxu0 0.0
        %2685 = vmatprep.subr.mxu0 0.0
        %2686 = vmatpush2.xpose.msra.mxu0 0.0
        %2687 = vmatprep.subr.mxu0 0.0
        %2688 = vmatpush2.xpose.msra.mxu0 0.0
        %2689 = vmatprep.subr.mxu0 0.0
        %2690 = vmatpush2.xpose.msra.mxu0 0.0
        %2691 = vmatprep.subr.mxu0 0.0
        %2692 = vmatpush2.xpose.msra.mxu0 0.0
        %2693 = vmatprep.subr.mxu0 0.0
        %2694 = vmatpush2.xpose.msra.mxu0 0.0
        %2695 = vmatprep.mubr.f32.mxu0 0.0
        %2696 = vmatmul.mubr.f32.gmra.mxu0 %v2598
        %v2697 = vpop.f32.mrf.mxu0
        %v2698 = vadd.f32 %v1992, %v2697
        %v2699 = vpop.f32.mrf.mxu0
        %2700 = vmatprep.mubr.f32.mxu0 0.0
        %2701 = vmatmul.mubr.f32.gmra.mxu0 %v2599
        %v2702 = vpop.f32.mrf.mxu0
        %v2703 = vadd.f32 %v1993, %v2702
        %v2704 = vpop.f32.mrf.mxu0
        %2705 = vmatprep.mubr.f32.mxu0 0.0
        %2706 = vmatmul.mubr.f32.gmra.mxu0 %v2600
        %v2707 = vpop.f32.mrf.mxu0
        %v2708 = vadd.f32 %v1994, %v2707
        %v2709 = vpop.f32.mrf.mxu0
        %2710 = vmatprep.mubr.f32.mxu0 0.0
        %2711 = vmatmul.mubr.f32.gmra.mxu0 %v2601
        %v2712 = vpop.f32.mrf.mxu0
        %v2713 = vadd.f32 %v1995, %v2712
        %v2714 = vpop.f32.mrf.mxu0
        %2715 = vmatprep.mubr.f32.mxu0 0.0
        %2716 = vmatmul.mubr.f32.gmra.mxu0 %v2602
        %v2717 = vpop.f32.mrf.mxu0
        %v2718 = vadd.f32 %v1996, %v2717
        %v2719 = vpop.f32.mrf.mxu0
        %2720 = vmatprep.mubr.f32.mxu0 0.0
        %2721 = vmatmul.mubr.f32.gmra.mxu0 %v2603
        %v2722 = vpop.f32.mrf.mxu0
        %v2723 = vadd.f32 %v1997, %v2722
        %v2724 = vpop.f32.mrf.mxu0
        %2725 = vmatprep.mubr.f32.mxu0 0.0
        %2726 = vmatmul.mubr.f32.gmra.mxu0 %v2604
        %v2727 = vpop.f32.mrf.mxu0
        %v2728 = vadd.f32 %v1998, %v2727
        %v2729 = vpop.f32.mrf.mxu0
        %2730 = vmatprep.mubr.f32.mxu0 0.0
        %2731 = vmatmul.mubr.f32.gmra.mxu0 %v2605
        %v2732 = vpop.f32.mrf.mxu0
        %v2733 = vadd.f32 %v1999, %v2732
        %v2734 = vpop.f32.mrf.mxu0
        %2735 = vmatprep.mubr.f32.mxu0 0.0
        %2736 = vmatmul.mubr.f32.gmra.mxu0 %v2606
        %v2737 = vpop.f32.mrf.mxu0
        %v2738 = vadd.f32 %v2000, %v2737
        %v2739 = vpop.f32.mrf.mxu0
        %2740 = vmatprep.mubr.f32.mxu0 0.0
        %2741 = vmatmul.mubr.f32.gmra.mxu0 %v2607
        %v2742 = vpop.f32.mrf.mxu0
        %v2743 = vadd.f32 %v2001, %v2742
        %v2744 = vpop.f32.mrf.mxu0
        %2745 = vmatprep.mubr.f32.mxu0 0.0
        %2746 = vmatmul.mubr.f32.gmra.mxu0 %v2608
        %v2747 = vpop.f32.mrf.mxu0
        %v2748 = vadd.f32 %v2002, %v2747
        %v2749 = vpop.f32.mrf.mxu0
        %2750 = vmatprep.mubr.f32.mxu0 0.0
        %2751 = vmatmul.mubr.f32.gmra.mxu0 %v2609
        %v2752 = vpop.f32.mrf.mxu0
        %v2753 = vadd.f32 %v2003, %v2752
        %v2754 = vpop.f32.mrf.mxu0
        %2755 = vmatprep.mubr.f32.mxu0 0.0
        %2756 = vmatmul.mubr.f32.gmra.mxu0 %v2610
        %v2757 = vpop.f32.mrf.mxu0
        %v2758 = vadd.f32 %v2004, %v2757
        %v2759 = vpop.f32.mrf.mxu0
        %2760 = vmatprep.mubr.f32.mxu0 0.0
        %2761 = vmatmul.mubr.f32.gmra.mxu0 %v2611
        %v2762 = vpop.f32.mrf.mxu0
        %v2763 = vadd.f32 %v2005, %v2762
        %v2764 = vpop.f32.mrf.mxu0
        %2765 = vmatprep.mubr.f32.mxu0 0.0
        %2766 = vmatmul.mubr.f32.gmra.mxu0 %v2612
        %v2767 = vpop.f32.mrf.mxu0
        %v2768 = vadd.f32 %v2006, %v2767
        %v2769 = vpop.f32.mrf.mxu0
        %2770 = vmatprep.mubr.f32.mxu0 0.0
        %2771 = vmatmul.mubr.f32.gmra.mxu0 %v2613
        %v2772 = vpop.f32.mrf.mxu0
        %v2773 = vadd.f32 %v2007, %v2772
        %v2774 = vpop.f32.mrf.mxu0
        %2775 = vdwg.mxu0
        %s2776 = scalar_lea.vmem %s296, 384 [#allocation12]
        %2777 = vst [vmem:[%s2776] sm:$0xff] %v2698
        %2778 = vst [vmem:[%s2776 + $0x8] sm:$0xff] %v2703
        %2779 = vst [vmem:[%s2776 + $0x10] sm:$0xff] %v2708
        %2780 = vst [vmem:[%s2776 + $0x18] sm:$0xff] %v2713
        %2781 = vst [vmem:[%s2776 + $0x20] sm:$0xff] %v2718
        %2782 = vst [vmem:[%s2776 + $0x28] sm:$0xff] %v2723
        %2783 = vst [vmem:[%s2776 + $0x30] sm:$0xff] %v2728
        %2784 = vst [vmem:[%s2776 + $0x38] sm:$0xff] %v2733
        %2785 = vst [vmem:[%s2776 + $0x40] sm:$0xff] %v2738
        %2786 = vst [vmem:[%s2776 + $0x48] sm:$0xff] %v2743
        %2787 = vst [vmem:[%s2776 + $0x50] sm:$0xff] %v2748
        %2788 = vst [vmem:[%s2776 + $0x58] sm:$0xff] %v2753
        %2789 = vst [vmem:[%s2776 + $0x60] sm:$0xff] %v2758
        %2790 = vst [vmem:[%s2776 + $0x68] sm:$0xff] %v2763
        %2791 = vst [vmem:[%s2776 + $0x70] sm:$0xff] %v2768
        %2792 = vst [vmem:[%s2776 + $0x78] sm:$0xff] %v2773
        %s2793 = sand.u32 %s153, 1
        %s2794 = scalar_lea.sflag [#allocation6], %s2793
        %s2795 = sand.u32 %s153, 1
        %s2796 = smul.addr %s2795, 512
        %s2797 = scalar_lea.vmem [#allocation12], %s2796
        // Predicated region
        $region57: #{tpu_custom_call.1} parent=35 // pred_check
          %p2798 = pneg %p163
        $region58: #{tpu_custom_call.1} parent=35 // pred_check_branch
          %2800 = sbr.rel (%p2798) target = $region60
        $region59: #{tpu_custom_call.1} parent=35 // pred_region
          %s2801 = smul.u32 4, %s29
          %s2802 = smul.u32 16, %s30
          %s2804 = ssub.s32 8192, 8192
          %2805 = vsyncadd %s2794, %s2804
          %s2806 = smul.addr %s2801, 16
          %s2807 = sadd.s32 %s2802, %s2806
          %s2808 = smul.addr %s28, 64
          %s2809 = sadd.s32 %s2807, %s2808
          %s2810 = smul.addr %s2809, 128
          %s2811 = scalar_lea.hbm %s4, %s2810
          %s2812 = sshll.u32 %s2797, 4
          %s2813 = int_to_ptr.vmem [resolvable:$true] %s2812
          %2818 = dma.vmem_to_hbm [thread:$0]  %s2813, 8192, %s2811, %s2794, 128, 128, 8
        $region60: #{tpu_custom_call.1} parent=35 // pred_fallthru
          _
      $region36: #{tpu_custom_call.1} parent=5 // pred_fallthru
        _
      %p2819 = scmp.le.s32.totalorder 2, %s18
      // Predicated region
      $region61: #{tpu_custom_call.1} parent=5 // pred_check
        %p2820 = pneg %p2819
      $region62: #{tpu_custom_call.1} parent=5 // pred_check_branch
        %2822 = sbr.rel (%p2820) target = $region64
      $region63: #{tpu_custom_call.1} parent=5 // pred_region
        %s2823 = ssub.s32 %s18, 2
        // Predicated region
        $region65: #{tpu_custom_call.1} parent=63 // pred_check
          %p2824 = pneg %p169
        $region66: #{tpu_custom_call.1} parent=63 // pred_check_branch
          %2826 = sbr.rel (%p2824) target = $region68
        $region67: #{tpu_custom_call.1} parent=63 // pred_region
          %s2827 = sand.u32 %s154, 1
          %s2828 = scalar_lea.sflag [#allocation6], %s2827
          %s2829 = sand.u32 %s154, 1
          %s2830 = smul.addr %s2829, 512
          %s2831 = scalar_lea.vmem [#allocation12], %s2830
          %2832 = dma.done %s2828, 8192
        $region68: #{tpu_custom_call.1} parent=63 // pred_fallthru
          _
      $region64: #{tpu_custom_call.1} parent=5 // pred_fallthru
        _
    $region6: #{tpu_custom_call.1} parent=1 // loop_footer
      %s22 = sadd.s32 1, %s18
    $region7: #{tpu_custom_call.1} parent=1 // loop_footer_branch
      %17 = sbr.rel target = $region3
    $region8: #{tpu_custom_call.1} parent=1 // loop_exit
      _
    %2833 = vsyncpa [#allocation5], 1
    %s2834 = scalar_lea.sflag [#allocation5], 1
    %2835 = vsyncpa %s2834, 1
    %2836 = vsyncpa [#allocation8], 1
    %2837 = vsyncpa [#allocation11], 1
    %2838 = vsyncpa [#allocation6], 1
    %s2839 = scalar_lea.sflag [#allocation6], 1
    %2840 = vsyncpa %s2839, 1

</llo_original>
